<compile_context>
chip_gen: v6e
topology: v6e:2x2x1
jax: 0.10.0
libtpu: 0.0.40
codegen_flags: <defaults>
</compile_context>

<pallas_src>
import math
import numpy as np
import jax
import jax.numpy as jnp
from jax.experimental import pallas as pl
from jax.experimental.pallas import tpu as pltpu

# ----------------------------- model config ---------------------------------
BATCH      = 2
SEQ        = 8
VOCAB      = 64
D_MODEL    = 32
N_HEADS    = 4
D_HEAD     = D_MODEL // N_HEADS
D_FFN      = 64
NUM_BLOCKS = 2
LN_EPS     = 1e-5
M_ROWS     = BATCH * SEQ

# Weight dtype fed to the MXU.  f32 keeps exact parity with the PyTorch
# reference; flip to jnp.bfloat16 on v6e/v7x to halve weight DMA / vreg bytes
# (accumulation stays f32 via preferred_element_type, elementwise math stays f32).
WEIGHT_DTYPE = jnp.float32

# --------------------------- packed-slab layout ------------------------------
WA_BLOCK_STRIDE    = 256                     # per block: [wqkv(96)->128 | w1(64)->128]
WA_PROJ_OFF        = NUM_BLOCKS * WA_BLOCK_STRIDE
LOGITS_PAD         = 128                     # lane-dense logits width (>= VOCAB)
WA_COLS            = WA_PROJ_OFF + LOGITS_PAD
WROW_W2_OFF        = NUM_BLOCKS * D_MODEL    # wo blocks first, then w2 blocks
WROW_ROWS          = NUM_BLOCKS * D_MODEL + NUM_BLOCKS * D_FFN
VEC_ROWS_PER_BLOCK = 8                       # ln1_g, ln1_b, bqkv, bo, ln2_g, ln2_b, b1, b2
VEC_ROWS           = NUM_BLOCKS * VEC_ROWS_PER_BLOCK + 2
VEC_WIDTH          = 128

_VMEM = pl.BlockSpec(memory_space=pltpu.MemorySpace.VMEM)


# --------------------------- fused forward kernel ----------------------------
def _gpt_kernel(tok_ref, emb_pe_ref, wa_ref, wrow_ref, vecs_ref, out_ref):
    f32 = jnp.float32

    def mm(a, w):
        return jnp.dot(a.astype(w.dtype), w, preferred_element_type=f32)

    def vec(r, width):
        return vecs_ref[r:r + 1, 0:width]                     # (1, width) f32

    def layernorm(h, g, b):
        mu = jnp.mean(h, axis=-1, keepdims=True)
        var = jnp.mean(jnp.square(h - mu), axis=-1, keepdims=True)
        return (h - mu) * jax.lax.rsqrt(var + LN_EPS) * g + b

    # ---- embedding gather (one-hot matmul; exact, fine at VOCAB=64) + PE ----
    tok = tok_ref[...]                                        # (M, 1) int32
    vocab_iota = jax.lax.broadcasted_iota(jnp.int32, (M_ROWS, VOCAB), 1)
    one_hot = (vocab_iota == tok).astype(f32)                 # (M, V)
    emb = emb_pe_ref[0:VOCAB, :]                              # (V, D)
    pe = emb_pe_ref[VOCAB:VOCAB + M_ROWS, :]                  # (M, D)
    x = jnp.dot(one_hot, emb, preferred_element_type=f32) + pe
    # dropout layers are eval-mode no-ops

    # ---- causal mask: torch.triu(-1e9 * ones, diagonal=0), additive ----
    row = jax.lax.broadcasted_iota(jnp.int32, (SEQ, SEQ), 0)
    col = jax.lax.broadcasted_iota(jnp.int32, (SEQ, SEQ), 1)
    mask = jnp.where(col >= row, f32(-1e9), f32(0.0))[None]   # (1, S, S)

    for blk in range(NUM_BLOCKS):
        vb = blk * VEC_ROWS_PER_BLOCK
        ca = blk * WA_BLOCK_STRIDE
        wo_base = blk * D_MODEL
        w2_base = WROW_W2_OFF + blk * D_FFN

        ln1_g = vec(vb + 0, D_MODEL); ln1_b = vec(vb + 1, D_MODEL)
        bqkv = vec(vb + 2, 3 * D_MODEL); bo = vec(vb + 3, D_MODEL)
        ln2_g = vec(vb + 4, D_MODEL); ln2_b = vec(vb + 5, D_MODEL)
        b1 = vec(vb + 6, D_FFN); b2 = vec(vb + 7, D_MODEL)

        # ------------------------- attention -------------------------
        h = layernorm(x, ln1_g, ln1_b)
        # fused QKV projection; 1/sqrt(D_HEAD) already folded into Q columns
        qkv = mm(h, wa_ref[:, ca:ca + 3 * D_MODEL]) + bqkv    # (M, 3D)

        # Head split: stack heads along the LEADING batch axis so all heads
        # share a single batched QK matmul, one softmax chain and one PV matmul
        # (avoids 4-D transposes and the lane concat of the old per-head loop).
        def heads(col_off):
            return jnp.concatenate(
                [qkv[:, col_off + hd * D_HEAD: col_off + (hd + 1) * D_HEAD]
                 .reshape(BATCH, SEQ, D_HEAD) for hd in range(N_HEADS)], axis=0)

        q_all = heads(0)                                      # (H*B, S, Dh)
        k_all = heads(D_MODEL)
        v_all = heads(2 * D_MODEL)

        s = jnp.einsum('bqd,bkd->bqk', q_all, k_all,
                       preferred_element_type=f32) + mask     # (H*B, S, S)
        m = jnp.max(s, axis=-1, keepdims=True)
        e = jnp.exp(s - m)
        p = e / jnp.sum(e, axis=-1, keepdims=True)            # exact softmax
        o = jnp.einsum('bqk,bkd->bqd', p, v_all,
                       preferred_element_type=f32)            # (H*B, S, Dh)

        # head merge + output projection: accumulate o_h @ wo[h] (no lane concat)
        attn = None
        for hd in range(N_HEADS):
            o_h = o[hd * BATCH:(hd + 1) * BATCH].reshape(M_ROWS, D_HEAD)
            wo_h = wrow_ref[wo_base + hd * D_HEAD: wo_base + (hd + 1) * D_HEAD, :]
            t = mm(o_h, wo_h)
            attn = t if attn is None else attn + t
        x = attn + bo + x                                     # residual

        # ---------------------------- FFN ----------------------------
        h = layernorm(x, ln2_g, ln2_b)
        hh = mm(h, wa_ref[:, ca + 128:ca + 128 + D_FFN]) + b1
        hh = jnp.maximum(hh, 0.0)  # TODO(synk): FFN activation assumed ReLU (FFN class body not provided)
        x = mm(hh, wrow_ref[w2_base:w2_base + D_FFN, :]) + b2 + x   # residual

    # ---- final LayerNorm + bias-free projection (lane-dense 128-wide out) ----
    lnf_g = vec(NUM_BLOCKS * VEC_ROWS_PER_BLOCK + 0, D_MODEL)
    lnf_b = vec(NUM_BLOCKS * VEC_ROWS_PER_BLOCK + 1, D_MODEL)
    xf = layernorm(x, lnf_g, lnf_b)
    out_ref[...] = mm(
        xf, wa_ref[:, WA_PROJ_OFF:WA_PROJ_OFF + LOGITS_PAD]).astype(out_ref.dtype)


# ------------------------------ parameters -----------------------------------
def sinusoidal_pe(seq_len, d_model):
    pos = np.arange(seq_len)[:, None].astype(np.float64)
    i = np.arange(d_model)[None, :]
    angle = pos / np.power(10000.0, (2 * (i // 2)) / d_model)
    pe = np.where(i % 2 == 0, np.sin(angle), np.cos(angle))
    return jnp.asarray(pe, dtype=jnp.float32)


def init_params(key):
    def nrm(k, shape, scale=0.02):
        return scale * jax.random.normal(k, shape, dtype=jnp.float32)

    keys = iter(jax.random.split(key, 8 + NUM_BLOCKS * 16))
    pe = sinusoidal_pe(SEQ, D_MODEL)
    params = {
        'embedding': nrm(next(keys), (VOCAB, D_MODEL), 1.0),
        'pe_tiled': jnp.tile(pe, (BATCH, 1)),                 # (B*S, D)
        'ln_f_g': jnp.ones((D_MODEL,), jnp.float32),
        'ln_f_b': jnp.zeros((D_MODEL,), jnp.float32),
        'w_proj': nrm(next(keys), (D_MODEL, VOCAB)),          # nn.Linear(bias=False)
        'blocks': [],
    }
    for _ in range(NUM_BLOCKS):
        wq = nrm(next(keys), (D_MODEL, D_MODEL))
        wk = nrm(next(keys), (D_MODEL, D_MODEL))
        wv = nrm(next(keys), (D_MODEL, D_MODEL))
        blk = {
            'ln1_g': jnp.ones((D_MODEL,), jnp.float32),
            'ln1_b': jnp.zeros((D_MODEL,), jnp.float32),
            'wqkv': jnp.concatenate([wq, wk, wv], axis=1),    # columns [Q | K | V]
            'bqkv': jnp.zeros((3 * D_MODEL,), jnp.float32),
            'wo': nrm(next(keys), (D_MODEL, D_MODEL)),
            'bo': jnp.zeros((D_MODEL,), jnp.float32),
            'ln2_g': jnp.ones((D_MODEL,), jnp.float32),
            'ln2_b': jnp.zeros((D_MODEL,), jnp.float32),
            'w1': nrm(next(keys), (D_MODEL, D_FFN)),
            'b1': jnp.zeros((D_FFN,), jnp.float32),
            'w2': nrm(next(keys), (D_FFN, D_MODEL)),
            'b2': jnp.zeros((D_MODEL,), jnp.float32),
        }
        params['blocks'].append(blk)
    return params


def pack_params(params):
    """Host-side, one-time packing of all parameters into 4 VMEM slabs."""
    scale = 1.0 / math.sqrt(D_HEAD)

    emb_pe = jnp.concatenate([params['embedding'], params['pe_tiled']], axis=0)

    wa = jnp.zeros((D_MODEL, WA_COLS), jnp.float32)
    wrow = jnp.zeros((WROW_ROWS, D_MODEL), jnp.float32)
    vecs = jnp.zeros((VEC_ROWS, VEC_WIDTH), jnp.float32)

    for b, blk in enumerate(params['blocks']):
        # fold the 1/sqrt(D_HEAD) attention scale into the Q projection
        wqkv = blk['wqkv'].at[:, :D_MODEL].multiply(scale)
        bqkv = blk['bqkv'].at[:D_MODEL].multiply(scale)

        ca = b * WA_BLOCK_STRIDE
        wa = wa.at[:, ca:ca + 3 * D_MODEL].set(wqkv)
        wa = wa.at[:, ca + 128:ca + 128 + D_FFN].set(blk['w1'])
        wrow = wrow.at[b * D_MODEL:(b + 1) * D_MODEL, :].set(blk['wo'])
        wrow = wrow.at[WROW_W2_OFF + b * D_FFN:
                       WROW_W2_OFF + (b + 1) * D_FFN, :].set(blk['w2'])

        r = b * VEC_ROWS_PER_BLOCK
        vecs = vecs.at[r + 0, :D_MODEL].set(blk['ln1_g'])
        vecs = vecs.at[r + 1, :D_MODEL].set(blk['ln1_b'])
        vecs = vecs.at[r + 2, :3 * D_MODEL].set(bqkv)
        vecs = vecs.at[r + 3, :D_MODEL].set(blk['bo'])
        vecs = vecs.at[r + 4, :D_MODEL].set(blk['ln2_g'])
        vecs = vecs.at[r + 5, :D_MODEL].set(blk['ln2_b'])
        vecs = vecs.at[r + 6, :D_FFN].set(blk['b1'])
        vecs = vecs.at[r + 7, :D_MODEL].set(blk['b2'])

    wa = wa.at[:, WA_PROJ_OFF:WA_PROJ_OFF + VOCAB].set(params['w_proj'])
    vecs = vecs.at[NUM_BLOCKS * VEC_ROWS_PER_BLOCK + 0, :D_MODEL].set(params['ln_f_g'])
    vecs = vecs.at[NUM_BLOCKS * VEC_ROWS_PER_BLOCK + 1, :D_MODEL].set(params['ln_f_b'])

    return emb_pe, wa.astype(WEIGHT_DTYPE), wrow.astype(WEIGHT_DTYPE), vecs


# ------------------------------ forward pass ----------------------------------
def gpt_forward(tokens, emb_pe, wa, wrow, vecs):
    B, S = tokens.shape
    tok2 = tokens.reshape(B * S, 1).astype(jnp.int32)

    # Single fused pallas_call: no grid (whole model + activations fit trivially
    # in VMEM on every generation), 5 DMAs total, no intermediate HBM round trips.
    out = pl.pallas_call(
        _gpt_kernel,
        out_shape=jax.ShapeDtypeStruct((B * S, LOGITS_PAD), jnp.float32),
        in_specs=[_VMEM] * 5,
        out_specs=_VMEM,
    )(tok2, emb_pe, wa, wrow, vecs)
    return out[:, :VOCAB].reshape(B, S, VOCAB)


# ---------------------------------- main --------------------------------------
if __name__ == "__main__":
    key = jax.random.PRNGKey(0)
    k_tok, k_par = jax.random.split(key)
    tokens = jax.random.randint(k_tok, (BATCH, SEQ), 0, VOCAB, dtype=jnp.int32)
    params = init_params(k_par)
    emb_pe, wa, wrow, vecs = pack_params(params)

    logits = jax.jit(gpt_forward)(tokens, emb_pe, wa, wrow, vecs)
    jax.block_until_ready(logits)
    assert logits.shape == (BATCH, SEQ, VOCAB)
    assert bool(jnp.all(jnp.isfinite(logits)))
    print("KERNEL_OK")
</pallas_src>

<mosaic_0001>
module attributes {stable_mosaic.version = 11 : i64} {
  func.func @_gpt_kernel(%arg0: memref<16x1xi32, #tpu.memory_space<vmem>>, %arg1: memref<80x32xf32, #tpu.memory_space<vmem>>, %arg2: memref<32x640xf32, #tpu.memory_space<vmem>>, %arg3: memref<192x32xf32, #tpu.memory_space<vmem>>, %arg4: memref<18x128xf32, #tpu.memory_space<vmem>>, %arg5: memref<16x128xf32, #tpu.memory_space<vmem>>) attributes {dimension_semantics = [], scalar_prefetch = 0 : i64, scratch_operands = 0 : i64, tpu.core_type = #tpu.core_type<tc>} {
    %c0 = arith.constant 0 : index
    %c0_0 = arith.constant 0 : index
    %0 = vector.load %arg0[%c0, %c0_0] : memref<16x1xi32, #tpu.memory_space<vmem>>, vector<16x1xi32>
    %1 = tpu.iota {dimensions = array<i32: 1>} : vector<16x64xi32>
    %2 = vector.broadcast %0 : vector<16x1xi32> to vector<16x64xi32>
    %3 = arith.cmpi eq, %1, %2 : vector<16x64xi32>
    %4 = arith.extui %3 : vector<16x64xi1> to vector<16x64xi32>
    %5 = arith.sitofp %4 : vector<16x64xi32> to vector<16x64xf32>
    %c0_1 = arith.constant 0 : index
    %c0_2 = arith.constant 0 : index
    %6 = vector.load %arg1[%c0_1, %c0_2] : memref<80x32xf32, #tpu.memory_space<vmem>>, vector<64x32xf32>
    %c64 = arith.constant 64 : index
    %c0_3 = arith.constant 0 : index
    %7 = vector.load %arg1[%c64, %c0_3] : memref<80x32xf32, #tpu.memory_space<vmem>>, vector<16x32xf32>
    %cst = arith.constant dense<0.000000e+00> : vector<16x32xf32>
    %8 = tpu.matmul %5, %6, %cst {dimension_numbers = #tpu.dot_dimension_numbers<[1], [0], [0], [1], [0, 0, 1, 1], [], []>} : vector<16x64xf32>, vector<64x32xf32>, vector<16x32xf32> -> vector<16x32xf32>
    %9 = arith.addf %8, %7 : vector<16x32xf32>
    %10 = tpu.iota {dimensions = array<i32: 0>} : vector<8x8xi32>
    %11 = tpu.iota {dimensions = array<i32: 1>} : vector<8x8xi32>
    %12 = arith.cmpi sge, %11, %10 : vector<8x8xi32>
    %cst_4 = arith.constant -1.000000e+09 : f32
    %cst_5 = arith.constant 0.000000e+00 : f32
    %13 = vector.broadcast %cst_4 : f32 to vector<8x8xf32>
    %14 = vector.broadcast %cst_5 : f32 to vector<8x8xf32>
    %15 = arith.select %12, %13, %14 : vector<8x8xi1>, vector<8x8xf32>
    %16 = vector.shape_cast %15 : vector<8x8xf32> to vector<1x8x8xf32>
    %c0_6 = arith.constant 0 : index
    %c0_7 = arith.constant 0 : index
    %17 = vector.load %arg4[%c0_6, %c0_7] : memref<18x128xf32, #tpu.memory_space<vmem>>, vector<1x32xf32>
    %c1 = arith.constant 1 : index
    %c0_8 = arith.constant 0 : index
    %18 = vector.load %arg4[%c1, %c0_8] : memref<18x128xf32, #tpu.memory_space<vmem>>, vector<1x32xf32>
    %c2 = arith.constant 2 : index
    %c0_9 = arith.constant 0 : index
    %19 = vector.load %arg4[%c2, %c0_9] : memref<18x128xf32, #tpu.memory_space<vmem>>, vector<1x96xf32>
    %c3 = arith.constant 3 : index
    %c0_10 = arith.constant 0 : index
    %20 = vector.load %arg4[%c3, %c0_10] : memref<18x128xf32, #tpu.memory_space<vmem>>, vector<1x32xf32>
    %c4 = arith.constant 4 : index
    %c0_11 = arith.constant 0 : index
    %21 = vector.load %arg4[%c4, %c0_11] : memref<18x128xf32, #tpu.memory_space<vmem>>, vector<1x32xf32>
    %c5 = arith.constant 5 : index
    %c0_12 = arith.constant 0 : index
    %22 = vector.load %arg4[%c5, %c0_12] : memref<18x128xf32, #tpu.memory_space<vmem>>, vector<1x32xf32>
    %c6 = arith.constant 6 : index
    %c0_13 = arith.constant 0 : index
    %23 = vector.load %arg4[%c6, %c0_13] : memref<18x128xf32, #tpu.memory_space<vmem>>, vector<1x64xf32>
    %c7 = arith.constant 7 : index
    %c0_14 = arith.constant 0 : index
    %24 = vector.load %arg4[%c7, %c0_14] : memref<18x128xf32, #tpu.memory_space<vmem>>, vector<1x32xf32>
    %cst_15 = arith.constant dense<0.000000e+00> : vector<16xf32>
    %25 = vector.multi_reduction <add>, %9, %cst_15 [1] : vector<16x32xf32> to vector<16xf32>
    %26 = vector.shape_cast %25 : vector<16xf32> to vector<16x1xf32>
    %cst_16 = arith.constant 3.200000e+01 : f32
    %27 = vector.broadcast %cst_16 : f32 to vector<16x1xf32>
    %28 = arith.divf %26, %27 : vector<16x1xf32>
    %29 = vector.broadcast %28 : vector<16x1xf32> to vector<16x32xf32>
    %30 = arith.subf %9, %29 : vector<16x32xf32>
    %31 = arith.mulf %30, %30 : vector<16x32xf32>
    %cst_17 = arith.constant dense<0.000000e+00> : vector<16xf32>
    %32 = vector.multi_reduction <add>, %31, %cst_17 [1] : vector<16x32xf32> to vector<16xf32>
    %33 = vector.shape_cast %32 : vector<16xf32> to vector<16x1xf32>
    %cst_18 = arith.constant 3.200000e+01 : f32
    %34 = vector.broadcast %cst_18 : f32 to vector<16x1xf32>
    %35 = arith.divf %33, %34 : vector<16x1xf32>
    %36 = vector.broadcast %28 : vector<16x1xf32> to vector<16x32xf32>
    %37 = arith.subf %9, %36 : vector<16x32xf32>
    %cst_19 = arith.constant 9.99999974E-6 : f32
    %38 = vector.broadcast %cst_19 : f32 to vector<16x1xf32>
    %39 = arith.addf %35, %38 : vector<16x1xf32>
    %40 = math.rsqrt %39 : vector<16x1xf32>
    %41 = vector.broadcast %40 : vector<16x1xf32> to vector<16x32xf32>
    %42 = arith.mulf %37, %41 : vector<16x32xf32>
    %43 = vector.broadcast %17 : vector<1x32xf32> to vector<16x32xf32>
    %44 = arith.mulf %42, %43 : vector<16x32xf32>
    %45 = vector.broadcast %18 : vector<1x32xf32> to vector<16x32xf32>
    %46 = arith.addf %44, %45 : vector<16x32xf32>
    %c0_20 = arith.constant 0 : index
    %c0_21 = arith.constant 0 : index
    %47 = vector.load %arg2[%c0_20, %c0_21] : memref<32x640xf32, #tpu.memory_space<vmem>>, vector<32x96xf32>
    %cst_22 = arith.constant dense<0.000000e+00> : vector<16x96xf32>
    %48 = tpu.matmul %46, %47, %cst_22 {dimension_numbers = #tpu.dot_dimension_numbers<[1], [0], [0], [1], [0, 0, 1, 1], [], []>} : vector<16x32xf32>, vector<32x96xf32>, vector<16x96xf32> -> vector<16x96xf32>
    %49 = vector.broadcast %19 : vector<1x96xf32> to vector<16x96xf32>
    %50 = arith.addf %48, %49 : vector<16x96xf32>
    %51 = vector.extract_strided_slice %50 {offsets = [0, 0], sizes = [16, 8], strides = [1, 1]} : vector<16x96xf32> to vector<16x8xf32>
    %52 = vector.shape_cast %51 : vector<16x8xf32> to vector<2x8x8xf32>
    %53 = vector.extract_strided_slice %50 {offsets = [0, 8], sizes = [16, 8], strides = [1, 1]} : vector<16x96xf32> to vector<16x8xf32>
    %54 = vector.shape_cast %53 : vector<16x8xf32> to vector<2x8x8xf32>
    %55 = vector.extract_strided_slice %50 {offsets = [0, 16], sizes = [16, 8], strides = [1, 1]} : vector<16x96xf32> to vector<16x8xf32>
    %56 = vector.shape_cast %55 : vector<16x8xf32> to vector<2x8x8xf32>
    %57 = vector.extract_strided_slice %50 {offsets = [0, 24], sizes = [16, 8], strides = [1, 1]} : vector<16x96xf32> to vector<16x8xf32>
    %58 = vector.shape_cast %57 : vector<16x8xf32> to vector<2x8x8xf32>
    %59 = tpu.concatenate %52, %54, %56, %58 in 0 : vector<2x8x8xf32>, vector<2x8x8xf32>, vector<2x8x8xf32>, vector<2x8x8xf32> -> vector<8x8x8xf32>
    %60 = vector.extract_strided_slice %50 {offsets = [0, 32], sizes = [16, 8], strides = [1, 1]} : vector<16x96xf32> to vector<16x8xf32>
    %61 = vector.shape_cast %60 : vector<16x8xf32> to vector<2x8x8xf32>
    %62 = vector.extract_strided_slice %50 {offsets = [0, 40], sizes = [16, 8], strides = [1, 1]} : vector<16x96xf32> to vector<16x8xf32>
    %63 = vector.shape_cast %62 : vector<16x8xf32> to vector<2x8x8xf32>
    %64 = vector.extract_strided_slice %50 {offsets = [0, 48], sizes = [16, 8], strides = [1, 1]} : vector<16x96xf32> to vector<16x8xf32>
    %65 = vector.shape_cast %64 : vector<16x8xf32> to vector<2x8x8xf32>
    %66 = vector.extract_strided_slice %50 {offsets = [0, 56], sizes = [16, 8], strides = [1, 1]} : vector<16x96xf32> to vector<16x8xf32>
    %67 = vector.shape_cast %66 : vector<16x8xf32> to vector<2x8x8xf32>
    %68 = tpu.concatenate %61, %63, %65, %67 in 0 : vector<2x8x8xf32>, vector<2x8x8xf32>, vector<2x8x8xf32>, vector<2x8x8xf32> -> vector<8x8x8xf32>
    %69 = vector.extract_strided_slice %50 {offsets = [0, 64], sizes = [16, 8], strides = [1, 1]} : vector<16x96xf32> to vector<16x8xf32>
    %70 = vector.shape_cast %69 : vector<16x8xf32> to vector<2x8x8xf32>
    %71 = vector.extract_strided_slice %50 {offsets = [0, 72], sizes = [16, 8], strides = [1, 1]} : vector<16x96xf32> to vector<16x8xf32>
    %72 = vector.shape_cast %71 : vector<16x8xf32> to vector<2x8x8xf32>
    %73 = vector.extract_strided_slice %50 {offsets = [0, 80], sizes = [16, 8], strides = [1, 1]} : vector<16x96xf32> to vector<16x8xf32>
    %74 = vector.shape_cast %73 : vector<16x8xf32> to vector<2x8x8xf32>
    %75 = vector.extract_strided_slice %50 {offsets = [0, 88], sizes = [16, 8], strides = [1, 1]} : vector<16x96xf32> to vector<16x8xf32>
    %76 = vector.shape_cast %75 : vector<16x8xf32> to vector<2x8x8xf32>
    %77 = tpu.concatenate %70, %72, %74, %76 in 0 : vector<2x8x8xf32>, vector<2x8x8xf32>, vector<2x8x8xf32>, vector<2x8x8xf32> -> vector<8x8x8xf32>
    "tpu.trace_start"() <{level = 10 : i32, message = "bqd,bkd->bqk"}> : () -> ()
    %cst_23 = arith.constant dense<0.000000e+00> : vector<8x8x8xf32>
    %78 = tpu.matmul %59, %68, %cst_23 {dimension_numbers = #tpu.dot_dimension_numbers<[2], [2], [1], [1], [0, 0, 0, 1, 1, 1], [0], [0]>} : vector<8x8x8xf32>, vector<8x8x8xf32>, vector<8x8x8xf32> -> vector<8x8x8xf32>
    "tpu.trace_stop"() : () -> ()
    %79 = vector.broadcast %16 : vector<1x8x8xf32> to vector<8x8x8xf32>
    %80 = arith.addf %78, %79 : vector<8x8x8xf32>
    %cst_24 = arith.constant dense<0xFF800000> : vector<8x8xf32>
    %81 = vector.multi_reduction <maximumf>, %80, %cst_24 [2] : vector<8x8x8xf32> to vector<8x8xf32>
    %82 = vector.shape_cast %81 : vector<8x8xf32> to vector<8x8x1xf32>
    %83 = vector.broadcast %82 : vector<8x8x1xf32> to vector<8x8x8xf32>
    %84 = arith.subf %80, %83 : vector<8x8x8xf32>
    %85 = math.exp %84 : vector<8x8x8xf32>
    %cst_25 = arith.constant dense<0.000000e+00> : vector<8x8xf32>
    %86 = vector.multi_reduction <add>, %85, %cst_25 [2] : vector<8x8x8xf32> to vector<8x8xf32>
    %87 = vector.shape_cast %86 : vector<8x8xf32> to vector<8x8x1xf32>
    %88 = vector.broadcast %87 : vector<8x8x1xf32> to vector<8x8x8xf32>
    %89 = arith.divf %85, %88 : vector<8x8x8xf32>
    "tpu.trace_start"() <{level = 10 : i32, message = "bqk,bkd->bqd"}> : () -> ()
    %cst_26 = arith.constant dense<0.000000e+00> : vector<8x8x8xf32>
    %90 = tpu.matmul %89, %77, %cst_26 {dimension_numbers = #tpu.dot_dimension_numbers<[2], [1], [1], [2], [0, 0, 0, 1, 1, 2], [0], [0]>} : vector<8x8x8xf32>, vector<8x8x8xf32>, vector<8x8x8xf32> -> vector<8x8x8xf32>
    "tpu.trace_stop"() : () -> ()
    %91 = vector.extract_strided_slice %90 {offsets = [0, 0, 0], sizes = [2, 8, 8], strides = [1, 1, 1]} : vector<8x8x8xf32> to vector<2x8x8xf32>
    %92 = vector.shape_cast %91 : vector<2x8x8xf32> to vector<16x8xf32>
    %c0_27 = arith.constant 0 : index
    %c0_28 = arith.constant 0 : index
    %93 = vector.load %arg3[%c0_27, %c0_28] : memref<192x32xf32, #tpu.memory_space<vmem>>, vector<8x32xf32>
    %cst_29 = arith.constant dense<0.000000e+00> : vector<16x32xf32>
    %94 = tpu.matmul %92, %93, %cst_29 {dimension_numbers = #tpu.dot_dimension_numbers<[1], [0], [0], [1], [0, 0, 1, 1], [], []>} : vector<16x8xf32>, vector<8x32xf32>, vector<16x32xf32> -> vector<16x32xf32>
    %95 = vector.extract_strided_slice %90 {offsets = [2, 0, 0], sizes = [2, 8, 8], strides = [1, 1, 1]} : vector<8x8x8xf32> to vector<2x8x8xf32>
    %96 = vector.shape_cast %95 : vector<2x8x8xf32> to vector<16x8xf32>
    %c8 = arith.constant 8 : index
    %c0_30 = arith.constant 0 : index
    %97 = vector.load %arg3[%c8, %c0_30] : memref<192x32xf32, #tpu.memory_space<vmem>>, vector<8x32xf32>
    %cst_31 = arith.constant dense<0.000000e+00> : vector<16x32xf32>
    %98 = tpu.matmul %96, %97, %cst_31 {dimension_numbers = #tpu.dot_dimension_numbers<[1], [0], [0], [1], [0, 0, 1, 1], [], []>} : vector<16x8xf32>, vector<8x32xf32>, vector<16x32xf32> -> vector<16x32xf32>
    %99 = arith.addf %94, %98 : vector<16x32xf32>
    %100 = vector.extract_strided_slice %90 {offsets = [4, 0, 0], sizes = [2, 8, 8], strides = [1, 1, 1]} : vector<8x8x8xf32> to vector<2x8x8xf32>
    %101 = vector.shape_cast %100 : vector<2x8x8xf32> to vector<16x8xf32>
    %c16 = arith.constant 16 : index
    %c0_32 = arith.constant 0 : index
    %102 = vector.load %arg3[%c16, %c0_32] : memref<192x32xf32, #tpu.memory_space<vmem>>, vector<8x32xf32>
    %cst_33 = arith.constant dense<0.000000e+00> : vector<16x32xf32>
    %103 = tpu.matmul %101, %102, %cst_33 {dimension_numbers = #tpu.dot_dimension_numbers<[1], [0], [0], [1], [0, 0, 1, 1], [], []>} : vector<16x8xf32>, vector<8x32xf32>, vector<16x32xf32> -> vector<16x32xf32>
    %104 = arith.addf %99, %103 : vector<16x32xf32>
    %105 = vector.extract_strided_slice %90 {offsets = [6, 0, 0], sizes = [2, 8, 8], strides = [1, 1, 1]} : vector<8x8x8xf32> to vector<2x8x8xf32>
    %106 = vector.shape_cast %105 : vector<2x8x8xf32> to vector<16x8xf32>
    %c24 = arith.constant 24 : index
    %c0_34 = arith.constant 0 : index
    %107 = vector.load %arg3[%c24, %c0_34] : memref<192x32xf32, #tpu.memory_space<vmem>>, vector<8x32xf32>
    %cst_35 = arith.constant dense<0.000000e+00> : vector<16x32xf32>
    %108 = tpu.matmul %106, %107, %cst_35 {dimension_numbers = #tpu.dot_dimension_numbers<[1], [0], [0], [1], [0, 0, 1, 1], [], []>} : vector<16x8xf32>, vector<8x32xf32>, vector<16x32xf32> -> vector<16x32xf32>
    %109 = arith.addf %104, %108 : vector<16x32xf32>
    %110 = vector.broadcast %20 : vector<1x32xf32> to vector<16x32xf32>
    %111 = arith.addf %109, %110 : vector<16x32xf32>
    %112 = arith.addf %111, %9 : vector<16x32xf32>
    %cst_36 = arith.constant dense<0.000000e+00> : vector<16xf32>
    %113 = vector.multi_reduction <add>, %112, %cst_36 [1] : vector<16x32xf32> to vector<16xf32>
    %114 = vector.shape_cast %113 : vector<16xf32> to vector<16x1xf32>
    %cst_37 = arith.constant 3.200000e+01 : f32
    %115 = vector.broadcast %cst_37 : f32 to vector<16x1xf32>
    %116 = arith.divf %114, %115 : vector<16x1xf32>
    %117 = vector.broadcast %116 : vector<16x1xf32> to vector<16x32xf32>
    %118 = arith.subf %112, %117 : vector<16x32xf32>
    %119 = arith.mulf %118, %118 : vector<16x32xf32>
    %cst_38 = arith.constant dense<0.000000e+00> : vector<16xf32>
    %120 = vector.multi_reduction <add>, %119, %cst_38 [1] : vector<16x32xf32> to vector<16xf32>
    %121 = vector.shape_cast %120 : vector<16xf32> to vector<16x1xf32>
    %cst_39 = arith.constant 3.200000e+01 : f32
    %122 = vector.broadcast %cst_39 : f32 to vector<16x1xf32>
    %123 = arith.divf %121, %122 : vector<16x1xf32>
    %124 = vector.broadcast %116 : vector<16x1xf32> to vector<16x32xf32>
    %125 = arith.subf %112, %124 : vector<16x32xf32>
    %cst_40 = arith.constant 9.99999974E-6 : f32
    %126 = vector.broadcast %cst_40 : f32 to vector<16x1xf32>
    %127 = arith.addf %123, %126 : vector<16x1xf32>
    %128 = math.rsqrt %127 : vector<16x1xf32>
    %129 = vector.broadcast %128 : vector<16x1xf32> to vector<16x32xf32>
    %130 = arith.mulf %125, %129 : vector<16x32xf32>
    %131 = vector.broadcast %21 : vector<1x32xf32> to vector<16x32xf32>
    %132 = arith.mulf %130, %131 : vector<16x32xf32>
    %133 = vector.broadcast %22 : vector<1x32xf32> to vector<16x32xf32>
    %134 = arith.addf %132, %133 : vector<16x32xf32>
    %c0_41 = arith.constant 0 : index
    %c128 = arith.constant 128 : index
    %135 = vector.load %arg2[%c0_41, %c128] : memref<32x640xf32, #tpu.memory_space<vmem>>, vector<32x64xf32>
    %cst_42 = arith.constant dense<0.000000e+00> : vector<16x64xf32>
    %136 = tpu.matmul %134, %135, %cst_42 {dimension_numbers = #tpu.dot_dimension_numbers<[1], [0], [0], [1], [0, 0, 1, 1], [], []>} : vector<16x32xf32>, vector<32x64xf32>, vector<16x64xf32> -> vector<16x64xf32>
    %137 = vector.broadcast %23 : vector<1x64xf32> to vector<16x64xf32>
    %138 = arith.addf %136, %137 : vector<16x64xf32>
    %cst_43 = arith.constant 0.000000e+00 : f32
    %139 = vector.broadcast %cst_43 : f32 to vector<16x64xf32>
    %140 = arith.maximumf %138, %139 : vector<16x64xf32>
    %c64_44 = arith.constant 64 : index
    %c0_45 = arith.constant 0 : index
    %141 = vector.load %arg3[%c64_44, %c0_45] : memref<192x32xf32, #tpu.memory_space<vmem>>, vector<64x32xf32>
    %cst_46 = arith.constant dense<0.000000e+00> : vector<16x32xf32>
    %142 = tpu.matmul %140, %141, %cst_46 {dimension_numbers = #tpu.dot_dimension_numbers<[1], [0], [0], [1], [0, 0, 1, 1], [], []>} : vector<16x64xf32>, vector<64x32xf32>, vector<16x32xf32> -> vector<16x32xf32>
    %143 = vector.broadcast %24 : vector<1x32xf32> to vector<16x32xf32>
    %144 = arith.addf %142, %143 : vector<16x32xf32>
    %145 = arith.addf %144, %112 : vector<16x32xf32>
    %c8_47 = arith.constant 8 : index
    %c0_48 = arith.constant 0 : index
    %146 = vector.load %arg4[%c8_47, %c0_48] : memref<18x128xf32, #tpu.memory_space<vmem>>, vector<1x32xf32>
    %c9 = arith.constant 9 : index
    %c0_49 = arith.constant 0 : index
    %147 = vector.load %arg4[%c9, %c0_49] : memref<18x128xf32, #tpu.memory_space<vmem>>, vector<1x32xf32>
    %c10 = arith.constant 10 : index
    %c0_50 = arith.constant 0 : index
    %148 = vector.load %arg4[%c10, %c0_50] : memref<18x128xf32, #tpu.memory_space<vmem>>, vector<1x96xf32>
    %c11 = arith.constant 11 : index
    %c0_51 = arith.constant 0 : index
    %149 = vector.load %arg4[%c11, %c0_51] : memref<18x128xf32, #tpu.memory_space<vmem>>, vector<1x32xf32>
    %c12 = arith.constant 12 : index
    %c0_52 = arith.constant 0 : index
    %150 = vector.load %arg4[%c12, %c0_52] : memref<18x128xf32, #tpu.memory_space<vmem>>, vector<1x32xf32>
    %c13 = arith.constant 13 : index
    %c0_53 = arith.constant 0 : index
    %151 = vector.load %arg4[%c13, %c0_53] : memref<18x128xf32, #tpu.memory_space<vmem>>, vector<1x32xf32>
    %c14 = arith.constant 14 : index
    %c0_54 = arith.constant 0 : index
    %152 = vector.load %arg4[%c14, %c0_54] : memref<18x128xf32, #tpu.memory_space<vmem>>, vector<1x64xf32>
    %c15 = arith.constant 15 : index
    %c0_55 = arith.constant 0 : index
    %153 = vector.load %arg4[%c15, %c0_55] : memref<18x128xf32, #tpu.memory_space<vmem>>, vector<1x32xf32>
    %cst_56 = arith.constant dense<0.000000e+00> : vector<16xf32>
    %154 = vector.multi_reduction <add>, %145, %cst_56 [1] : vector<16x32xf32> to vector<16xf32>
    %155 = vector.shape_cast %154 : vector<16xf32> to vector<16x1xf32>
    %cst_57 = arith.constant 3.200000e+01 : f32
    %156 = vector.broadcast %cst_57 : f32 to vector<16x1xf32>
    %157 = arith.divf %155, %156 : vector<16x1xf32>
    %158 = vector.broadcast %157 : vector<16x1xf32> to vector<16x32xf32>
    %159 = arith.subf %145, %158 : vector<16x32xf32>
    %160 = arith.mulf %159, %159 : vector<16x32xf32>
    %cst_58 = arith.constant dense<0.000000e+00> : vector<16xf32>
    %161 = vector.multi_reduction <add>, %160, %cst_58 [1] : vector<16x32xf32> to vector<16xf32>
    %162 = vector.shape_cast %161 : vector<16xf32> to vector<16x1xf32>
    %cst_59 = arith.constant 3.200000e+01 : f32
    %163 = vector.broadcast %cst_59 : f32 to vector<16x1xf32>
    %164 = arith.divf %162, %163 : vector<16x1xf32>
    %165 = vector.broadcast %157 : vector<16x1xf32> to vector<16x32xf32>
    %166 = arith.subf %145, %165 : vector<16x32xf32>
    %cst_60 = arith.constant 9.99999974E-6 : f32
    %167 = vector.broadcast %cst_60 : f32 to vector<16x1xf32>
    %168 = arith.addf %164, %167 : vector<16x1xf32>
    %169 = math.rsqrt %168 : vector<16x1xf32>
    %170 = vector.broadcast %169 : vector<16x1xf32> to vector<16x32xf32>
    %171 = arith.mulf %166, %170 : vector<16x32xf32>
    %172 = vector.broadcast %146 : vector<1x32xf32> to vector<16x32xf32>
    %173 = arith.mulf %171, %172 : vector<16x32xf32>
    %174 = vector.broadcast %147 : vector<1x32xf32> to vector<16x32xf32>
    %175 = arith.addf %173, %174 : vector<16x32xf32>
    %c0_61 = arith.constant 0 : index
    %c256 = arith.constant 256 : index
    %176 = vector.load %arg2[%c0_61, %c256] : memref<32x640xf32, #tpu.memory_space<vmem>>, vector<32x96xf32>
    %cst_62 = arith.constant dense<0.000000e+00> : vector<16x96xf32>
    %177 = tpu.matmul %175, %176, %cst_62 {dimension_numbers = #tpu.dot_dimension_numbers<[1], [0], [0], [1], [0, 0, 1, 1], [], []>} : vector<16x32xf32>, vector<32x96xf32>, vector<16x96xf32> -> vector<16x96xf32>
    %178 = vector.broadcast %148 : vector<1x96xf32> to vector<16x96xf32>
    %179 = arith.addf %177, %178 : vector<16x96xf32>
    %180 = vector.extract_strided_slice %179 {offsets = [0, 0], sizes = [16, 8], strides = [1, 1]} : vector<16x96xf32> to vector<16x8xf32>
    %181 = vector.shape_cast %180 : vector<16x8xf32> to vector<2x8x8xf32>
    %182 = vector.extract_strided_slice %179 {offsets = [0, 8], sizes = [16, 8], strides = [1, 1]} : vector<16x96xf32> to vector<16x8xf32>
    %183 = vector.shape_cast %182 : vector<16x8xf32> to vector<2x8x8xf32>
    %184 = vector.extract_strided_slice %179 {offsets = [0, 16], sizes = [16, 8], strides = [1, 1]} : vector<16x96xf32> to vector<16x8xf32>
    %185 = vector.shape_cast %184 : vector<16x8xf32> to vector<2x8x8xf32>
    %186 = vector.extract_strided_slice %179 {offsets = [0, 24], sizes = [16, 8], strides = [1, 1]} : vector<16x96xf32> to vector<16x8xf32>
    %187 = vector.shape_cast %186 : vector<16x8xf32> to vector<2x8x8xf32>
    %188 = tpu.concatenate %181, %183, %185, %187 in 0 : vector<2x8x8xf32>, vector<2x8x8xf32>, vector<2x8x8xf32>, vector<2x8x8xf32> -> vector<8x8x8xf32>
    %189 = vector.extract_strided_slice %179 {offsets = [0, 32], sizes = [16, 8], strides = [1, 1]} : vector<16x96xf32> to vector<16x8xf32>
    %190 = vector.shape_cast %189 : vector<16x8xf32> to vector<2x8x8xf32>
    %191 = vector.extract_strided_slice %179 {offsets = [0, 40], sizes = [16, 8], strides = [1, 1]} : vector<16x96xf32> to vector<16x8xf32>
    %192 = vector.shape_cast %191 : vector<16x8xf32> to vector<2x8x8xf32>
    %193 = vector.extract_strided_slice %179 {offsets = [0, 48], sizes = [16, 8], strides = [1, 1]} : vector<16x96xf32> to vector<16x8xf32>
    %194 = vector.shape_cast %193 : vector<16x8xf32> to vector<2x8x8xf32>
    %195 = vector.extract_strided_slice %179 {offsets = [0, 56], sizes = [16, 8], strides = [1, 1]} : vector<16x96xf32> to vector<16x8xf32>
    %196 = vector.shape_cast %195 : vector<16x8xf32> to vector<2x8x8xf32>
    %197 = tpu.concatenate %190, %192, %194, %196 in 0 : vector<2x8x8xf32>, vector<2x8x8xf32>, vector<2x8x8xf32>, vector<2x8x8xf32> -> vector<8x8x8xf32>
    %198 = vector.extract_strided_slice %179 {offsets = [0, 64], sizes = [16, 8], strides = [1, 1]} : vector<16x96xf32> to vector<16x8xf32>
    %199 = vector.shape_cast %198 : vector<16x8xf32> to vector<2x8x8xf32>
    %200 = vector.extract_strided_slice %179 {offsets = [0, 72], sizes = [16, 8], strides = [1, 1]} : vector<16x96xf32> to vector<16x8xf32>
    %201 = vector.shape_cast %200 : vector<16x8xf32> to vector<2x8x8xf32>
    %202 = vector.extract_strided_slice %179 {offsets = [0, 80], sizes = [16, 8], strides = [1, 1]} : vector<16x96xf32> to vector<16x8xf32>
    %203 = vector.shape_cast %202 : vector<16x8xf32> to vector<2x8x8xf32>
    %204 = vector.extract_strided_slice %179 {offsets = [0, 88], sizes = [16, 8], strides = [1, 1]} : vector<16x96xf32> to vector<16x8xf32>
    %205 = vector.shape_cast %204 : vector<16x8xf32> to vector<2x8x8xf32>
    %206 = tpu.concatenate %199, %201, %203, %205 in 0 : vector<2x8x8xf32>, vector<2x8x8xf32>, vector<2x8x8xf32>, vector<2x8x8xf32> -> vector<8x8x8xf32>
    "tpu.trace_start"() <{level = 10 : i32, message = "bqd,bkd->bqk"}> : () -> ()
    %cst_63 = arith.constant dense<0.000000e+00> : vector<8x8x8xf32>
    %207 = tpu.matmul %188, %197, %cst_63 {dimension_numbers = #tpu.dot_dimension_numbers<[2], [2], [1], [1], [0, 0, 0, 1, 1, 1], [0], [0]>} : vector<8x8x8xf32>, vector<8x8x8xf32>, vector<8x8x8xf32> -> vector<8x8x8xf32>
    "tpu.trace_stop"() : () -> ()
    %208 = vector.broadcast %16 : vector<1x8x8xf32> to vector<8x8x8xf32>
    %209 = arith.addf %207, %208 : vector<8x8x8xf32>
    %cst_64 = arith.constant dense<0xFF800000> : vector<8x8xf32>
    %210 = vector.multi_reduction <maximumf>, %209, %cst_64 [2] : vector<8x8x8xf32> to vector<8x8xf32>
    %211 = vector.shape_cast %210 : vector<8x8xf32> to vector<8x8x1xf32>
    %212 = vector.broadcast %211 : vector<8x8x1xf32> to vector<8x8x8xf32>
    %213 = arith.subf %209, %212 : vector<8x8x8xf32>
    %214 = math.exp %213 : vector<8x8x8xf32>
    %cst_65 = arith.constant dense<0.000000e+00> : vector<8x8xf32>
    %215 = vector.multi_reduction <add>, %214, %cst_65 [2] : vector<8x8x8xf32> to vector<8x8xf32>
    %216 = vector.shape_cast %215 : vector<8x8xf32> to vector<8x8x1xf32>
    %217 = vector.broadcast %216 : vector<8x8x1xf32> to vector<8x8x8xf32>
    %218 = arith.divf %214, %217 : vector<8x8x8xf32>
    "tpu.trace_start"() <{level = 10 : i32, message = "bqk,bkd->bqd"}> : () -> ()
    %cst_66 = arith.constant dense<0.000000e+00> : vector<8x8x8xf32>
    %219 = tpu.matmul %218, %206, %cst_66 {dimension_numbers = #tpu.dot_dimension_numbers<[2], [1], [1], [2], [0, 0, 0, 1, 1, 2], [0], [0]>} : vector<8x8x8xf32>, vector<8x8x8xf32>, vector<8x8x8xf32> -> vector<8x8x8xf32>
    "tpu.trace_stop"() : () -> ()
    %220 = vector.extract_strided_slice %219 {offsets = [0, 0, 0], sizes = [2, 8, 8], strides = [1, 1, 1]} : vector<8x8x8xf32> to vector<2x8x8xf32>
    %221 = vector.shape_cast %220 : vector<2x8x8xf32> to vector<16x8xf32>
    %c32 = arith.constant 32 : index
    %c0_67 = arith.constant 0 : index
    %222 = vector.load %arg3[%c32, %c0_67] : memref<192x32xf32, #tpu.memory_space<vmem>>, vector<8x32xf32>
    %cst_68 = arith.constant dense<0.000000e+00> : vector<16x32xf32>
    %223 = tpu.matmul %221, %222, %cst_68 {dimension_numbers = #tpu.dot_dimension_numbers<[1], [0], [0], [1], [0, 0, 1, 1], [], []>} : vector<16x8xf32>, vector<8x32xf32>, vector<16x32xf32> -> vector<16x32xf32>
    %224 = vector.extract_strided_slice %219 {offsets = [2, 0, 0], sizes = [2, 8, 8], strides = [1, 1, 1]} : vector<8x8x8xf32> to vector<2x8x8xf32>
    %225 = vector.shape_cast %224 : vector<2x8x8xf32> to vector<16x8xf32>
    %c40 = arith.constant 40 : index
    %c0_69 = arith.constant 0 : index
    %226 = vector.load %arg3[%c40, %c0_69] : memref<192x32xf32, #tpu.memory_space<vmem>>, vector<8x32xf32>
    %cst_70 = arith.constant dense<0.000000e+00> : vector<16x32xf32>
    %227 = tpu.matmul %225, %226, %cst_70 {dimension_numbers = #tpu.dot_dimension_numbers<[1], [0], [0], [1], [0, 0, 1, 1], [], []>} : vector<16x8xf32>, vector<8x32xf32>, vector<16x32xf32> -> vector<16x32xf32>
    %228 = arith.addf %223, %227 : vector<16x32xf32>
    %229 = vector.extract_strided_slice %219 {offsets = [4, 0, 0], sizes = [2, 8, 8], strides = [1, 1, 1]} : vector<8x8x8xf32> to vector<2x8x8xf32>
    %230 = vector.shape_cast %229 : vector<2x8x8xf32> to vector<16x8xf32>
    %c48 = arith.constant 48 : index
    %c0_71 = arith.constant 0 : index
    %231 = vector.load %arg3[%c48, %c0_71] : memref<192x32xf32, #tpu.memory_space<vmem>>, vector<8x32xf32>
    %cst_72 = arith.constant dense<0.000000e+00> : vector<16x32xf32>
    %232 = tpu.matmul %230, %231, %cst_72 {dimension_numbers = #tpu.dot_dimension_numbers<[1], [0], [0], [1], [0, 0, 1, 1], [], []>} : vector<16x8xf32>, vector<8x32xf32>, vector<16x32xf32> -> vector<16x32xf32>
    %233 = arith.addf %228, %232 : vector<16x32xf32>
    %234 = vector.extract_strided_slice %219 {offsets = [6, 0, 0], sizes = [2, 8, 8], strides = [1, 1, 1]} : vector<8x8x8xf32> to vector<2x8x8xf32>
    %235 = vector.shape_cast %234 : vector<2x8x8xf32> to vector<16x8xf32>
    %c56 = arith.constant 56 : index
    %c0_73 = arith.constant 0 : index
    %236 = vector.load %arg3[%c56, %c0_73] : memref<192x32xf32, #tpu.memory_space<vmem>>, vector<8x32xf32>
    %cst_74 = arith.constant dense<0.000000e+00> : vector<16x32xf32>
    %237 = tpu.matmul %235, %236, %cst_74 {dimension_numbers = #tpu.dot_dimension_numbers<[1], [0], [0], [1], [0, 0, 1, 1], [], []>} : vector<16x8xf32>, vector<8x32xf32>, vector<16x32xf32> -> vector<16x32xf32>
    %238 = arith.addf %233, %237 : vector<16x32xf32>
    %239 = vector.broadcast %149 : vector<1x32xf32> to vector<16x32xf32>
    %240 = arith.addf %238, %239 : vector<16x32xf32>
    %241 = arith.addf %240, %145 : vector<16x32xf32>
    %cst_75 = arith.constant dense<0.000000e+00> : vector<16xf32>
    %242 = vector.multi_reduction <add>, %241, %cst_75 [1] : vector<16x32xf32> to vector<16xf32>
    %243 = vector.shape_cast %242 : vector<16xf32> to vector<16x1xf32>
    %cst_76 = arith.constant 3.200000e+01 : f32
    %244 = vector.broadcast %cst_76 : f32 to vector<16x1xf32>
    %245 = arith.divf %243, %244 : vector<16x1xf32>
    %246 = vector.broadcast %245 : vector<16x1xf32> to vector<16x32xf32>
    %247 = arith.subf %241, %246 : vector<16x32xf32>
    %248 = arith.mulf %247, %247 : vector<16x32xf32>
    %cst_77 = arith.constant dense<0.000000e+00> : vector<16xf32>
    %249 = vector.multi_reduction <add>, %248, %cst_77 [1] : vector<16x32xf32> to vector<16xf32>
    %250 = vector.shape_cast %249 : vector<16xf32> to vector<16x1xf32>
    %cst_78 = arith.constant 3.200000e+01 : f32
    %251 = vector.broadcast %cst_78 : f32 to vector<16x1xf32>
    %252 = arith.divf %250, %251 : vector<16x1xf32>
    %253 = vector.broadcast %245 : vector<16x1xf32> to vector<16x32xf32>
    %254 = arith.subf %241, %253 : vector<16x32xf32>
    %cst_79 = arith.constant 9.99999974E-6 : f32
    %255 = vector.broadcast %cst_79 : f32 to vector<16x1xf32>
    %256 = arith.addf %252, %255 : vector<16x1xf32>
    %257 = math.rsqrt %256 : vector<16x1xf32>
    %258 = vector.broadcast %257 : vector<16x1xf32> to vector<16x32xf32>
    %259 = arith.mulf %254, %258 : vector<16x32xf32>
    %260 = vector.broadcast %150 : vector<1x32xf32> to vector<16x32xf32>
    %261 = arith.mulf %259, %260 : vector<16x32xf32>
    %262 = vector.broadcast %151 : vector<1x32xf32> to vector<16x32xf32>
    %263 = arith.addf %261, %262 : vector<16x32xf32>
    %c0_80 = arith.constant 0 : index
    %c384 = arith.constant 384 : index
    %264 = vector.load %arg2[%c0_80, %c384] : memref<32x640xf32, #tpu.memory_space<vmem>>, vector<32x64xf32>
    %cst_81 = arith.constant dense<0.000000e+00> : vector<16x64xf32>
    %265 = tpu.matmul %263, %264, %cst_81 {dimension_numbers = #tpu.dot_dimension_numbers<[1], [0], [0], [1], [0, 0, 1, 1], [], []>} : vector<16x32xf32>, vector<32x64xf32>, vector<16x64xf32> -> vector<16x64xf32>
    %266 = vector.broadcast %152 : vector<1x64xf32> to vector<16x64xf32>
    %267 = arith.addf %265, %266 : vector<16x64xf32>
    %cst_82 = arith.constant 0.000000e+00 : f32
    %268 = vector.broadcast %cst_82 : f32 to vector<16x64xf32>
    %269 = arith.maximumf %267, %268 : vector<16x64xf32>
    %c128_83 = arith.constant 128 : index
    %c0_84 = arith.constant 0 : index
    %270 = vector.load %arg3[%c128_83, %c0_84] : memref<192x32xf32, #tpu.memory_space<vmem>>, vector<64x32xf32>
    %cst_85 = arith.constant dense<0.000000e+00> : vector<16x32xf32>
    %271 = tpu.matmul %269, %270, %cst_85 {dimension_numbers = #tpu.dot_dimension_numbers<[1], [0], [0], [1], [0, 0, 1, 1], [], []>} : vector<16x64xf32>, vector<64x32xf32>, vector<16x32xf32> -> vector<16x32xf32>
    %272 = vector.broadcast %153 : vector<1x32xf32> to vector<16x32xf32>
    %273 = arith.addf %271, %272 : vector<16x32xf32>
    %274 = arith.addf %273, %241 : vector<16x32xf32>
    %c16_86 = arith.constant 16 : index
    %c0_87 = arith.constant 0 : index
    %275 = vector.load %arg4[%c16_86, %c0_87] : memref<18x128xf32, #tpu.memory_space<vmem>>, vector<1x32xf32>
    %c17 = arith.constant 17 : index
    %c0_88 = arith.constant 0 : index
    %276 = vector.load %arg4[%c17, %c0_88] : memref<18x128xf32, #tpu.memory_space<vmem>>, vector<1x32xf32>
    %cst_89 = arith.constant dense<0.000000e+00> : vector<16xf32>
    %277 = vector.multi_reduction <add>, %274, %cst_89 [1] : vector<16x32xf32> to vector<16xf32>
    %278 = vector.shape_cast %277 : vector<16xf32> to vector<16x1xf32>
    %cst_90 = arith.constant 3.200000e+01 : f32
    %279 = vector.broadcast %cst_90 : f32 to vector<16x1xf32>
    %280 = arith.divf %278, %279 : vector<16x1xf32>
    %281 = vector.broadcast %280 : vector<16x1xf32> to vector<16x32xf32>
    %282 = arith.subf %274, %281 : vector<16x32xf32>
    %283 = arith.mulf %282, %282 : vector<16x32xf32>
    %cst_91 = arith.constant dense<0.000000e+00> : vector<16xf32>
    %284 = vector.multi_reduction <add>, %283, %cst_91 [1] : vector<16x32xf32> to vector<16xf32>
    %285 = vector.shape_cast %284 : vector<16xf32> to vector<16x1xf32>
    %cst_92 = arith.constant 3.200000e+01 : f32
    %286 = vector.broadcast %cst_92 : f32 to vector<16x1xf32>
    %287 = arith.divf %285, %286 : vector<16x1xf32>
    %288 = vector.broadcast %280 : vector<16x1xf32> to vector<16x32xf32>
    %289 = arith.subf %274, %288 : vector<16x32xf32>
    %cst_93 = arith.constant 9.99999974E-6 : f32
    %290 = vector.broadcast %cst_93 : f32 to vector<16x1xf32>
    %291 = arith.addf %287, %290 : vector<16x1xf32>
    %292 = math.rsqrt %291 : vector<16x1xf32>
    %293 = vector.broadcast %292 : vector<16x1xf32> to vector<16x32xf32>
    %294 = arith.mulf %289, %293 : vector<16x32xf32>
    %295 = vector.broadcast %275 : vector<1x32xf32> to vector<16x32xf32>
    %296 = arith.mulf %294, %295 : vector<16x32xf32>
    %297 = vector.broadcast %276 : vector<1x32xf32> to vector<16x32xf32>
    %298 = arith.addf %296, %297 : vector<16x32xf32>
    %c0_94 = arith.constant 0 : index
    %c512 = arith.constant 512 : index
    %299 = vector.load %arg2[%c0_94, %c512] : memref<32x640xf32, #tpu.memory_space<vmem>>, vector<32x128xf32>
    %cst_95 = arith.constant dense<0.000000e+00> : vector<16x128xf32>
    %300 = tpu.matmul %298, %299, %cst_95 {dimension_numbers = #tpu.dot_dimension_numbers<[1], [0], [0], [1], [0, 0, 1, 1], [], []>} : vector<16x32xf32>, vector<32x128xf32>, vector<16x128xf32> -> vector<16x128xf32>
    %c0_96 = arith.constant 0 : index
    %c0_97 = arith.constant 0 : index
    %301 = vector.load %arg5[%c0_96, %c0_97] : memref<16x128xf32, #tpu.memory_space<vmem>>, vector<16x128xf32>
    tpu.vector_store %arg5[%c0_96, %c0_97], %300 {strides = array<i32>} : memref<16x128xf32, #tpu.memory_space<vmem>>, vector<16x128xf32>,
    return
  }
}

</mosaic_0001>

<llo_original>
// kernel: gpt_forward.1
$region0: #{gpt_forward.1}
  #allocation0 [shape = 'u32[]', space=smem, size = 0x4, offset = 0x4, fixed_abs, tag = 'smem constant byte address 0x4 - core index']
  #allocation1 [shape = 'u32[144,128]{1,0:T(1,128)}', space=vmem, size = 0x12000, scoped, tag = 'internal scratch']
  %s0 = inlined_call_operand.vmem [shape: s32[16,1], index: 0, kind: input, shape index: {}]
  %s1 = inlined_call_operand.vmem [shape: f32[80,32], index: 1, kind: input, shape index: {}]
  %s2 = inlined_call_operand.vmem [shape: f32[32,640], index: 2, kind: input, shape index: {}]
  %s3 = inlined_call_operand.vmem [shape: f32[192,32], index: 3, kind: input, shape index: {}]
  %s4 = inlined_call_operand.vmem [shape: f32[18,128], index: 4, kind: input, shape index: {}]
  %s5 = inlined_call_operand.vmem [shape: f32[16,128], index: 5, kind: output, shape index: {}]
  %s6 = sld [smem:[#allocation0]]
  $region30: #{gpt_forward.1} parent=0
    _
  %s8 = ssub.s32 1, %s6
  %s9 = scalar_select 0, %s8, %s6
  // Predicated region
  $region2: #{gpt_forward.1} parent=0 // pred_check
    _
  $region3: #{gpt_forward.1} parent=0 // pred_check_branch
    %11 = sbr.rel (0) target = $region5
  $region4: #{gpt_forward.1} parent=0 // pred_region
    _
  $region5: #{gpt_forward.1} parent=0 // pred_fallthru
    _
  // Predicated region
  $region6: #{gpt_forward.1} parent=0 // pred_check
    _
  $region7: #{gpt_forward.1} parent=0 // pred_check_branch
    %13 = sbr.rel (0) target = $region9
  $region8: #{gpt_forward.1} parent=0 // pred_region
    _
  $region9: #{gpt_forward.1} parent=0 // pred_fallthru
    _
  // Predicated region
  $region10: #{gpt_forward.1} parent=0 // pred_check
    _
  $region11: #{gpt_forward.1} parent=0 // pred_check_branch
    %15 = sbr.rel (0) target = $region13
  $region12: #{gpt_forward.1} parent=0 // pred_region
    _
  $region13: #{gpt_forward.1} parent=0 // pred_fallthru
    _
  // Predicated region
  $region14: #{gpt_forward.1} parent=0 // pred_check
    _
  $region15: #{gpt_forward.1} parent=0 // pred_check_branch
    %17 = sbr.rel (0) target = $region17
  $region16: #{gpt_forward.1} parent=0 // pred_region
    _
  $region17: #{gpt_forward.1} parent=0 // pred_fallthru
    _
  // Predicated region
  $region18: #{gpt_forward.1} parent=0 // pred_check
    _
  $region19: #{gpt_forward.1} parent=0 // pred_check_branch
    %19 = sbr.rel (0) target = $region21
  $region20: #{gpt_forward.1} parent=0 // pred_region
    _
  $region21: #{gpt_forward.1} parent=0 // pred_fallthru
    _
  %v20 = vld [vmem:[%s0] sm:$0xff]
  %v21 = vld [vmem:[%s0 + $0x8] sm:$0xff]
  %v22 = vlaneseq
  %v23 = vand.u32 %v22, 127
  %24 = vset.pattern.permute.xlu0 0
  %25 = vperm.xlu0 %24, %v20
  %v26 = vpop.permute.xlu0 %25
  %27 = vset.pattern.permute.xlu0 0
  %28 = vperm.xlu0 %27, %v21
  %v29 = vpop.permute.xlu0 %28
  %vm30 = vcmp.eq.s32.totalorder %v23, %v26
  %vm31 = vcmp.eq.s32.totalorder %v23, %v29
  %v32 = vsel %vm30, 1, 0
  %v33 = vsel %vm31, 1, 0
  %v34 = vcvt.s32.f32 %v32
  %v35 = vcvt.s32.f32 %v33
  %v36 = vld [vmem:[%s1] sm:$0xff]
  %v37 = vld [vmem:[%s1 + $0x8] sm:$0xff]
  %v38 = vld [vmem:[%s1 + $0x10] sm:$0xff]
  %v39 = vld [vmem:[%s1 + $0x18] sm:$0xff]
  %v40 = vld [vmem:[%s1 + $0x20] sm:$0xff]
  %v41 = vld [vmem:[%s1 + $0x28] sm:$0xff]
  %v42 = vld [vmem:[%s1 + $0x30] sm:$0xff]
  %v43 = vld [vmem:[%s1 + $0x38] sm:$0xff]
  %v44 = vld [vmem:[%s1 + $0x40] sm:$0xff]
  %v45 = vld [vmem:[%s1 + $0x48] sm:$0xff]
  %vm46 = vcmask 523264
  %v48 = vsel %vm46, %v34, 0
  %v51 = vsel %vm46, %v35, 0
  %53 = vmatprep.subr.mxu0 0.0
  %54 = vmatpush1.msra.mxu0 0.0
  %55 = vmatprep.subr.mxu0 0.0
  %56 = vmatpush1.msra.mxu0 0.0
  %57 = vmatprep.subr.mxu0 0.0
  %58 = vmatpush1.msra.mxu0 0.0
  %59 = vmatprep.subr.mxu0 0.0
  %60 = vmatpush1.msra.mxu0 0.0
  %61 = vmatprep.subr.mxu0 0.0
  %62 = vmatpush1.msra.mxu0 0.0
  %63 = vmatprep.subr.mxu0 0.0
  %64 = vmatpush1.msra.mxu0 0.0
  %65 = vmatprep.subr.mxu0 0.0
  %66 = vmatpush1.msra.mxu0 0.0
  %67 = vmatprep.subr.mxu0 0.0
  %68 = vmatpush1.msra.mxu0 0.0
  %69 = vmatprep.subr.mxu0 0.0
  %70 = vmatpush1.msra.mxu0 %v43
  %71 = vmatprep.subr.mxu0 0.0
  %72 = vmatpush1.msra.mxu0 %v42
  %73 = vmatprep.subr.mxu0 0.0
  %74 = vmatpush1.msra.mxu0 %v41
  %75 = vmatprep.subr.mxu0 0.0
  %76 = vmatpush1.msra.mxu0 %v40
  %77 = vmatprep.subr.mxu0 0.0
  %78 = vmatpush1.msra.mxu0 %v39
  %79 = vmatprep.subr.mxu0 0.0
  %80 = vmatpush1.msra.mxu0 %v38
  %81 = vmatprep.subr.mxu0 0.0
  %82 = vmatpush1.msra.mxu0 %v37
  %83 = vmatprep.subr.mxu0 0.0
  %84 = vmatpush1.msra.mxu0 %v36
  %85 = vmatprep.subr.mxu0 0.0
  %86 = vmatpush2.msra.mxu0 0.0
  %87 = vmatprep.subr.mxu0 0.0
  %88 = vmatpush2.msra.mxu0 0.0
  %89 = vmatprep.subr.mxu0 0.0
  %90 = vmatpush2.msra.mxu0 0.0
  %91 = vmatprep.subr.mxu0 0.0
  %92 = vmatpush2.msra.mxu0 0.0
  %93 = vmatprep.subr.mxu0 0.0
  %94 = vmatpush2.msra.mxu0 0.0
  %95 = vmatprep.subr.mxu0 0.0
  %96 = vmatpush2.msra.mxu0 0.0
  %97 = vmatprep.subr.mxu0 0.0
  %98 = vmatpush2.msra.mxu0 0.0
  %99 = vmatprep.subr.mxu0 0.0
  %100 = vmatpush2.msra.mxu0 0.0
  %101 = vmatprep.subr.mxu0 0.0
  %102 = vmatpush2.msra.mxu0 0.0
  %103 = vmatprep.subr.mxu0 0.0
  %104 = vmatpush2.msra.mxu0 0.0
  %105 = vmatprep.subr.mxu0 0.0
  %106 = vmatpush2.msra.mxu0 0.0
  %107 = vmatprep.subr.mxu0 0.0
  %108 = vmatpush2.msra.mxu0 0.0
  %109 = vmatprep.subr.mxu0 0.0
  %110 = vmatpush2.msra.mxu0 0.0
  %111 = vmatprep.subr.mxu0 0.0
  %112 = vmatpush2.msra.mxu0 0.0
  %113 = vmatprep.subr.mxu0 0.0
  %114 = vmatpush2.msra.mxu0 0.0
  %115 = vmatprep.subr.mxu0 0.0
  %116 = vmatpush2.msra.mxu0 0.0
  %117 = vmatprep.mubr.f32.mxu0 0.0
  %118 = vmatmul.mubr.f32.gmra.mxu0 %v48
  %v119 = vpop.f32.mrf.mxu0
  %v120 = vadd.f32 %v44, %v119
  %v121 = vpop.f32.mrf.mxu0
  %122 = vmatprep.mubr.f32.mxu0 0.0
  %123 = vmatmul.mubr.f32.gmra.mxu0 %v51
  %v124 = vpop.f32.mrf.mxu0
  %v125 = vadd.f32 %v45, %v124
  %v126 = vpop.f32.mrf.mxu0
  %127 = vdwg.mxu0
  %v128 = vlaneseq
  %v129 = vshrl.u32 %v128, 7
  %vm130 = vcmp.ge.s32.totalorder %v23, %v129
  %v131 = vsel %vm130, -1e+09, 0.0
  %v132 = vld [vmem:[%s4] sm:$0x1]
  %v133 = vld [vmem:[%s4 + $0x1] sm:$0x1]
  %v134 = vld [vmem:[%s4 + $0x2] sm:$0x1]
  %v135 = vld [vmem:[%s4 + $0x3] sm:$0x1]
  %v136 = vld [vmem:[%s4 + $0x4] sm:$0x1]
  %v137 = vld [vmem:[%s4 + $0x5] sm:$0x1]
  %v138 = vld [vmem:[%s4 + $0x6] sm:$0x1]
  %v139 = vld [vmem:[%s4 + $0x7] sm:$0x1]
  %vm140 = vcmask 261120
  %v141 = vsel %vm140, %v120, 0.0
  %142 = vadd.xlane.f32.xlu0 %v141
  %v143 = vpop.xlane.xlu0 %142
  %v144 = vsel %vm140, %v125, 0.0
  %145 = vadd.xlane.f32.xlu0 %v144
  %v146 = vpop.xlane.xlu0 %145
  %v147 = vrcp.pop 32.0
  %v148 = vmul.f32 %v143, %v147
  %v149 = vmul.f32 %v146, %v147
  %v150 = vsub.f32 %v120, %v148
  %v151 = vsub.f32 %v125, %v149
  %v152 = vmul.f32 %v150, %v150
  %v153 = vmul.f32 %v151, %v151
  %v154 = vsel %vm140, %v152, 0.0
  %155 = vadd.xlane.f32.xlu0 %v154
  %v156 = vpop.xlane.xlu0 %155
  %v157 = vsel %vm140, %v153, 0.0
  %158 = vadd.xlane.f32.xlu0 %v157
  %v159 = vpop.xlane.xlu0 %158
  %v160 = vmul.f32 %v156, %v147
  %v161 = vmul.f32 %v159, %v147
  %v162 = vadd.f32 %v160, 1e-05
  %v163 = vadd.f32 %v161, 1e-05
  %v164 = vrsqrt.pop %v162
  %v165 = vrsqrt.pop %v163
  %v166 = vmul.f32 %v150, %v164
  %v167 = vmul.f32 %v151, %v165
  %v168 = vlaneseq
  %v169 = vshrl.u32 %v168, 7
  %v170 = vsub.s32 0, %v169
  %v171 = vrot.slane %v132, %v170
  %v172 = vmul.f32 %v166, %v171
  %v173 = vmul.f32 %v167, %v171
  %v174 = vlaneseq
  %v175 = vshrl.u32 %v174, 7
  %v176 = vsub.s32 0, %v175
  %v177 = vrot.slane %v133, %v176
  %v178 = vadd.f32 %v172, %v177
  %v179 = vadd.f32 %v173, %v177
  %v180 = vld [vmem:[%s2] sm:$0xff]
  %v181 = vld [vmem:[%s2 + $0x28] sm:$0xff]
  %v182 = vld [vmem:[%s2 + $0x50] sm:$0xff]
  %v183 = vld [vmem:[%s2 + $0x78] sm:$0xff]
  %v184 = vlaneseq
  %v185 = vshrl.u32 %v184, 7
  %v186 = vsub.s32 0, %v185
  %v187 = vrot.slane %v134, %v186
  %v189 = vsel %vm140, %v178, 0
  %v192 = vsel %vm140, %v179, 0
  %194 = vmatprep.subr.mxu0 0.0
  %195 = vmatpush1.msra.mxu0 0.0
  %196 = vmatprep.subr.mxu0 0.0
  %197 = vmatpush1.msra.mxu0 0.0
  %198 = vmatprep.subr.mxu0 0.0
  %199 = vmatpush1.msra.mxu0 0.0
  %200 = vmatprep.subr.mxu0 0.0
  %201 = vmatpush1.msra.mxu0 0.0
  %202 = vmatprep.subr.mxu0 0.0
  %203 = vmatpush1.msra.mxu0 0.0
  %204 = vmatprep.subr.mxu0 0.0
  %205 = vmatpush1.msra.mxu0 0.0
  %206 = vmatprep.subr.mxu0 0.0
  %207 = vmatpush1.msra.mxu0 0.0
  %208 = vmatprep.subr.mxu0 0.0
  %209 = vmatpush1.msra.mxu0 0.0
  %210 = vmatprep.subr.mxu0 0.0
  %211 = vmatpush1.msra.mxu0 0.0
  %212 = vmatprep.subr.mxu0 0.0
  %213 = vmatpush1.msra.mxu0 0.0
  %214 = vmatprep.subr.mxu0 0.0
  %215 = vmatpush1.msra.mxu0 0.0
  %216 = vmatprep.subr.mxu0 0.0
  %217 = vmatpush1.msra.mxu0 0.0
  %218 = vmatprep.subr.mxu0 0.0
  %219 = vmatpush1.msra.mxu0 %v183
  %220 = vmatprep.subr.mxu0 0.0
  %221 = vmatpush1.msra.mxu0 %v182
  %222 = vmatprep.subr.mxu0 0.0
  %223 = vmatpush1.msra.mxu0 %v181
  %224 = vmatprep.subr.mxu0 0.0
  %225 = vmatpush1.msra.mxu0 %v180
  %226 = vmatprep.subr.mxu0 0.0
  %227 = vmatpush2.msra.mxu0 0.0
  %228 = vmatprep.subr.mxu0 0.0
  %229 = vmatpush2.msra.mxu0 0.0
  %230 = vmatprep.subr.mxu0 0.0
  %231 = vmatpush2.msra.mxu0 0.0
  %232 = vmatprep.subr.mxu0 0.0
  %233 = vmatpush2.msra.mxu0 0.0
  %234 = vmatprep.subr.mxu0 0.0
  %235 = vmatpush2.msra.mxu0 0.0
  %236 = vmatprep.subr.mxu0 0.0
  %237 = vmatpush2.msra.mxu0 0.0
  %238 = vmatprep.subr.mxu0 0.0
  %239 = vmatpush2.msra.mxu0 0.0
  %240 = vmatprep.subr.mxu0 0.0
  %241 = vmatpush2.msra.mxu0 0.0
  %242 = vmatprep.subr.mxu0 0.0
  %243 = vmatpush2.msra.mxu0 0.0
  %244 = vmatprep.subr.mxu0 0.0
  %245 = vmatpush2.msra.mxu0 0.0
  %246 = vmatprep.subr.mxu0 0.0
  %247 = vmatpush2.msra.mxu0 0.0
  %248 = vmatprep.subr.mxu0 0.0
  %249 = vmatpush2.msra.mxu0 0.0
  %250 = vmatprep.subr.mxu0 0.0
  %251 = vmatpush2.msra.mxu0 0.0
  %252 = vmatprep.subr.mxu0 0.0
  %253 = vmatpush2.msra.mxu0 0.0
  %254 = vmatprep.subr.mxu0 0.0
  %255 = vmatpush2.msra.mxu0 0.0
  %256 = vmatprep.subr.mxu0 0.0
  %257 = vmatpush2.msra.mxu0 0.0
  %258 = vmatprep.mubr.f32.mxu0 0.0
  %259 = vmatmul.mubr.f32.gmra.mxu0 %v189
  %v260 = vpop.f32.mrf.mxu0
  %v261 = vadd.f32 %v187, %v260
  %v262 = vpop.f32.mrf.mxu0
  %263 = vmatprep.mubr.f32.mxu0 0.0
  %264 = vmatmul.mubr.f32.gmra.mxu0 %v192
  %v265 = vpop.f32.mrf.mxu0
  %v266 = vadd.f32 %v187, %v265
  %v267 = vpop.f32.mrf.mxu0
  %268 = vdwg.mxu0
  %271 = vrot.lane.b32.xlu0 %v261, 120
  %v272 = vpop.permute.xlu0 %271
  %273 = vrot.lane.b32.xlu0 %v266, 120
  %v274 = vpop.permute.xlu0 %273
  %275 = vrot.lane.b32.xlu0 %v261, 112
  %v276 = vpop.permute.xlu0 %275
  %277 = vrot.lane.b32.xlu0 %v266, 112
  %v278 = vpop.permute.xlu0 %277
  %279 = vrot.lane.b32.xlu0 %v261, 104
  %v280 = vpop.permute.xlu0 %279
  %281 = vrot.lane.b32.xlu0 %v266, 104
  %v282 = vpop.permute.xlu0 %281
  %283 = vrot.lane.b32.xlu0 %v261, 96
  %v284 = vpop.permute.xlu0 %283
  %vm285 = vcmask 64512
  %v286 = vsel %vm285, %v261, 0
  %v288 = vsel %vm285, %v284, 0
  %290 = vmatprep.subr.mxu0 0.0
  %291 = vmatpush1.xpose.msra.mxu0 0.0
  %292 = vmatprep.subr.mxu0 0.0
  %293 = vmatpush1.xpose.msra.mxu0 0.0
  %294 = vmatprep.subr.mxu0 0.0
  %295 = vmatpush1.xpose.msra.mxu0 0.0
  %296 = vmatprep.subr.mxu0 0.0
  %297 = vmatpush1.xpose.msra.mxu0 0.0
  %298 = vmatprep.subr.mxu0 0.0
  %299 = vmatpush1.xpose.msra.mxu0 0.0
  %300 = vmatprep.subr.mxu0 0.0
  %301 = vmatpush1.xpose.msra.mxu0 0.0
  %302 = vmatprep.subr.mxu0 0.0
  %303 = vmatpush1.xpose.msra.mxu0 0.0
  %304 = vmatprep.subr.mxu0 0.0
  %305 = vmatpush1.xpose.msra.mxu0 0.0
  %306 = vmatprep.subr.mxu0 0.0
  %307 = vmatpush1.xpose.msra.mxu0 0.0
  %308 = vmatprep.subr.mxu0 0.0
  %309 = vmatpush1.xpose.msra.mxu0 0.0
  %310 = vmatprep.subr.mxu0 0.0
  %311 = vmatpush1.xpose.msra.mxu0 0.0
  %312 = vmatprep.subr.mxu0 0.0
  %313 = vmatpush1.xpose.msra.mxu0 0.0
  %314 = vmatprep.subr.mxu0 0.0
  %315 = vmatpush1.xpose.msra.mxu0 0.0
  %316 = vmatprep.subr.mxu0 0.0
  %317 = vmatpush1.xpose.msra.mxu0 0.0
  %318 = vmatprep.subr.mxu0 0.0
  %319 = vmatpush1.xpose.msra.mxu0 0.0
  %320 = vmatprep.subr.mxu0 0.0
  %321 = vmatpush1.xpose.msra.mxu0 %v288
  %322 = vmatprep.subr.mxu0 0.0
  %323 = vmatpush2.xpose.msra.mxu0 0.0
  %324 = vmatprep.subr.mxu0 0.0
  %325 = vmatpush2.xpose.msra.mxu0 0.0
  %326 = vmatprep.subr.mxu0 0.0
  %327 = vmatpush2.xpose.msra.mxu0 0.0
  %328 = vmatprep.subr.mxu0 0.0
  %329 = vmatpush2.xpose.msra.mxu0 0.0
  %330 = vmatprep.subr.mxu0 0.0
  %331 = vmatpush2.xpose.msra.mxu0 0.0
  %332 = vmatprep.subr.mxu0 0.0
  %333 = vmatpush2.xpose.msra.mxu0 0.0
  %334 = vmatprep.subr.mxu0 0.0
  %335 = vmatpush2.xpose.msra.mxu0 0.0
  %336 = vmatprep.subr.mxu0 0.0
  %337 = vmatpush2.xpose.msra.mxu0 0.0
  %338 = vmatprep.subr.mxu0 0.0
  %339 = vmatpush2.xpose.msra.mxu0 0.0
  %340 = vmatprep.subr.mxu0 0.0
  %341 = vmatpush2.xpose.msra.mxu0 0.0
  %342 = vmatprep.subr.mxu0 0.0
  %343 = vmatpush2.xpose.msra.mxu0 0.0
  %344 = vmatprep.subr.mxu0 0.0
  %345 = vmatpush2.xpose.msra.mxu0 0.0
  %346 = vmatprep.subr.mxu0 0.0
  %347 = vmatpush2.xpose.msra.mxu0 0.0
  %348 = vmatprep.subr.mxu0 0.0
  %349 = vmatpush2.xpose.msra.mxu0 0.0
  %350 = vmatprep.subr.mxu0 0.0
  %351 = vmatpush2.xpose.msra.mxu0 0.0
  %352 = vmatprep.subr.mxu0 0.0
  %353 = vmatpush2.xpose.msra.mxu0 0.0
  %354 = vmatprep.mubr.f32.mxu0 0.0
  %355 = vmatmul.mubr.f32.gmra.mxu0 %v286
  %v356 = vpop.f32.mrf.mxu0
  %v357 = vadd.f32 %v131, %v356
  %v358 = vpop.f32.mrf.mxu0
  %359 = vdwg.mxu0
  %360 = vrot.lane.b32.xlu0 %v266, 96
  %v361 = vpop.permute.xlu0 %360
  %v362 = vsel %vm285, %v266, 0
  %v364 = vsel %vm285, %v361, 0
  %366 = vmatprep.subr.mxu0 0.0
  %367 = vmatpush1.xpose.msra.mxu0 0.0
  %368 = vmatprep.subr.mxu0 0.0
  %369 = vmatpush1.xpose.msra.mxu0 0.0
  %370 = vmatprep.subr.mxu0 0.0
  %371 = vmatpush1.xpose.msra.mxu0 0.0
  %372 = vmatprep.subr.mxu0 0.0
  %373 = vmatpush1.xpose.msra.mxu0 0.0
  %374 = vmatprep.subr.mxu0 0.0
  %375 = vmatpush1.xpose.msra.mxu0 0.0
  %376 = vmatprep.subr.mxu0 0.0
  %377 = vmatpush1.xpose.msra.mxu0 0.0
  %378 = vmatprep.subr.mxu0 0.0
  %379 = vmatpush1.xpose.msra.mxu0 0.0
  %380 = vmatprep.subr.mxu0 0.0
  %381 = vmatpush1.xpose.msra.mxu0 0.0
  %382 = vmatprep.subr.mxu0 0.0
  %383 = vmatpush1.xpose.msra.mxu0 0.0
  %384 = vmatprep.subr.mxu0 0.0
  %385 = vmatpush1.xpose.msra.mxu0 0.0
  %386 = vmatprep.subr.mxu0 0.0
  %387 = vmatpush1.xpose.msra.mxu0 0.0
  %388 = vmatprep.subr.mxu0 0.0
  %389 = vmatpush1.xpose.msra.mxu0 0.0
  %390 = vmatprep.subr.mxu0 0.0
  %391 = vmatpush1.xpose.msra.mxu0 0.0
  %392 = vmatprep.subr.mxu0 0.0
  %393 = vmatpush1.xpose.msra.mxu0 0.0
  %394 = vmatprep.subr.mxu0 0.0
  %395 = vmatpush1.xpose.msra.mxu0 0.0
  %396 = vmatprep.subr.mxu0 0.0
  %397 = vmatpush1.xpose.msra.mxu0 %v364
  %398 = vmatprep.subr.mxu0 0.0
  %399 = vmatpush2.xpose.msra.mxu0 0.0
  %400 = vmatprep.subr.mxu0 0.0
  %401 = vmatpush2.xpose.msra.mxu0 0.0
  %402 = vmatprep.subr.mxu0 0.0
  %403 = vmatpush2.xpose.msra.mxu0 0.0
  %404 = vmatprep.subr.mxu0 0.0
  %405 = vmatpush2.xpose.msra.mxu0 0.0
  %406 = vmatprep.subr.mxu0 0.0
  %407 = vmatpush2.xpose.msra.mxu0 0.0
  %408 = vmatprep.subr.mxu0 0.0
  %409 = vmatpush2.xpose.msra.mxu0 0.0
  %410 = vmatprep.subr.mxu0 0.0
  %411 = vmatpush2.xpose.msra.mxu0 0.0
  %412 = vmatprep.subr.mxu0 0.0
  %413 = vmatpush2.xpose.msra.mxu0 0.0
  %414 = vmatprep.subr.mxu0 0.0
  %415 = vmatpush2.xpose.msra.mxu0 0.0
  %416 = vmatprep.subr.mxu0 0.0
  %417 = vmatpush2.xpose.msra.mxu0 0.0
  %418 = vmatprep.subr.mxu0 0.0
  %419 = vmatpush2.xpose.msra.mxu0 0.0
  %420 = vmatprep.subr.mxu0 0.0
  %421 = vmatpush2.xpose.msra.mxu0 0.0
  %422 = vmatprep.subr.mxu0 0.0
  %423 = vmatpush2.xpose.msra.mxu0 0.0
  %424 = vmatprep.subr.mxu0 0.0
  %425 = vmatpush2.xpose.msra.mxu0 0.0
  %426 = vmatprep.subr.mxu0 0.0
  %427 = vmatpush2.xpose.msra.mxu0 0.0
  %428 = vmatprep.subr.mxu0 0.0
  %429 = vmatpush2.xpose.msra.mxu0 0.0
  %430 = vmatprep.mubr.f32.mxu0 0.0
  %431 = vmatmul.mubr.f32.gmra.mxu0 %v362
  %v432 = vpop.f32.mrf.mxu0
  %v433 = vadd.f32 %v131, %v432
  %v434 = vpop.f32.mrf.mxu0
  %435 = vdwg.mxu0
  %436 = vrot.lane.b32.xlu0 %v272, 96
  %v437 = vpop.permute.xlu0 %436
  %v438 = vsel %vm285, %v272, 0
  %v440 = vsel %vm285, %v437, 0
  %442 = vmatprep.subr.mxu0 0.0
  %443 = vmatpush1.xpose.msra.mxu0 0.0
  %444 = vmatprep.subr.mxu0 0.0
  %445 = vmatpush1.xpose.msra.mxu0 0.0
  %446 = vmatprep.subr.mxu0 0.0
  %447 = vmatpush1.xpose.msra.mxu0 0.0
  %448 = vmatprep.subr.mxu0 0.0
  %449 = vmatpush1.xpose.msra.mxu0 0.0
  %450 = vmatprep.subr.mxu0 0.0
  %451 = vmatpush1.xpose.msra.mxu0 0.0
  %452 = vmatprep.subr.mxu0 0.0
  %453 = vmatpush1.xpose.msra.mxu0 0.0
  %454 = vmatprep.subr.mxu0 0.0
  %455 = vmatpush1.xpose.msra.mxu0 0.0
  %456 = vmatprep.subr.mxu0 0.0
  %457 = vmatpush1.xpose.msra.mxu0 0.0
  %458 = vmatprep.subr.mxu0 0.0
  %459 = vmatpush1.xpose.msra.mxu0 0.0
  %460 = vmatprep.subr.mxu0 0.0
  %461 = vmatpush1.xpose.msra.mxu0 0.0
  %462 = vmatprep.subr.mxu0 0.0
  %463 = vmatpush1.xpose.msra.mxu0 0.0
  %464 = vmatprep.subr.mxu0 0.0
  %465 = vmatpush1.xpose.msra.mxu0 0.0
  %466 = vmatprep.subr.mxu0 0.0
  %467 = vmatpush1.xpose.msra.mxu0 0.0
  %468 = vmatprep.subr.mxu0 0.0
  %469 = vmatpush1.xpose.msra.mxu0 0.0
  %470 = vmatprep.subr.mxu0 0.0
  %471 = vmatpush1.xpose.msra.mxu0 0.0
  %472 = vmatprep.subr.mxu0 0.0
  %473 = vmatpush1.xpose.msra.mxu0 %v440
  %474 = vmatprep.subr.mxu0 0.0
  %475 = vmatpush2.xpose.msra.mxu0 0.0
  %476 = vmatprep.subr.mxu0 0.0
  %477 = vmatpush2.xpose.msra.mxu0 0.0
  %478 = vmatprep.subr.mxu0 0.0
  %479 = vmatpush2.xpose.msra.mxu0 0.0
  %480 = vmatprep.subr.mxu0 0.0
  %481 = vmatpush2.xpose.msra.mxu0 0.0
  %482 = vmatprep.subr.mxu0 0.0
  %483 = vmatpush2.xpose.msra.mxu0 0.0
  %484 = vmatprep.subr.mxu0 0.0
  %485 = vmatpush2.xpose.msra.mxu0 0.0
  %486 = vmatprep.subr.mxu0 0.0
  %487 = vmatpush2.xpose.msra.mxu0 0.0
  %488 = vmatprep.subr.mxu0 0.0
  %489 = vmatpush2.xpose.msra.mxu0 0.0
  %490 = vmatprep.subr.mxu0 0.0
  %491 = vmatpush2.xpose.msra.mxu0 0.0
  %492 = vmatprep.subr.mxu0 0.0
  %493 = vmatpush2.xpose.msra.mxu0 0.0
  %494 = vmatprep.subr.mxu0 0.0
  %495 = vmatpush2.xpose.msra.mxu0 0.0
  %496 = vmatprep.subr.mxu0 0.0
  %497 = vmatpush2.xpose.msra.mxu0 0.0
  %498 = vmatprep.subr.mxu0 0.0
  %499 = vmatpush2.xpose.msra.mxu0 0.0
  %500 = vmatprep.subr.mxu0 0.0
  %501 = vmatpush2.xpose.msra.mxu0 0.0
  %502 = vmatprep.subr.mxu0 0.0
  %503 = vmatpush2.xpose.msra.mxu0 0.0
  %504 = vmatprep.subr.mxu0 0.0
  %505 = vmatpush2.xpose.msra.mxu0 0.0
  %506 = vmatprep.mubr.f32.mxu0 0.0
  %507 = vmatmul.mubr.f32.gmra.mxu0 %v438
  %v508 = vpop.f32.mrf.mxu0
  %v509 = vadd.f32 %v131, %v508
  %v510 = vpop.f32.mrf.mxu0
  %511 = vdwg.mxu0
  %512 = vrot.lane.b32.xlu0 %v274, 96
  %v513 = vpop.permute.xlu0 %512
  %v514 = vsel %vm285, %v274, 0
  %v516 = vsel %vm285, %v513, 0
  %518 = vmatprep.subr.mxu0 0.0
  %519 = vmatpush1.xpose.msra.mxu0 0.0
  %520 = vmatprep.subr.mxu0 0.0
  %521 = vmatpush1.xpose.msra.mxu0 0.0
  %522 = vmatprep.subr.mxu0 0.0
  %523 = vmatpush1.xpose.msra.mxu0 0.0
  %524 = vmatprep.subr.mxu0 0.0
  %525 = vmatpush1.xpose.msra.mxu0 0.0
  %526 = vmatprep.subr.mxu0 0.0
  %527 = vmatpush1.xpose.msra.mxu0 0.0
  %528 = vmatprep.subr.mxu0 0.0
  %529 = vmatpush1.xpose.msra.mxu0 0.0
  %530 = vmatprep.subr.mxu0 0.0
  %531 = vmatpush1.xpose.msra.mxu0 0.0
  %532 = vmatprep.subr.mxu0 0.0
  %533 = vmatpush1.xpose.msra.mxu0 0.0
  %534 = vmatprep.subr.mxu0 0.0
  %535 = vmatpush1.xpose.msra.mxu0 0.0
  %536 = vmatprep.subr.mxu0 0.0
  %537 = vmatpush1.xpose.msra.mxu0 0.0
  %538 = vmatprep.subr.mxu0 0.0
  %539 = vmatpush1.xpose.msra.mxu0 0.0
  %540 = vmatprep.subr.mxu0 0.0
  %541 = vmatpush1.xpose.msra.mxu0 0.0
  %542 = vmatprep.subr.mxu0 0.0
  %543 = vmatpush1.xpose.msra.mxu0 0.0
  %544 = vmatprep.subr.mxu0 0.0
  %545 = vmatpush1.xpose.msra.mxu0 0.0
  %546 = vmatprep.subr.mxu0 0.0
  %547 = vmatpush1.xpose.msra.mxu0 0.0
  %548 = vmatprep.subr.mxu0 0.0
  %549 = vmatpush1.xpose.msra.mxu0 %v516
  %550 = vmatprep.subr.mxu0 0.0
  %551 = vmatpush2.xpose.msra.mxu0 0.0
  %552 = vmatprep.subr.mxu0 0.0
  %553 = vmatpush2.xpose.msra.mxu0 0.0
  %554 = vmatprep.subr.mxu0 0.0
  %555 = vmatpush2.xpose.msra.mxu0 0.0
  %556 = vmatprep.subr.mxu0 0.0
  %557 = vmatpush2.xpose.msra.mxu0 0.0
  %558 = vmatprep.subr.mxu0 0.0
  %559 = vmatpush2.xpose.msra.mxu0 0.0
  %560 = vmatprep.subr.mxu0 0.0
  %561 = vmatpush2.xpose.msra.mxu0 0.0
  %562 = vmatprep.subr.mxu0 0.0
  %563 = vmatpush2.xpose.msra.mxu0 0.0
  %564 = vmatprep.subr.mxu0 0.0
  %565 = vmatpush2.xpose.msra.mxu0 0.0
  %566 = vmatprep.subr.mxu0 0.0
  %567 = vmatpush2.xpose.msra.mxu0 0.0
  %568 = vmatprep.subr.mxu0 0.0
  %569 = vmatpush2.xpose.msra.mxu0 0.0
  %570 = vmatprep.subr.mxu0 0.0
  %571 = vmatpush2.xpose.msra.mxu0 0.0
  %572 = vmatprep.subr.mxu0 0.0
  %573 = vmatpush2.xpose.msra.mxu0 0.0
  %574 = vmatprep.subr.mxu0 0.0
  %575 = vmatpush2.xpose.msra.mxu0 0.0
  %576 = vmatprep.subr.mxu0 0.0
  %577 = vmatpush2.xpose.msra.mxu0 0.0
  %578 = vmatprep.subr.mxu0 0.0
  %579 = vmatpush2.xpose.msra.mxu0 0.0
  %580 = vmatprep.subr.mxu0 0.0
  %581 = vmatpush2.xpose.msra.mxu0 0.0
  %582 = vmatprep.mubr.f32.mxu0 0.0
  %583 = vmatmul.mubr.f32.gmra.mxu0 %v514
  %v584 = vpop.f32.mrf.mxu0
  %v585 = vadd.f32 %v131, %v584
  %v586 = vpop.f32.mrf.mxu0
  %587 = vdwg.mxu0
  %588 = vrot.lane.b32.xlu0 %v276, 96
  %v589 = vpop.permute.xlu0 %588
  %v590 = vsel %vm285, %v276, 0
  %v592 = vsel %vm285, %v589, 0
  %594 = vmatprep.subr.mxu0 0.0
  %595 = vmatpush1.xpose.msra.mxu0 0.0
  %596 = vmatprep.subr.mxu0 0.0
  %597 = vmatpush1.xpose.msra.mxu0 0.0
  %598 = vmatprep.subr.mxu0 0.0
  %599 = vmatpush1.xpose.msra.mxu0 0.0
  %600 = vmatprep.subr.mxu0 0.0
  %601 = vmatpush1.xpose.msra.mxu0 0.0
  %602 = vmatprep.subr.mxu0 0.0
  %603 = vmatpush1.xpose.msra.mxu0 0.0
  %604 = vmatprep.subr.mxu0 0.0
  %605 = vmatpush1.xpose.msra.mxu0 0.0
  %606 = vmatprep.subr.mxu0 0.0
  %607 = vmatpush1.xpose.msra.mxu0 0.0
  %608 = vmatprep.subr.mxu0 0.0
  %609 = vmatpush1.xpose.msra.mxu0 0.0
  %610 = vmatprep.subr.mxu0 0.0
  %611 = vmatpush1.xpose.msra.mxu0 0.0
  %612 = vmatprep.subr.mxu0 0.0
  %613 = vmatpush1.xpose.msra.mxu0 0.0
  %614 = vmatprep.subr.mxu0 0.0
  %615 = vmatpush1.xpose.msra.mxu0 0.0
  %616 = vmatprep.subr.mxu0 0.0
  %617 = vmatpush1.xpose.msra.mxu0 0.0
  %618 = vmatprep.subr.mxu0 0.0
  %619 = vmatpush1.xpose.msra.mxu0 0.0
  %620 = vmatprep.subr.mxu0 0.0
  %621 = vmatpush1.xpose.msra.mxu0 0.0
  %622 = vmatprep.subr.mxu0 0.0
  %623 = vmatpush1.xpose.msra.mxu0 0.0
  %624 = vmatprep.subr.mxu0 0.0
  %625 = vmatpush1.xpose.msra.mxu0 %v592
  %626 = vmatprep.subr.mxu0 0.0
  %627 = vmatpush2.xpose.msra.mxu0 0.0
  %628 = vmatprep.subr.mxu0 0.0
  %629 = vmatpush2.xpose.msra.mxu0 0.0
  %630 = vmatprep.subr.mxu0 0.0
  %631 = vmatpush2.xpose.msra.mxu0 0.0
  %632 = vmatprep.subr.mxu0 0.0
  %633 = vmatpush2.xpose.msra.mxu0 0.0
  %634 = vmatprep.subr.mxu0 0.0
  %635 = vmatpush2.xpose.msra.mxu0 0.0
  %636 = vmatprep.subr.mxu0 0.0
  %637 = vmatpush2.xpose.msra.mxu0 0.0
  %638 = vmatprep.subr.mxu0 0.0
  %639 = vmatpush2.xpose.msra.mxu0 0.0
  %640 = vmatprep.subr.mxu0 0.0
  %641 = vmatpush2.xpose.msra.mxu0 0.0
  %642 = vmatprep.subr.mxu0 0.0
  %643 = vmatpush2.xpose.msra.mxu0 0.0
  %644 = vmatprep.subr.mxu0 0.0
  %645 = vmatpush2.xpose.msra.mxu0 0.0
  %646 = vmatprep.subr.mxu0 0.0
  %647 = vmatpush2.xpose.msra.mxu0 0.0
  %648 = vmatprep.subr.mxu0 0.0
  %649 = vmatpush2.xpose.msra.mxu0 0.0
  %650 = vmatprep.subr.mxu0 0.0
  %651 = vmatpush2.xpose.msra.mxu0 0.0
  %652 = vmatprep.subr.mxu0 0.0
  %653 = vmatpush2.xpose.msra.mxu0 0.0
  %654 = vmatprep.subr.mxu0 0.0
  %655 = vmatpush2.xpose.msra.mxu0 0.0
  %656 = vmatprep.subr.mxu0 0.0
  %657 = vmatpush2.xpose.msra.mxu0 0.0
  %658 = vmatprep.mubr.f32.mxu0 0.0
  %659 = vmatmul.mubr.f32.gmra.mxu0 %v590
  %v660 = vpop.f32.mrf.mxu0
  %v661 = vadd.f32 %v131, %v660
  %v662 = vpop.f32.mrf.mxu0
  %663 = vdwg.mxu0
  %664 = vrot.lane.b32.xlu0 %v278, 96
  %v665 = vpop.permute.xlu0 %664
  %v666 = vsel %vm285, %v278, 0
  %v668 = vsel %vm285, %v665, 0
  %670 = vmatprep.subr.mxu0 0.0
  %671 = vmatpush1.xpose.msra.mxu0 0.0
  %672 = vmatprep.subr.mxu0 0.0
  %673 = vmatpush1.xpose.msra.mxu0 0.0
  %674 = vmatprep.subr.mxu0 0.0
  %675 = vmatpush1.xpose.msra.mxu0 0.0
  %676 = vmatprep.subr.mxu0 0.0
  %677 = vmatpush1.xpose.msra.mxu0 0.0
  %678 = vmatprep.subr.mxu0 0.0
  %679 = vmatpush1.xpose.msra.mxu0 0.0
  %680 = vmatprep.subr.mxu0 0.0
  %681 = vmatpush1.xpose.msra.mxu0 0.0
  %682 = vmatprep.subr.mxu0 0.0
  %683 = vmatpush1.xpose.msra.mxu0 0.0
  %684 = vmatprep.subr.mxu0 0.0
  %685 = vmatpush1.xpose.msra.mxu0 0.0
  %686 = vmatprep.subr.mxu0 0.0
  %687 = vmatpush1.xpose.msra.mxu0 0.0
  %688 = vmatprep.subr.mxu0 0.0
  %689 = vmatpush1.xpose.msra.mxu0 0.0
  %690 = vmatprep.subr.mxu0 0.0
  %691 = vmatpush1.xpose.msra.mxu0 0.0
  %692 = vmatprep.subr.mxu0 0.0
  %693 = vmatpush1.xpose.msra.mxu0 0.0
  %694 = vmatprep.subr.mxu0 0.0
  %695 = vmatpush1.xpose.msra.mxu0 0.0
  %696 = vmatprep.subr.mxu0 0.0
  %697 = vmatpush1.xpose.msra.mxu0 0.0
  %698 = vmatprep.subr.mxu0 0.0
  %699 = vmatpush1.xpose.msra.mxu0 0.0
  %700 = vmatprep.subr.mxu0 0.0
  %701 = vmatpush1.xpose.msra.mxu0 %v668
  %702 = vmatprep.subr.mxu0 0.0
  %703 = vmatpush2.xpose.msra.mxu0 0.0
  %704 = vmatprep.subr.mxu0 0.0
  %705 = vmatpush2.xpose.msra.mxu0 0.0
  %706 = vmatprep.subr.mxu0 0.0
  %707 = vmatpush2.xpose.msra.mxu0 0.0
  %708 = vmatprep.subr.mxu0 0.0
  %709 = vmatpush2.xpose.msra.mxu0 0.0
  %710 = vmatprep.subr.mxu0 0.0
  %711 = vmatpush2.xpose.msra.mxu0 0.0
  %712 = vmatprep.subr.mxu0 0.0
  %713 = vmatpush2.xpose.msra.mxu0 0.0
  %714 = vmatprep.subr.mxu0 0.0
  %715 = vmatpush2.xpose.msra.mxu0 0.0
  %716 = vmatprep.subr.mxu0 0.0
  %717 = vmatpush2.xpose.msra.mxu0 0.0
  %718 = vmatprep.subr.mxu0 0.0
  %719 = vmatpush2.xpose.msra.mxu0 0.0
  %720 = vmatprep.subr.mxu0 0.0
  %721 = vmatpush2.xpose.msra.mxu0 0.0
  %722 = vmatprep.subr.mxu0 0.0
  %723 = vmatpush2.xpose.msra.mxu0 0.0
  %724 = vmatprep.subr.mxu0 0.0
  %725 = vmatpush2.xpose.msra.mxu0 0.0
  %726 = vmatprep.subr.mxu0 0.0
  %727 = vmatpush2.xpose.msra.mxu0 0.0
  %728 = vmatprep.subr.mxu0 0.0
  %729 = vmatpush2.xpose.msra.mxu0 0.0
  %730 = vmatprep.subr.mxu0 0.0
  %731 = vmatpush2.xpose.msra.mxu0 0.0
  %732 = vmatprep.subr.mxu0 0.0
  %733 = vmatpush2.xpose.msra.mxu0 0.0
  %734 = vmatprep.mubr.f32.mxu0 0.0
  %735 = vmatmul.mubr.f32.gmra.mxu0 %v666
  %v736 = vpop.f32.mrf.mxu0
  %v737 = vadd.f32 %v131, %v736
  %v738 = vpop.f32.mrf.mxu0
  %739 = vdwg.mxu0
  %740 = vrot.lane.b32.xlu0 %v280, 96
  %v741 = vpop.permute.xlu0 %740
  %v742 = vsel %vm285, %v280, 0
  %v744 = vsel %vm285, %v741, 0
  %746 = vmatprep.subr.mxu0 0.0
  %747 = vmatpush1.xpose.msra.mxu0 0.0
  %748 = vmatprep.subr.mxu0 0.0
  %749 = vmatpush1.xpose.msra.mxu0 0.0
  %750 = vmatprep.subr.mxu0 0.0
  %751 = vmatpush1.xpose.msra.mxu0 0.0
  %752 = vmatprep.subr.mxu0 0.0
  %753 = vmatpush1.xpose.msra.mxu0 0.0
  %754 = vmatprep.subr.mxu0 0.0
  %755 = vmatpush1.xpose.msra.mxu0 0.0
  %756 = vmatprep.subr.mxu0 0.0
  %757 = vmatpush1.xpose.msra.mxu0 0.0
  %758 = vmatprep.subr.mxu0 0.0
  %759 = vmatpush1.xpose.msra.mxu0 0.0
  %760 = vmatprep.subr.mxu0 0.0
  %761 = vmatpush1.xpose.msra.mxu0 0.0
  %762 = vmatprep.subr.mxu0 0.0
  %763 = vmatpush1.xpose.msra.mxu0 0.0
  %764 = vmatprep.subr.mxu0 0.0
  %765 = vmatpush1.xpose.msra.mxu0 0.0
  %766 = vmatprep.subr.mxu0 0.0
  %767 = vmatpush1.xpose.msra.mxu0 0.0
  %768 = vmatprep.subr.mxu0 0.0
  %769 = vmatpush1.xpose.msra.mxu0 0.0
  %770 = vmatprep.subr.mxu0 0.0
  %771 = vmatpush1.xpose.msra.mxu0 0.0
  %772 = vmatprep.subr.mxu0 0.0
  %773 = vmatpush1.xpose.msra.mxu0 0.0
  %774 = vmatprep.subr.mxu0 0.0
  %775 = vmatpush1.xpose.msra.mxu0 0.0
  %776 = vmatprep.subr.mxu0 0.0
  %777 = vmatpush1.xpose.msra.mxu0 %v744
  %778 = vmatprep.subr.mxu0 0.0
  %779 = vmatpush2.xpose.msra.mxu0 0.0
  %780 = vmatprep.subr.mxu0 0.0
  %781 = vmatpush2.xpose.msra.mxu0 0.0
  %782 = vmatprep.subr.mxu0 0.0
  %783 = vmatpush2.xpose.msra.mxu0 0.0
  %784 = vmatprep.subr.mxu0 0.0
  %785 = vmatpush2.xpose.msra.mxu0 0.0
  %786 = vmatprep.subr.mxu0 0.0
  %787 = vmatpush2.xpose.msra.mxu0 0.0
  %788 = vmatprep.subr.mxu0 0.0
  %789 = vmatpush2.xpose.msra.mxu0 0.0
  %790 = vmatprep.subr.mxu0 0.0
  %791 = vmatpush2.xpose.msra.mxu0 0.0
  %792 = vmatprep.subr.mxu0 0.0
  %793 = vmatpush2.xpose.msra.mxu0 0.0
  %794 = vmatprep.subr.mxu0 0.0
  %795 = vmatpush2.xpose.msra.mxu0 0.0
  %796 = vmatprep.subr.mxu0 0.0
  %797 = vmatpush2.xpose.msra.mxu0 0.0
  %798 = vmatprep.subr.mxu0 0.0
  %799 = vmatpush2.xpose.msra.mxu0 0.0
  %800 = vmatprep.subr.mxu0 0.0
  %801 = vmatpush2.xpose.msra.mxu0 0.0
  %802 = vmatprep.subr.mxu0 0.0
  %803 = vmatpush2.xpose.msra.mxu0 0.0
  %804 = vmatprep.subr.mxu0 0.0
  %805 = vmatpush2.xpose.msra.mxu0 0.0
  %806 = vmatprep.subr.mxu0 0.0
  %807 = vmatpush2.xpose.msra.mxu0 0.0
  %808 = vmatprep.subr.mxu0 0.0
  %809 = vmatpush2.xpose.msra.mxu0 0.0
  %810 = vmatprep.mubr.f32.mxu0 0.0
  %811 = vmatmul.mubr.f32.gmra.mxu0 %v742
  %v812 = vpop.f32.mrf.mxu0
  %v813 = vadd.f32 %v131, %v812
  %v814 = vpop.f32.mrf.mxu0
  %815 = vdwg.mxu0
  %816 = vrot.lane.b32.xlu0 %v282, 96
  %v817 = vpop.permute.xlu0 %816
  %v818 = vsel %vm285, %v282, 0
  %v820 = vsel %vm285, %v817, 0
  %822 = vmatprep.subr.mxu0 0.0
  %823 = vmatpush1.xpose.msra.mxu0 0.0
  %824 = vmatprep.subr.mxu0 0.0
  %825 = vmatpush1.xpose.msra.mxu0 0.0
  %826 = vmatprep.subr.mxu0 0.0
  %827 = vmatpush1.xpose.msra.mxu0 0.0
  %828 = vmatprep.subr.mxu0 0.0
  %829 = vmatpush1.xpose.msra.mxu0 0.0
  %830 = vmatprep.subr.mxu0 0.0
  %831 = vmatpush1.xpose.msra.mxu0 0.0
  %832 = vmatprep.subr.mxu0 0.0
  %833 = vmatpush1.xpose.msra.mxu0 0.0
  %834 = vmatprep.subr.mxu0 0.0
  %835 = vmatpush1.xpose.msra.mxu0 0.0
  %836 = vmatprep.subr.mxu0 0.0
  %837 = vmatpush1.xpose.msra.mxu0 0.0
  %838 = vmatprep.subr.mxu0 0.0
  %839 = vmatpush1.xpose.msra.mxu0 0.0
  %840 = vmatprep.subr.mxu0 0.0
  %841 = vmatpush1.xpose.msra.mxu0 0.0
  %842 = vmatprep.subr.mxu0 0.0
  %843 = vmatpush1.xpose.msra.mxu0 0.0
  %844 = vmatprep.subr.mxu0 0.0
  %845 = vmatpush1.xpose.msra.mxu0 0.0
  %846 = vmatprep.subr.mxu0 0.0
  %847 = vmatpush1.xpose.msra.mxu0 0.0
  %848 = vmatprep.subr.mxu0 0.0
  %849 = vmatpush1.xpose.msra.mxu0 0.0
  %850 = vmatprep.subr.mxu0 0.0
  %851 = vmatpush1.xpose.msra.mxu0 0.0
  %852 = vmatprep.subr.mxu0 0.0
  %853 = vmatpush1.xpose.msra.mxu0 %v820
  %854 = vmatprep.subr.mxu0 0.0
  %855 = vmatpush2.xpose.msra.mxu0 0.0
  %856 = vmatprep.subr.mxu0 0.0
  %857 = vmatpush2.xpose.msra.mxu0 0.0
  %858 = vmatprep.subr.mxu0 0.0
  %859 = vmatpush2.xpose.msra.mxu0 0.0
  %860 = vmatprep.subr.mxu0 0.0
  %861 = vmatpush2.xpose.msra.mxu0 0.0
  %862 = vmatprep.subr.mxu0 0.0
  %863 = vmatpush2.xpose.msra.mxu0 0.0
  %864 = vmatprep.subr.mxu0 0.0
  %865 = vmatpush2.xpose.msra.mxu0 0.0
  %866 = vmatprep.subr.mxu0 0.0
  %867 = vmatpush2.xpose.msra.mxu0 0.0
  %868 = vmatprep.subr.mxu0 0.0
  %869 = vmatpush2.xpose.msra.mxu0 0.0
  %870 = vmatprep.subr.mxu0 0.0
  %871 = vmatpush2.xpose.msra.mxu0 0.0
  %872 = vmatprep.subr.mxu0 0.0
  %873 = vmatpush2.xpose.msra.mxu0 0.0
  %874 = vmatprep.subr.mxu0 0.0
  %875 = vmatpush2.xpose.msra.mxu0 0.0
  %876 = vmatprep.subr.mxu0 0.0
  %877 = vmatpush2.xpose.msra.mxu0 0.0
  %878 = vmatprep.subr.mxu0 0.0
  %879 = vmatpush2.xpose.msra.mxu0 0.0
  %880 = vmatprep.subr.mxu0 0.0
  %881 = vmatpush2.xpose.msra.mxu0 0.0
  %882 = vmatprep.subr.mxu0 0.0
  %883 = vmatpush2.xpose.msra.mxu0 0.0
  %884 = vmatprep.subr.mxu0 0.0
  %885 = vmatpush2.xpose.msra.mxu0 0.0
  %886 = vmatprep.mubr.f32.mxu0 0.0
  %887 = vmatmul.mubr.f32.gmra.mxu0 %v818
  %v888 = vpop.f32.mrf.mxu0
  %v889 = vadd.f32 %v131, %v888
  %v890 = vpop.f32.mrf.mxu0
  %891 = vdwg.mxu0
  %v892 = vsel %vm285, %v357, -inf
  %893 = vmax.xlane.f32.xlu0 %v892
  %v894 = vpop.xlane.xlu0 %893
  %v895 = vsel %vm285, %v433, -inf
  %896 = vmax.xlane.f32.xlu0 %v895
  %v897 = vpop.xlane.xlu0 %896
  %v898 = vsel %vm285, %v509, -inf
  %899 = vmax.xlane.f32.xlu0 %v898
  %v900 = vpop.xlane.xlu0 %899
  %v901 = vsel %vm285, %v585, -inf
  %902 = vmax.xlane.f32.xlu0 %v901
  %v903 = vpop.xlane.xlu0 %902
  %v904 = vsel %vm285, %v661, -inf
  %905 = vmax.xlane.f32.xlu0 %v904
  %v906 = vpop.xlane.xlu0 %905
  %v907 = vsel %vm285, %v737, -inf
  %908 = vmax.xlane.f32.xlu0 %v907
  %v909 = vpop.xlane.xlu0 %908
  %v910 = vsel %vm285, %v813, -inf
  %911 = vmax.xlane.f32.xlu0 %v910
  %v912 = vpop.xlane.xlu0 %911
  %v913 = vsel %vm285, %v889, -inf
  %914 = vmax.xlane.f32.xlu0 %v913
  %v915 = vpop.xlane.xlu0 %914
  %v916 = vsub.f32 %v357, %v894
  %v917 = vsub.f32 %v433, %v897
  %v918 = vsub.f32 %v509, %v900
  %v919 = vsub.f32 %v585, %v903
  %v920 = vsub.f32 %v661, %v906
  %v921 = vsub.f32 %v737, %v909
  %v922 = vsub.f32 %v813, %v912
  %v923 = vsub.f32 %v889, %v915
  %v924 = vmul.f32 %v916, 1.442695
  %v925 = vpow.pop %v924
  %v926 = vmul.f32 %v917, 1.442695
  %v927 = vpow.pop %v926
  %v928 = vmul.f32 %v918, 1.442695
  %v929 = vpow.pop %v928
  %v930 = vmul.f32 %v919, 1.442695
  %v931 = vpow.pop %v930
  %v932 = vmul.f32 %v920, 1.442695
  %v933 = vpow.pop %v932
  %v934 = vmul.f32 %v921, 1.442695
  %v935 = vpow.pop %v934
  %v936 = vmul.f32 %v922, 1.442695
  %v937 = vpow.pop %v936
  %v938 = vmul.f32 %v923, 1.442695
  %v939 = vpow.pop %v938
  %v940 = vsel %vm285, %v925, 0.0
  %941 = vadd.xlane.f32.xlu0 %v940
  %v942 = vpop.xlane.xlu0 %941
  %v943 = vsel %vm285, %v927, 0.0
  %944 = vadd.xlane.f32.xlu0 %v943
  %v945 = vpop.xlane.xlu0 %944
  %v946 = vsel %vm285, %v929, 0.0
  %947 = vadd.xlane.f32.xlu0 %v946
  %v948 = vpop.xlane.xlu0 %947
  %v949 = vsel %vm285, %v931, 0.0
  %950 = vadd.xlane.f32.xlu0 %v949
  %v951 = vpop.xlane.xlu0 %950
  %v952 = vsel %vm285, %v933, 0.0
  %953 = vadd.xlane.f32.xlu0 %v952
  %v954 = vpop.xlane.xlu0 %953
  %v955 = vsel %vm285, %v935, 0.0
  %956 = vadd.xlane.f32.xlu0 %v955
  %v957 = vpop.xlane.xlu0 %956
  %v958 = vsel %vm285, %v937, 0.0
  %959 = vadd.xlane.f32.xlu0 %v958
  %v960 = vpop.xlane.xlu0 %959
  %v961 = vsel %vm285, %v939, 0.0
  %962 = vadd.xlane.f32.xlu0 %v961
  %v963 = vpop.xlane.xlu0 %962
  %v964 = vrcp.pop %v942
  %v965 = vmul.f32 %v925, %v964
  %v966 = vrcp.pop %v945
  %v967 = vmul.f32 %v927, %v966
  %v968 = vrcp.pop %v948
  %v969 = vmul.f32 %v929, %v968
  %v970 = vrcp.pop %v951
  %v971 = vmul.f32 %v931, %v970
  %v972 = vrcp.pop %v954
  %v973 = vmul.f32 %v933, %v972
  %v974 = vrcp.pop %v957
  %v975 = vmul.f32 %v935, %v974
  %v976 = vrcp.pop %v960
  %v977 = vmul.f32 %v937, %v976
  %v978 = vrcp.pop %v963
  %v979 = vmul.f32 %v939, %v978
  %980 = vrot.lane.b32.xlu0 %v261, 64
  %v981 = vpop.permute.xlu0 %980
  %v984 = vsel %vm285, %v965, 0
  %986 = vmatprep.subr.mxu0 0.0
  %987 = vmatpush1.msra.mxu0 0.0
  %988 = vmatprep.subr.mxu0 0.0
  %989 = vmatpush1.msra.mxu0 0.0
  %990 = vmatprep.subr.mxu0 0.0
  %991 = vmatpush1.msra.mxu0 0.0
  %992 = vmatprep.subr.mxu0 0.0
  %993 = vmatpush1.msra.mxu0 0.0
  %994 = vmatprep.subr.mxu0 0.0
  %995 = vmatpush1.msra.mxu0 0.0
  %996 = vmatprep.subr.mxu0 0.0
  %997 = vmatpush1.msra.mxu0 0.0
  %998 = vmatprep.subr.mxu0 0.0
  %999 = vmatpush1.msra.mxu0 0.0
  %1000 = vmatprep.subr.mxu0 0.0
  %1001 = vmatpush1.msra.mxu0 0.0
  %1002 = vmatprep.subr.mxu0 0.0
  %1003 = vmatpush1.msra.mxu0 0.0
  %1004 = vmatprep.subr.mxu0 0.0
  %1005 = vmatpush1.msra.mxu0 0.0
  %1006 = vmatprep.subr.mxu0 0.0
  %1007 = vmatpush1.msra.mxu0 0.0
  %1008 = vmatprep.subr.mxu0 0.0
  %1009 = vmatpush1.msra.mxu0 0.0
  %1010 = vmatprep.subr.mxu0 0.0
  %1011 = vmatpush1.msra.mxu0 0.0
  %1012 = vmatprep.subr.mxu0 0.0
  %1013 = vmatpush1.msra.mxu0 0.0
  %1014 = vmatprep.subr.mxu0 0.0
  %1015 = vmatpush1.msra.mxu0 0.0
  %1016 = vmatprep.subr.mxu0 0.0
  %1017 = vmatpush1.msra.mxu0 %v981
  %1018 = vmatprep.subr.mxu0 0.0
  %1019 = vmatpush2.msra.mxu0 0.0
  %1020 = vmatprep.subr.mxu0 0.0
  %1021 = vmatpush2.msra.mxu0 0.0
  %1022 = vmatprep.subr.mxu0 0.0
  %1023 = vmatpush2.msra.mxu0 0.0
  %1024 = vmatprep.subr.mxu0 0.0
  %1025 = vmatpush2.msra.mxu0 0.0
  %1026 = vmatprep.subr.mxu0 0.0
  %1027 = vmatpush2.msra.mxu0 0.0
  %1028 = vmatprep.subr.mxu0 0.0
  %1029 = vmatpush2.msra.mxu0 0.0
  %1030 = vmatprep.subr.mxu0 0.0
  %1031 = vmatpush2.msra.mxu0 0.0
  %1032 = vmatprep.subr.mxu0 0.0
  %1033 = vmatpush2.msra.mxu0 0.0
  %1034 = vmatprep.subr.mxu0 0.0
  %1035 = vmatpush2.msra.mxu0 0.0
  %1036 = vmatprep.subr.mxu0 0.0
  %1037 = vmatpush2.msra.mxu0 0.0
  %1038 = vmatprep.subr.mxu0 0.0
  %1039 = vmatpush2.msra.mxu0 0.0
  %1040 = vmatprep.subr.mxu0 0.0
  %1041 = vmatpush2.msra.mxu0 0.0
  %1042 = vmatprep.subr.mxu0 0.0
  %1043 = vmatpush2.msra.mxu0 0.0
  %1044 = vmatprep.subr.mxu0 0.0
  %1045 = vmatpush2.msra.mxu0 0.0
  %1046 = vmatprep.subr.mxu0 0.0
  %1047 = vmatpush2.msra.mxu0 0.0
  %1048 = vmatprep.subr.mxu0 0.0
  %1049 = vmatpush2.msra.mxu0 0.0
  %1050 = vmatprep.mubr.f32.mxu0 0.0
  %1051 = vmatmul.mubr.f32.gmra.mxu0 %v984
  %v1052 = vpop.f32.mrf.mxu0
  %v1053 = vadd.f32 0.0, %v1052
  %v1054 = vpop.f32.mrf.mxu0
  %1055 = vdwg.mxu0
  %1056 = vrot.lane.b32.xlu0 %v266, 64
  %v1057 = vpop.permute.xlu0 %1056
  %v1060 = vsel %vm285, %v967, 0
  %1062 = vmatprep.subr.mxu0 0.0
  %1063 = vmatpush1.msra.mxu0 0.0
  %1064 = vmatprep.subr.mxu0 0.0
  %1065 = vmatpush1.msra.mxu0 0.0
  %1066 = vmatprep.subr.mxu0 0.0
  %1067 = vmatpush1.msra.mxu0 0.0
  %1068 = vmatprep.subr.mxu0 0.0
  %1069 = vmatpush1.msra.mxu0 0.0
  %1070 = vmatprep.subr.mxu0 0.0
  %1071 = vmatpush1.msra.mxu0 0.0
  %1072 = vmatprep.subr.mxu0 0.0
  %1073 = vmatpush1.msra.mxu0 0.0
  %1074 = vmatprep.subr.mxu0 0.0
  %1075 = vmatpush1.msra.mxu0 0.0
  %1076 = vmatprep.subr.mxu0 0.0
  %1077 = vmatpush1.msra.mxu0 0.0
  %1078 = vmatprep.subr.mxu0 0.0
  %1079 = vmatpush1.msra.mxu0 0.0
  %1080 = vmatprep.subr.mxu0 0.0
  %1081 = vmatpush1.msra.mxu0 0.0
  %1082 = vmatprep.subr.mxu0 0.0
  %1083 = vmatpush1.msra.mxu0 0.0
  %1084 = vmatprep.subr.mxu0 0.0
  %1085 = vmatpush1.msra.mxu0 0.0
  %1086 = vmatprep.subr.mxu0 0.0
  %1087 = vmatpush1.msra.mxu0 0.0
  %1088 = vmatprep.subr.mxu0 0.0
  %1089 = vmatpush1.msra.mxu0 0.0
  %1090 = vmatprep.subr.mxu0 0.0
  %1091 = vmatpush1.msra.mxu0 0.0
  %1092 = vmatprep.subr.mxu0 0.0
  %1093 = vmatpush1.msra.mxu0 %v1057
  %1094 = vmatprep.subr.mxu0 0.0
  %1095 = vmatpush2.msra.mxu0 0.0
  %1096 = vmatprep.subr.mxu0 0.0
  %1097 = vmatpush2.msra.mxu0 0.0
  %1098 = vmatprep.subr.mxu0 0.0
  %1099 = vmatpush2.msra.mxu0 0.0
  %1100 = vmatprep.subr.mxu0 0.0
  %1101 = vmatpush2.msra.mxu0 0.0
  %1102 = vmatprep.subr.mxu0 0.0
  %1103 = vmatpush2.msra.mxu0 0.0
  %1104 = vmatprep.subr.mxu0 0.0
  %1105 = vmatpush2.msra.mxu0 0.0
  %1106 = vmatprep.subr.mxu0 0.0
  %1107 = vmatpush2.msra.mxu0 0.0
  %1108 = vmatprep.subr.mxu0 0.0
  %1109 = vmatpush2.msra.mxu0 0.0
  %1110 = vmatprep.subr.mxu0 0.0
  %1111 = vmatpush2.msra.mxu0 0.0
  %1112 = vmatprep.subr.mxu0 0.0
  %1113 = vmatpush2.msra.mxu0 0.0
  %1114 = vmatprep.subr.mxu0 0.0
  %1115 = vmatpush2.msra.mxu0 0.0
  %1116 = vmatprep.subr.mxu0 0.0
  %1117 = vmatpush2.msra.mxu0 0.0
  %1118 = vmatprep.subr.mxu0 0.0
  %1119 = vmatpush2.msra.mxu0 0.0
  %1120 = vmatprep.subr.mxu0 0.0
  %1121 = vmatpush2.msra.mxu0 0.0
  %1122 = vmatprep.subr.mxu0 0.0
  %1123 = vmatpush2.msra.mxu0 0.0
  %1124 = vmatprep.subr.mxu0 0.0
  %1125 = vmatpush2.msra.mxu0 0.0
  %1126 = vmatprep.mubr.f32.mxu0 0.0
  %1127 = vmatmul.mubr.f32.gmra.mxu0 %v1060
  %v1128 = vpop.f32.mrf.mxu0
  %v1129 = vadd.f32 0.0, %v1128
  %v1130 = vpop.f32.mrf.mxu0
  %1131 = vdwg.mxu0
  %1132 = vrot.lane.b32.xlu0 %v272, 64
  %v1133 = vpop.permute.xlu0 %1132
  %v1136 = vsel %vm285, %v969, 0
  %1138 = vmatprep.subr.mxu0 0.0
  %1139 = vmatpush1.msra.mxu0 0.0
  %1140 = vmatprep.subr.mxu0 0.0
  %1141 = vmatpush1.msra.mxu0 0.0
  %1142 = vmatprep.subr.mxu0 0.0
  %1143 = vmatpush1.msra.mxu0 0.0
  %1144 = vmatprep.subr.mxu0 0.0
  %1145 = vmatpush1.msra.mxu0 0.0
  %1146 = vmatprep.subr.mxu0 0.0
  %1147 = vmatpush1.msra.mxu0 0.0
  %1148 = vmatprep.subr.mxu0 0.0
  %1149 = vmatpush1.msra.mxu0 0.0
  %1150 = vmatprep.subr.mxu0 0.0
  %1151 = vmatpush1.msra.mxu0 0.0
  %1152 = vmatprep.subr.mxu0 0.0
  %1153 = vmatpush1.msra.mxu0 0.0
  %1154 = vmatprep.subr.mxu0 0.0
  %1155 = vmatpush1.msra.mxu0 0.0
  %1156 = vmatprep.subr.mxu0 0.0
  %1157 = vmatpush1.msra.mxu0 0.0
  %1158 = vmatprep.subr.mxu0 0.0
  %1159 = vmatpush1.msra.mxu0 0.0
  %1160 = vmatprep.subr.mxu0 0.0
  %1161 = vmatpush1.msra.mxu0 0.0
  %1162 = vmatprep.subr.mxu0 0.0
  %1163 = vmatpush1.msra.mxu0 0.0
  %1164 = vmatprep.subr.mxu0 0.0
  %1165 = vmatpush1.msra.mxu0 0.0
  %1166 = vmatprep.subr.mxu0 0.0
  %1167 = vmatpush1.msra.mxu0 0.0
  %1168 = vmatprep.subr.mxu0 0.0
  %1169 = vmatpush1.msra.mxu0 %v1133
  %1170 = vmatprep.subr.mxu0 0.0
  %1171 = vmatpush2.msra.mxu0 0.0
  %1172 = vmatprep.subr.mxu0 0.0
  %1173 = vmatpush2.msra.mxu0 0.0
  %1174 = vmatprep.subr.mxu0 0.0
  %1175 = vmatpush2.msra.mxu0 0.0
  %1176 = vmatprep.subr.mxu0 0.0
  %1177 = vmatpush2.msra.mxu0 0.0
  %1178 = vmatprep.subr.mxu0 0.0
  %1179 = vmatpush2.msra.mxu0 0.0
  %1180 = vmatprep.subr.mxu0 0.0
  %1181 = vmatpush2.msra.mxu0 0.0
  %1182 = vmatprep.subr.mxu0 0.0
  %1183 = vmatpush2.msra.mxu0 0.0
  %1184 = vmatprep.subr.mxu0 0.0
  %1185 = vmatpush2.msra.mxu0 0.0
  %1186 = vmatprep.subr.mxu0 0.0
  %1187 = vmatpush2.msra.mxu0 0.0
  %1188 = vmatprep.subr.mxu0 0.0
  %1189 = vmatpush2.msra.mxu0 0.0
  %1190 = vmatprep.subr.mxu0 0.0
  %1191 = vmatpush2.msra.mxu0 0.0
  %1192 = vmatprep.subr.mxu0 0.0
  %1193 = vmatpush2.msra.mxu0 0.0
  %1194 = vmatprep.subr.mxu0 0.0
  %1195 = vmatpush2.msra.mxu0 0.0
  %1196 = vmatprep.subr.mxu0 0.0
  %1197 = vmatpush2.msra.mxu0 0.0
  %1198 = vmatprep.subr.mxu0 0.0
  %1199 = vmatpush2.msra.mxu0 0.0
  %1200 = vmatprep.subr.mxu0 0.0
  %1201 = vmatpush2.msra.mxu0 0.0
  %1202 = vmatprep.mubr.f32.mxu0 0.0
  %1203 = vmatmul.mubr.f32.gmra.mxu0 %v1136
  %v1204 = vpop.f32.mrf.mxu0
  %v1205 = vadd.f32 0.0, %v1204
  %v1206 = vpop.f32.mrf.mxu0
  %1207 = vdwg.mxu0
  %1208 = vrot.lane.b32.xlu0 %v274, 64
  %v1209 = vpop.permute.xlu0 %1208
  %v1212 = vsel %vm285, %v971, 0
  %1214 = vmatprep.subr.mxu0 0.0
  %1215 = vmatpush1.msra.mxu0 0.0
  %1216 = vmatprep.subr.mxu0 0.0
  %1217 = vmatpush1.msra.mxu0 0.0
  %1218 = vmatprep.subr.mxu0 0.0
  %1219 = vmatpush1.msra.mxu0 0.0
  %1220 = vmatprep.subr.mxu0 0.0
  %1221 = vmatpush1.msra.mxu0 0.0
  %1222 = vmatprep.subr.mxu0 0.0
  %1223 = vmatpush1.msra.mxu0 0.0
  %1224 = vmatprep.subr.mxu0 0.0
  %1225 = vmatpush1.msra.mxu0 0.0
  %1226 = vmatprep.subr.mxu0 0.0
  %1227 = vmatpush1.msra.mxu0 0.0
  %1228 = vmatprep.subr.mxu0 0.0
  %1229 = vmatpush1.msra.mxu0 0.0
  %1230 = vmatprep.subr.mxu0 0.0
  %1231 = vmatpush1.msra.mxu0 0.0
  %1232 = vmatprep.subr.mxu0 0.0
  %1233 = vmatpush1.msra.mxu0 0.0
  %1234 = vmatprep.subr.mxu0 0.0
  %1235 = vmatpush1.msra.mxu0 0.0
  %1236 = vmatprep.subr.mxu0 0.0
  %1237 = vmatpush1.msra.mxu0 0.0
  %1238 = vmatprep.subr.mxu0 0.0
  %1239 = vmatpush1.msra.mxu0 0.0
  %1240 = vmatprep.subr.mxu0 0.0
  %1241 = vmatpush1.msra.mxu0 0.0
  %1242 = vmatprep.subr.mxu0 0.0
  %1243 = vmatpush1.msra.mxu0 0.0
  %1244 = vmatprep.subr.mxu0 0.0
  %1245 = vmatpush1.msra.mxu0 %v1209
  %1246 = vmatprep.subr.mxu0 0.0
  %1247 = vmatpush2.msra.mxu0 0.0
  %1248 = vmatprep.subr.mxu0 0.0
  %1249 = vmatpush2.msra.mxu0 0.0
  %1250 = vmatprep.subr.mxu0 0.0
  %1251 = vmatpush2.msra.mxu0 0.0
  %1252 = vmatprep.subr.mxu0 0.0
  %1253 = vmatpush2.msra.mxu0 0.0
  %1254 = vmatprep.subr.mxu0 0.0
  %1255 = vmatpush2.msra.mxu0 0.0
  %1256 = vmatprep.subr.mxu0 0.0
  %1257 = vmatpush2.msra.mxu0 0.0
  %1258 = vmatprep.subr.mxu0 0.0
  %1259 = vmatpush2.msra.mxu0 0.0
  %1260 = vmatprep.subr.mxu0 0.0
  %1261 = vmatpush2.msra.mxu0 0.0
  %1262 = vmatprep.subr.mxu0 0.0
  %1263 = vmatpush2.msra.mxu0 0.0
  %1264 = vmatprep.subr.mxu0 0.0
  %1265 = vmatpush2.msra.mxu0 0.0
  %1266 = vmatprep.subr.mxu0 0.0
  %1267 = vmatpush2.msra.mxu0 0.0
  %1268 = vmatprep.subr.mxu0 0.0
  %1269 = vmatpush2.msra.mxu0 0.0
  %1270 = vmatprep.subr.mxu0 0.0
  %1271 = vmatpush2.msra.mxu0 0.0
  %1272 = vmatprep.subr.mxu0 0.0
  %1273 = vmatpush2.msra.mxu0 0.0
  %1274 = vmatprep.subr.mxu0 0.0
  %1275 = vmatpush2.msra.mxu0 0.0
  %1276 = vmatprep.subr.mxu0 0.0
  %1277 = vmatpush2.msra.mxu0 0.0
  %1278 = vmatprep.mubr.f32.mxu0 0.0
  %1279 = vmatmul.mubr.f32.gmra.mxu0 %v1212
  %v1280 = vpop.f32.mrf.mxu0
  %v1281 = vadd.f32 0.0, %v1280
  %v1282 = vpop.f32.mrf.mxu0
  %1283 = vdwg.mxu0
  %1284 = vrot.lane.b32.xlu0 %v276, 64
  %v1285 = vpop.permute.xlu0 %1284
  %v1288 = vsel %vm285, %v973, 0
  %1290 = vmatprep.subr.mxu0 0.0
  %1291 = vmatpush1.msra.mxu0 0.0
  %1292 = vmatprep.subr.mxu0 0.0
  %1293 = vmatpush1.msra.mxu0 0.0
  %1294 = vmatprep.subr.mxu0 0.0
  %1295 = vmatpush1.msra.mxu0 0.0
  %1296 = vmatprep.subr.mxu0 0.0
  %1297 = vmatpush1.msra.mxu0 0.0
  %1298 = vmatprep.subr.mxu0 0.0
  %1299 = vmatpush1.msra.mxu0 0.0
  %1300 = vmatprep.subr.mxu0 0.0
  %1301 = vmatpush1.msra.mxu0 0.0
  %1302 = vmatprep.subr.mxu0 0.0
  %1303 = vmatpush1.msra.mxu0 0.0
  %1304 = vmatprep.subr.mxu0 0.0
  %1305 = vmatpush1.msra.mxu0 0.0
  %1306 = vmatprep.subr.mxu0 0.0
  %1307 = vmatpush1.msra.mxu0 0.0
  %1308 = vmatprep.subr.mxu0 0.0
  %1309 = vmatpush1.msra.mxu0 0.0
  %1310 = vmatprep.subr.mxu0 0.0
  %1311 = vmatpush1.msra.mxu0 0.0
  %1312 = vmatprep.subr.mxu0 0.0
  %1313 = vmatpush1.msra.mxu0 0.0
  %1314 = vmatprep.subr.mxu0 0.0
  %1315 = vmatpush1.msra.mxu0 0.0
  %1316 = vmatprep.subr.mxu0 0.0
  %1317 = vmatpush1.msra.mxu0 0.0
  %1318 = vmatprep.subr.mxu0 0.0
  %1319 = vmatpush1.msra.mxu0 0.0
  %1320 = vmatprep.subr.mxu0 0.0
  %1321 = vmatpush1.msra.mxu0 %v1285
  %1322 = vmatprep.subr.mxu0 0.0
  %1323 = vmatpush2.msra.mxu0 0.0
  %1324 = vmatprep.subr.mxu0 0.0
  %1325 = vmatpush2.msra.mxu0 0.0
  %1326 = vmatprep.subr.mxu0 0.0
  %1327 = vmatpush2.msra.mxu0 0.0
  %1328 = vmatprep.subr.mxu0 0.0
  %1329 = vmatpush2.msra.mxu0 0.0
  %1330 = vmatprep.subr.mxu0 0.0
  %1331 = vmatpush2.msra.mxu0 0.0
  %1332 = vmatprep.subr.mxu0 0.0
  %1333 = vmatpush2.msra.mxu0 0.0
  %1334 = vmatprep.subr.mxu0 0.0
  %1335 = vmatpush2.msra.mxu0 0.0
  %1336 = vmatprep.subr.mxu0 0.0
  %1337 = vmatpush2.msra.mxu0 0.0
  %1338 = vmatprep.subr.mxu0 0.0
  %1339 = vmatpush2.msra.mxu0 0.0
  %1340 = vmatprep.subr.mxu0 0.0
  %1341 = vmatpush2.msra.mxu0 0.0
  %1342 = vmatprep.subr.mxu0 0.0
  %1343 = vmatpush2.msra.mxu0 0.0
  %1344 = vmatprep.subr.mxu0 0.0
  %1345 = vmatpush2.msra.mxu0 0.0
  %1346 = vmatprep.subr.mxu0 0.0
  %1347 = vmatpush2.msra.mxu0 0.0
  %1348 = vmatprep.subr.mxu0 0.0
  %1349 = vmatpush2.msra.mxu0 0.0
  %1350 = vmatprep.subr.mxu0 0.0
  %1351 = vmatpush2.msra.mxu0 0.0
  %1352 = vmatprep.subr.mxu0 0.0
  %1353 = vmatpush2.msra.mxu0 0.0
  %1354 = vmatprep.mubr.f32.mxu0 0.0
  %1355 = vmatmul.mubr.f32.gmra.mxu0 %v1288
  %v1356 = vpop.f32.mrf.mxu0
  %v1357 = vadd.f32 0.0, %v1356
  %v1358 = vpop.f32.mrf.mxu0
  %1359 = vdwg.mxu0
  %1360 = vrot.lane.b32.xlu0 %v278, 64
  %v1361 = vpop.permute.xlu0 %1360
  %v1364 = vsel %vm285, %v975, 0
  %1366 = vmatprep.subr.mxu0 0.0
  %1367 = vmatpush1.msra.mxu0 0.0
  %1368 = vmatprep.subr.mxu0 0.0
  %1369 = vmatpush1.msra.mxu0 0.0
  %1370 = vmatprep.subr.mxu0 0.0
  %1371 = vmatpush1.msra.mxu0 0.0
  %1372 = vmatprep.subr.mxu0 0.0
  %1373 = vmatpush1.msra.mxu0 0.0
  %1374 = vmatprep.subr.mxu0 0.0
  %1375 = vmatpush1.msra.mxu0 0.0
  %1376 = vmatprep.subr.mxu0 0.0
  %1377 = vmatpush1.msra.mxu0 0.0
  %1378 = vmatprep.subr.mxu0 0.0
  %1379 = vmatpush1.msra.mxu0 0.0
  %1380 = vmatprep.subr.mxu0 0.0
  %1381 = vmatpush1.msra.mxu0 0.0
  %1382 = vmatprep.subr.mxu0 0.0
  %1383 = vmatpush1.msra.mxu0 0.0
  %1384 = vmatprep.subr.mxu0 0.0
  %1385 = vmatpush1.msra.mxu0 0.0
  %1386 = vmatprep.subr.mxu0 0.0
  %1387 = vmatpush1.msra.mxu0 0.0
  %1388 = vmatprep.subr.mxu0 0.0
  %1389 = vmatpush1.msra.mxu0 0.0
  %1390 = vmatprep.subr.mxu0 0.0
  %1391 = vmatpush1.msra.mxu0 0.0
  %1392 = vmatprep.subr.mxu0 0.0
  %1393 = vmatpush1.msra.mxu0 0.0
  %1394 = vmatprep.subr.mxu0 0.0
  %1395 = vmatpush1.msra.mxu0 0.0
  %1396 = vmatprep.subr.mxu0 0.0
  %1397 = vmatpush1.msra.mxu0 %v1361
  %1398 = vmatprep.subr.mxu0 0.0
  %1399 = vmatpush2.msra.mxu0 0.0
  %1400 = vmatprep.subr.mxu0 0.0
  %1401 = vmatpush2.msra.mxu0 0.0
  %1402 = vmatprep.subr.mxu0 0.0
  %1403 = vmatpush2.msra.mxu0 0.0
  %1404 = vmatprep.subr.mxu0 0.0
  %1405 = vmatpush2.msra.mxu0 0.0
  %1406 = vmatprep.subr.mxu0 0.0
  %1407 = vmatpush2.msra.mxu0 0.0
  %1408 = vmatprep.subr.mxu0 0.0
  %1409 = vmatpush2.msra.mxu0 0.0
  %1410 = vmatprep.subr.mxu0 0.0
  %1411 = vmatpush2.msra.mxu0 0.0
  %1412 = vmatprep.subr.mxu0 0.0
  %1413 = vmatpush2.msra.mxu0 0.0
  %1414 = vmatprep.subr.mxu0 0.0
  %1415 = vmatpush2.msra.mxu0 0.0
  %1416 = vmatprep.subr.mxu0 0.0
  %1417 = vmatpush2.msra.mxu0 0.0
  %1418 = vmatprep.subr.mxu0 0.0
  %1419 = vmatpush2.msra.mxu0 0.0
  %1420 = vmatprep.subr.mxu0 0.0
  %1421 = vmatpush2.msra.mxu0 0.0
  %1422 = vmatprep.subr.mxu0 0.0
  %1423 = vmatpush2.msra.mxu0 0.0
  %1424 = vmatprep.subr.mxu0 0.0
  %1425 = vmatpush2.msra.mxu0 0.0
  %1426 = vmatprep.subr.mxu0 0.0
  %1427 = vmatpush2.msra.mxu0 0.0
  %1428 = vmatprep.subr.mxu0 0.0
  %1429 = vmatpush2.msra.mxu0 0.0
  %1430 = vmatprep.mubr.f32.mxu0 0.0
  %1431 = vmatmul.mubr.f32.gmra.mxu0 %v1364
  %v1432 = vpop.f32.mrf.mxu0
  %v1433 = vadd.f32 0.0, %v1432
  %v1434 = vpop.f32.mrf.mxu0
  %1435 = vdwg.mxu0
  %1436 = vrot.lane.b32.xlu0 %v280, 64
  %v1437 = vpop.permute.xlu0 %1436
  %v1440 = vsel %vm285, %v977, 0
  %1442 = vmatprep.subr.mxu0 0.0
  %1443 = vmatpush1.msra.mxu0 0.0
  %1444 = vmatprep.subr.mxu0 0.0
  %1445 = vmatpush1.msra.mxu0 0.0
  %1446 = vmatprep.subr.mxu0 0.0
  %1447 = vmatpush1.msra.mxu0 0.0
  %1448 = vmatprep.subr.mxu0 0.0
  %1449 = vmatpush1.msra.mxu0 0.0
  %1450 = vmatprep.subr.mxu0 0.0
  %1451 = vmatpush1.msra.mxu0 0.0
  %1452 = vmatprep.subr.mxu0 0.0
  %1453 = vmatpush1.msra.mxu0 0.0
  %1454 = vmatprep.subr.mxu0 0.0
  %1455 = vmatpush1.msra.mxu0 0.0
  %1456 = vmatprep.subr.mxu0 0.0
  %1457 = vmatpush1.msra.mxu0 0.0
  %1458 = vmatprep.subr.mxu0 0.0
  %1459 = vmatpush1.msra.mxu0 0.0
  %1460 = vmatprep.subr.mxu0 0.0
  %1461 = vmatpush1.msra.mxu0 0.0
  %1462 = vmatprep.subr.mxu0 0.0
  %1463 = vmatpush1.msra.mxu0 0.0
  %1464 = vmatprep.subr.mxu0 0.0
  %1465 = vmatpush1.msra.mxu0 0.0
  %1466 = vmatprep.subr.mxu0 0.0
  %1467 = vmatpush1.msra.mxu0 0.0
  %1468 = vmatprep.subr.mxu0 0.0
  %1469 = vmatpush1.msra.mxu0 0.0
  %1470 = vmatprep.subr.mxu0 0.0
  %1471 = vmatpush1.msra.mxu0 0.0
  %1472 = vmatprep.subr.mxu0 0.0
  %1473 = vmatpush1.msra.mxu0 %v1437
  %1474 = vmatprep.subr.mxu0 0.0
  %1475 = vmatpush2.msra.mxu0 0.0
  %1476 = vmatprep.subr.mxu0 0.0
  %1477 = vmatpush2.msra.mxu0 0.0
  %1478 = vmatprep.subr.mxu0 0.0
  %1479 = vmatpush2.msra.mxu0 0.0
  %1480 = vmatprep.subr.mxu0 0.0
  %1481 = vmatpush2.msra.mxu0 0.0
  %1482 = vmatprep.subr.mxu0 0.0
  %1483 = vmatpush2.msra.mxu0 0.0
  %1484 = vmatprep.subr.mxu0 0.0
  %1485 = vmatpush2.msra.mxu0 0.0
  %1486 = vmatprep.subr.mxu0 0.0
  %1487 = vmatpush2.msra.mxu0 0.0
  %1488 = vmatprep.subr.mxu0 0.0
  %1489 = vmatpush2.msra.mxu0 0.0
  %1490 = vmatprep.subr.mxu0 0.0
  %1491 = vmatpush2.msra.mxu0 0.0
  %1492 = vmatprep.subr.mxu0 0.0
  %1493 = vmatpush2.msra.mxu0 0.0
  %1494 = vmatprep.subr.mxu0 0.0
  %1495 = vmatpush2.msra.mxu0 0.0
  %1496 = vmatprep.subr.mxu0 0.0
  %1497 = vmatpush2.msra.mxu0 0.0
  %1498 = vmatprep.subr.mxu0 0.0
  %1499 = vmatpush2.msra.mxu0 0.0
  %1500 = vmatprep.subr.mxu0 0.0
  %1501 = vmatpush2.msra.mxu0 0.0
  %1502 = vmatprep.subr.mxu0 0.0
  %1503 = vmatpush2.msra.mxu0 0.0
  %1504 = vmatprep.subr.mxu0 0.0
  %1505 = vmatpush2.msra.mxu0 0.0
  %1506 = vmatprep.mubr.f32.mxu0 0.0
  %1507 = vmatmul.mubr.f32.gmra.mxu0 %v1440
  %v1508 = vpop.f32.mrf.mxu0
  %v1509 = vadd.f32 0.0, %v1508
  %v1510 = vpop.f32.mrf.mxu0
  %1511 = vdwg.mxu0
  %1512 = vrot.lane.b32.xlu0 %v282, 64
  %v1513 = vpop.permute.xlu0 %1512
  %v1516 = vsel %vm285, %v979, 0
  %1518 = vmatprep.subr.mxu0 0.0
  %1519 = vmatpush1.msra.mxu0 0.0
  %1520 = vmatprep.subr.mxu0 0.0
  %1521 = vmatpush1.msra.mxu0 0.0
  %1522 = vmatprep.subr.mxu0 0.0
  %1523 = vmatpush1.msra.mxu0 0.0
  %1524 = vmatprep.subr.mxu0 0.0
  %1525 = vmatpush1.msra.mxu0 0.0
  %1526 = vmatprep.subr.mxu0 0.0
  %1527 = vmatpush1.msra.mxu0 0.0
  %1528 = vmatprep.subr.mxu0 0.0
  %1529 = vmatpush1.msra.mxu0 0.0
  %1530 = vmatprep.subr.mxu0 0.0
  %1531 = vmatpush1.msra.mxu0 0.0
  %1532 = vmatprep.subr.mxu0 0.0
  %1533 = vmatpush1.msra.mxu0 0.0
  %1534 = vmatprep.subr.mxu0 0.0
  %1535 = vmatpush1.msra.mxu0 0.0
  %1536 = vmatprep.subr.mxu0 0.0
  %1537 = vmatpush1.msra.mxu0 0.0
  %1538 = vmatprep.subr.mxu0 0.0
  %1539 = vmatpush1.msra.mxu0 0.0
  %1540 = vmatprep.subr.mxu0 0.0
  %1541 = vmatpush1.msra.mxu0 0.0
  %1542 = vmatprep.subr.mxu0 0.0
  %1543 = vmatpush1.msra.mxu0 0.0
  %1544 = vmatprep.subr.mxu0 0.0
  %1545 = vmatpush1.msra.mxu0 0.0
  %1546 = vmatprep.subr.mxu0 0.0
  %1547 = vmatpush1.msra.mxu0 0.0
  %1548 = vmatprep.subr.mxu0 0.0
  %1549 = vmatpush1.msra.mxu0 %v1513
  %1550 = vmatprep.subr.mxu0 0.0
  %1551 = vmatpush2.msra.mxu0 0.0
  %1552 = vmatprep.subr.mxu0 0.0
  %1553 = vmatpush2.msra.mxu0 0.0
  %1554 = vmatprep.subr.mxu0 0.0
  %1555 = vmatpush2.msra.mxu0 0.0
  %1556 = vmatprep.subr.mxu0 0.0
  %1557 = vmatpush2.msra.mxu0 0.0
  %1558 = vmatprep.subr.mxu0 0.0
  %1559 = vmatpush2.msra.mxu0 0.0
  %1560 = vmatprep.subr.mxu0 0.0
  %1561 = vmatpush2.msra.mxu0 0.0
  %1562 = vmatprep.subr.mxu0 0.0
  %1563 = vmatpush2.msra.mxu0 0.0
  %1564 = vmatprep.subr.mxu0 0.0
  %1565 = vmatpush2.msra.mxu0 0.0
  %1566 = vmatprep.subr.mxu0 0.0
  %1567 = vmatpush2.msra.mxu0 0.0
  %1568 = vmatprep.subr.mxu0 0.0
  %1569 = vmatpush2.msra.mxu0 0.0
  %1570 = vmatprep.subr.mxu0 0.0
  %1571 = vmatpush2.msra.mxu0 0.0
  %1572 = vmatprep.subr.mxu0 0.0
  %1573 = vmatpush2.msra.mxu0 0.0
  %1574 = vmatprep.subr.mxu0 0.0
  %1575 = vmatpush2.msra.mxu0 0.0
  %1576 = vmatprep.subr.mxu0 0.0
  %1577 = vmatpush2.msra.mxu0 0.0
  %1578 = vmatprep.subr.mxu0 0.0
  %1579 = vmatpush2.msra.mxu0 0.0
  %1580 = vmatprep.subr.mxu0 0.0
  %1581 = vmatpush2.msra.mxu0 0.0
  %1582 = vmatprep.mubr.f32.mxu0 0.0
  %1583 = vmatmul.mubr.f32.gmra.mxu0 %v1516
  %v1584 = vpop.f32.mrf.mxu0
  %v1585 = vadd.f32 0.0, %v1584
  %v1586 = vpop.f32.mrf.mxu0
  %1587 = vdwg.mxu0
  %v1588 = vld [vmem:[%s3] sm:$0xff]
  %v1589 = vld [vmem:[%s3 + $0x8] sm:$0xff]
  %v1591 = vsel %vm285, %v1205, 0
  %v1594 = vsel %vm285, %v1281, 0
  %1596 = vmatprep.subr.mxu0 0.0
  %1597 = vmatpush1.msra.mxu0 0.0
  %1598 = vmatprep.subr.mxu0 0.0
  %1599 = vmatpush1.msra.mxu0 0.0
  %1600 = vmatprep.subr.mxu0 0.0
  %1601 = vmatpush1.msra.mxu0 0.0
  %1602 = vmatprep.subr.mxu0 0.0
  %1603 = vmatpush1.msra.mxu0 0.0
  %1604 = vmatprep.subr.mxu0 0.0
  %1605 = vmatpush1.msra.mxu0 0.0
  %1606 = vmatprep.subr.mxu0 0.0
  %1607 = vmatpush1.msra.mxu0 0.0
  %1608 = vmatprep.subr.mxu0 0.0
  %1609 = vmatpush1.msra.mxu0 0.0
  %1610 = vmatprep.subr.mxu0 0.0
  %1611 = vmatpush1.msra.mxu0 0.0
  %1612 = vmatprep.subr.mxu0 0.0
  %1613 = vmatpush1.msra.mxu0 0.0
  %1614 = vmatprep.subr.mxu0 0.0
  %1615 = vmatpush1.msra.mxu0 0.0
  %1616 = vmatprep.subr.mxu0 0.0
  %1617 = vmatpush1.msra.mxu0 0.0
  %1618 = vmatprep.subr.mxu0 0.0
  %1619 = vmatpush1.msra.mxu0 0.0
  %1620 = vmatprep.subr.mxu0 0.0
  %1621 = vmatpush1.msra.mxu0 0.0
  %1622 = vmatprep.subr.mxu0 0.0
  %1623 = vmatpush1.msra.mxu0 0.0
  %1624 = vmatprep.subr.mxu0 0.0
  %1625 = vmatpush1.msra.mxu0 0.0
  %1626 = vmatprep.subr.mxu0 0.0
  %1627 = vmatpush1.msra.mxu0 %v1589
  %1628 = vmatprep.subr.mxu0 0.0
  %1629 = vmatpush2.msra.mxu0 0.0
  %1630 = vmatprep.subr.mxu0 0.0
  %1631 = vmatpush2.msra.mxu0 0.0
  %1632 = vmatprep.subr.mxu0 0.0
  %1633 = vmatpush2.msra.mxu0 0.0
  %1634 = vmatprep.subr.mxu0 0.0
  %1635 = vmatpush2.msra.mxu0 0.0
  %1636 = vmatprep.subr.mxu0 0.0
  %1637 = vmatpush2.msra.mxu0 0.0
  %1638 = vmatprep.subr.mxu0 0.0
  %1639 = vmatpush2.msra.mxu0 0.0
  %1640 = vmatprep.subr.mxu0 0.0
  %1641 = vmatpush2.msra.mxu0 0.0
  %1642 = vmatprep.subr.mxu0 0.0
  %1643 = vmatpush2.msra.mxu0 0.0
  %1644 = vmatprep.subr.mxu0 0.0
  %1645 = vmatpush2.msra.mxu0 0.0
  %1646 = vmatprep.subr.mxu0 0.0
  %1647 = vmatpush2.msra.mxu0 0.0
  %1648 = vmatprep.subr.mxu0 0.0
  %1649 = vmatpush2.msra.mxu0 0.0
  %1650 = vmatprep.subr.mxu0 0.0
  %1651 = vmatpush2.msra.mxu0 0.0
  %1652 = vmatprep.subr.mxu0 0.0
  %1653 = vmatpush2.msra.mxu0 0.0
  %1654 = vmatprep.subr.mxu0 0.0
  %1655 = vmatpush2.msra.mxu0 0.0
  %1656 = vmatprep.subr.mxu0 0.0
  %1657 = vmatpush2.msra.mxu0 0.0
  %1658 = vmatprep.subr.mxu0 0.0
  %1659 = vmatpush2.msra.mxu0 0.0
  %1660 = vmatprep.mubr.f32.mxu0 0.0
  %1661 = vmatmul.mubr.f32.gmra.mxu0 %v1591
  %v1662 = vpop.f32.mrf.mxu0
  %v1663 = vadd.f32 0.0, %v1662
  %v1664 = vpop.f32.mrf.mxu0
  %1665 = vmatprep.mubr.f32.mxu0 0.0
  %1666 = vmatmul.mubr.f32.gmra.mxu0 %v1594
  %v1667 = vpop.f32.mrf.mxu0
  %v1668 = vadd.f32 0.0, %v1667
  %v1669 = vpop.f32.mrf.mxu0
  %1670 = vdwg.mxu0
  %v1672 = vsel %vm285, %v1053, 0
  %v1675 = vsel %vm285, %v1129, 0
  %1677 = vmatprep.subr.mxu0 0.0
  %1678 = vmatpush1.msra.mxu0 0.0
  %1679 = vmatprep.subr.mxu0 0.0
  %1680 = vmatpush1.msra.mxu0 0.0
  %1681 = vmatprep.subr.mxu0 0.0
  %1682 = vmatpush1.msra.mxu0 0.0
  %1683 = vmatprep.subr.mxu0 0.0
  %1684 = vmatpush1.msra.mxu0 0.0
  %1685 = vmatprep.subr.mxu0 0.0
  %1686 = vmatpush1.msra.mxu0 0.0
  %1687 = vmatprep.subr.mxu0 0.0
  %1688 = vmatpush1.msra.mxu0 0.0
  %1689 = vmatprep.subr.mxu0 0.0
  %1690 = vmatpush1.msra.mxu0 0.0
  %1691 = vmatprep.subr.mxu0 0.0
  %1692 = vmatpush1.msra.mxu0 0.0
  %1693 = vmatprep.subr.mxu0 0.0
  %1694 = vmatpush1.msra.mxu0 0.0
  %1695 = vmatprep.subr.mxu0 0.0
  %1696 = vmatpush1.msra.mxu0 0.0
  %1697 = vmatprep.subr.mxu0 0.0
  %1698 = vmatpush1.msra.mxu0 0.0
  %1699 = vmatprep.subr.mxu0 0.0
  %1700 = vmatpush1.msra.mxu0 0.0
  %1701 = vmatprep.subr.mxu0 0.0
  %1702 = vmatpush1.msra.mxu0 0.0
  %1703 = vmatprep.subr.mxu0 0.0
  %1704 = vmatpush1.msra.mxu0 0.0
  %1705 = vmatprep.subr.mxu0 0.0
  %1706 = vmatpush1.msra.mxu0 0.0
  %1707 = vmatprep.subr.mxu0 0.0
  %1708 = vmatpush1.msra.mxu0 %v1588
  %1709 = vmatprep.subr.mxu0 0.0
  %1710 = vmatpush2.msra.mxu0 0.0
  %1711 = vmatprep.subr.mxu0 0.0
  %1712 = vmatpush2.msra.mxu0 0.0
  %1713 = vmatprep.subr.mxu0 0.0
  %1714 = vmatpush2.msra.mxu0 0.0
  %1715 = vmatprep.subr.mxu0 0.0
  %1716 = vmatpush2.msra.mxu0 0.0
  %1717 = vmatprep.subr.mxu0 0.0
  %1718 = vmatpush2.msra.mxu0 0.0
  %1719 = vmatprep.subr.mxu0 0.0
  %1720 = vmatpush2.msra.mxu0 0.0
  %1721 = vmatprep.subr.mxu0 0.0
  %1722 = vmatpush2.msra.mxu0 0.0
  %1723 = vmatprep.subr.mxu0 0.0
  %1724 = vmatpush2.msra.mxu0 0.0
  %1725 = vmatprep.subr.mxu0 0.0
  %1726 = vmatpush2.msra.mxu0 0.0
  %1727 = vmatprep.subr.mxu0 0.0
  %1728 = vmatpush2.msra.mxu0 0.0
  %1729 = vmatprep.subr.mxu0 0.0
  %1730 = vmatpush2.msra.mxu0 0.0
  %1731 = vmatprep.subr.mxu0 0.0
  %1732 = vmatpush2.msra.mxu0 0.0
  %1733 = vmatprep.subr.mxu0 0.0
  %1734 = vmatpush2.msra.mxu0 0.0
  %1735 = vmatprep.subr.mxu0 0.0
  %1736 = vmatpush2.msra.mxu0 0.0
  %1737 = vmatprep.subr.mxu0 0.0
  %1738 = vmatpush2.msra.mxu0 0.0
  %1739 = vmatprep.subr.mxu0 0.0
  %1740 = vmatpush2.msra.mxu0 0.0
  %1741 = vmatprep.mubr.f32.mxu0 0.0
  %1742 = vmatmul.mubr.f32.gmra.mxu0 %v1672
  %v1743 = vpop.f32.mrf.mxu0
  %v1744 = vadd.f32 %v1663, %v1743
  %v1745 = vpop.f32.mrf.mxu0
  %1746 = vmatprep.mubr.f32.mxu0 0.0
  %1747 = vmatmul.mubr.f32.gmra.mxu0 %v1675
  %v1748 = vpop.f32.mrf.mxu0
  %v1749 = vadd.f32 %v1668, %v1748
  %v1750 = vpop.f32.mrf.mxu0
  %1751 = vdwg.mxu0
  %v1752 = vld [vmem:[%s3 + $0x10] sm:$0xff]
  %v1754 = vsel %vm285, %v1357, 0
  %v1757 = vsel %vm285, %v1433, 0
  %1759 = vmatprep.subr.mxu0 0.0
  %1760 = vmatpush1.msra.mxu0 0.0
  %1761 = vmatprep.subr.mxu0 0.0
  %1762 = vmatpush1.msra.mxu0 0.0
  %1763 = vmatprep.subr.mxu0 0.0
  %1764 = vmatpush1.msra.mxu0 0.0
  %1765 = vmatprep.subr.mxu0 0.0
  %1766 = vmatpush1.msra.mxu0 0.0
  %1767 = vmatprep.subr.mxu0 0.0
  %1768 = vmatpush1.msra.mxu0 0.0
  %1769 = vmatprep.subr.mxu0 0.0
  %1770 = vmatpush1.msra.mxu0 0.0
  %1771 = vmatprep.subr.mxu0 0.0
  %1772 = vmatpush1.msra.mxu0 0.0
  %1773 = vmatprep.subr.mxu0 0.0
  %1774 = vmatpush1.msra.mxu0 0.0
  %1775 = vmatprep.subr.mxu0 0.0
  %1776 = vmatpush1.msra.mxu0 0.0
  %1777 = vmatprep.subr.mxu0 0.0
  %1778 = vmatpush1.msra.mxu0 0.0
  %1779 = vmatprep.subr.mxu0 0.0
  %1780 = vmatpush1.msra.mxu0 0.0
  %1781 = vmatprep.subr.mxu0 0.0
  %1782 = vmatpush1.msra.mxu0 0.0
  %1783 = vmatprep.subr.mxu0 0.0
  %1784 = vmatpush1.msra.mxu0 0.0
  %1785 = vmatprep.subr.mxu0 0.0
  %1786 = vmatpush1.msra.mxu0 0.0
  %1787 = vmatprep.subr.mxu0 0.0
  %1788 = vmatpush1.msra.mxu0 0.0
  %1789 = vmatprep.subr.mxu0 0.0
  %1790 = vmatpush1.msra.mxu0 %v1752
  %1791 = vmatprep.subr.mxu0 0.0
  %1792 = vmatpush2.msra.mxu0 0.0
  %1793 = vmatprep.subr.mxu0 0.0
  %1794 = vmatpush2.msra.mxu0 0.0
  %1795 = vmatprep.subr.mxu0 0.0
  %1796 = vmatpush2.msra.mxu0 0.0
  %1797 = vmatprep.subr.mxu0 0.0
  %1798 = vmatpush2.msra.mxu0 0.0
  %1799 = vmatprep.subr.mxu0 0.0
  %1800 = vmatpush2.msra.mxu0 0.0
  %1801 = vmatprep.subr.mxu0 0.0
  %1802 = vmatpush2.msra.mxu0 0.0
  %1803 = vmatprep.subr.mxu0 0.0
  %1804 = vmatpush2.msra.mxu0 0.0
  %1805 = vmatprep.subr.mxu0 0.0
  %1806 = vmatpush2.msra.mxu0 0.0
  %1807 = vmatprep.subr.mxu0 0.0
  %1808 = vmatpush2.msra.mxu0 0.0
  %1809 = vmatprep.subr.mxu0 0.0
  %1810 = vmatpush2.msra.mxu0 0.0
  %1811 = vmatprep.subr.mxu0 0.0
  %1812 = vmatpush2.msra.mxu0 0.0
  %1813 = vmatprep.subr.mxu0 0.0
  %1814 = vmatpush2.msra.mxu0 0.0
  %1815 = vmatprep.subr.mxu0 0.0
  %1816 = vmatpush2.msra.mxu0 0.0
  %1817 = vmatprep.subr.mxu0 0.0
  %1818 = vmatpush2.msra.mxu0 0.0
  %1819 = vmatprep.subr.mxu0 0.0
  %1820 = vmatpush2.msra.mxu0 0.0
  %1821 = vmatprep.subr.mxu0 0.0
  %1822 = vmatpush2.msra.mxu0 0.0
  %1823 = vmatprep.mubr.f32.mxu0 0.0
  %1824 = vmatmul.mubr.f32.gmra.mxu0 %v1754
  %v1825 = vpop.f32.mrf.mxu0
  %v1826 = vadd.f32 0.0, %v1825
  %v1827 = vpop.f32.mrf.mxu0
  %1828 = vmatprep.mubr.f32.mxu0 0.0
  %1829 = vmatmul.mubr.f32.gmra.mxu0 %v1757
  %v1830 = vpop.f32.mrf.mxu0
  %v1831 = vadd.f32 0.0, %v1830
  %v1832 = vpop.f32.mrf.mxu0
  %1833 = vdwg.mxu0
  %v1834 = vadd.f32 %v1744, %v1826
  %v1835 = vadd.f32 %v1749, %v1831
  %v1836 = vld [vmem:[%s3 + $0x18] sm:$0xff]
  %v1838 = vsel %vm285, %v1509, 0
  %v1841 = vsel %vm285, %v1585, 0
  %1843 = vmatprep.subr.mxu0 0.0
  %1844 = vmatpush1.msra.mxu0 0.0
  %1845 = vmatprep.subr.mxu0 0.0
  %1846 = vmatpush1.msra.mxu0 0.0
  %1847 = vmatprep.subr.mxu0 0.0
  %1848 = vmatpush1.msra.mxu0 0.0
  %1849 = vmatprep.subr.mxu0 0.0
  %1850 = vmatpush1.msra.mxu0 0.0
  %1851 = vmatprep.subr.mxu0 0.0
  %1852 = vmatpush1.msra.mxu0 0.0
  %1853 = vmatprep.subr.mxu0 0.0
  %1854 = vmatpush1.msra.mxu0 0.0
  %1855 = vmatprep.subr.mxu0 0.0
  %1856 = vmatpush1.msra.mxu0 0.0
  %1857 = vmatprep.subr.mxu0 0.0
  %1858 = vmatpush1.msra.mxu0 0.0
  %1859 = vmatprep.subr.mxu0 0.0
  %1860 = vmatpush1.msra.mxu0 0.0
  %1861 = vmatprep.subr.mxu0 0.0
  %1862 = vmatpush1.msra.mxu0 0.0
  %1863 = vmatprep.subr.mxu0 0.0
  %1864 = vmatpush1.msra.mxu0 0.0
  %1865 = vmatprep.subr.mxu0 0.0
  %1866 = vmatpush1.msra.mxu0 0.0
  %1867 = vmatprep.subr.mxu0 0.0
  %1868 = vmatpush1.msra.mxu0 0.0
  %1869 = vmatprep.subr.mxu0 0.0
  %1870 = vmatpush1.msra.mxu0 0.0
  %1871 = vmatprep.subr.mxu0 0.0
  %1872 = vmatpush1.msra.mxu0 0.0
  %1873 = vmatprep.subr.mxu0 0.0
  %1874 = vmatpush1.msra.mxu0 %v1836
  %1875 = vmatprep.subr.mxu0 0.0
  %1876 = vmatpush2.msra.mxu0 0.0
  %1877 = vmatprep.subr.mxu0 0.0
  %1878 = vmatpush2.msra.mxu0 0.0
  %1879 = vmatprep.subr.mxu0 0.0
  %1880 = vmatpush2.msra.mxu0 0.0
  %1881 = vmatprep.subr.mxu0 0.0
  %1882 = vmatpush2.msra.mxu0 0.0
  %1883 = vmatprep.subr.mxu0 0.0
  %1884 = vmatpush2.msra.mxu0 0.0
  %1885 = vmatprep.subr.mxu0 0.0
  %1886 = vmatpush2.msra.mxu0 0.0
  %1887 = vmatprep.subr.mxu0 0.0
  %1888 = vmatpush2.msra.mxu0 0.0
  %1889 = vmatprep.subr.mxu0 0.0
  %1890 = vmatpush2.msra.mxu0 0.0
  %1891 = vmatprep.subr.mxu0 0.0
  %1892 = vmatpush2.msra.mxu0 0.0
  %1893 = vmatprep.subr.mxu0 0.0
  %1894 = vmatpush2.msra.mxu0 0.0
  %1895 = vmatprep.subr.mxu0 0.0
  %1896 = vmatpush2.msra.mxu0 0.0
  %1897 = vmatprep.subr.mxu0 0.0
  %1898 = vmatpush2.msra.mxu0 0.0
  %1899 = vmatprep.subr.mxu0 0.0
  %1900 = vmatpush2.msra.mxu0 0.0
  %1901 = vmatprep.subr.mxu0 0.0
  %1902 = vmatpush2.msra.mxu0 0.0
  %1903 = vmatprep.subr.mxu0 0.0
  %1904 = vmatpush2.msra.mxu0 0.0
  %1905 = vmatprep.subr.mxu0 0.0
  %1906 = vmatpush2.msra.mxu0 0.0
  %1907 = vmatprep.mubr.f32.mxu0 0.0
  %1908 = vmatmul.mubr.f32.gmra.mxu0 %v1838
  %v1909 = vpop.f32.mrf.mxu0
  %v1910 = vadd.f32 0.0, %v1909
  %v1911 = vpop.f32.mrf.mxu0
  %1912 = vmatprep.mubr.f32.mxu0 0.0
  %1913 = vmatmul.mubr.f32.gmra.mxu0 %v1841
  %v1914 = vpop.f32.mrf.mxu0
  %v1915 = vadd.f32 0.0, %v1914
  %v1916 = vpop.f32.mrf.mxu0
  %1917 = vdwg.mxu0
  %v1918 = vadd.f32 %v1834, %v1910
  %v1919 = vadd.f32 %v1835, %v1915
  %v1920 = vlaneseq
  %v1921 = vshrl.u32 %v1920, 7
  %v1922 = vsub.s32 0, %v1921
  %v1923 = vrot.slane %v135, %v1922
  %v1924 = vadd.f32 %v1918, %v1923
  %v1925 = vadd.f32 %v1919, %v1923
  %v1926 = vadd.f32 %v1924, %v120
  %v1927 = vadd.f32 %v1925, %v125
  %v1928 = vsel %vm140, %v1926, 0.0
  %1929 = vadd.xlane.f32.xlu0 %v1928
  %v1930 = vpop.xlane.xlu0 %1929
  %v1931 = vsel %vm140, %v1927, 0.0
  %1932 = vadd.xlane.f32.xlu0 %v1931
  %v1933 = vpop.xlane.xlu0 %1932
  %v1934 = vmul.f32 %v1930, %v147
  %v1935 = vmul.f32 %v1933, %v147
  %v1936 = vsub.f32 %v1926, %v1934
  %v1937 = vsub.f32 %v1927, %v1935
  %v1938 = vmul.f32 %v1936, %v1936
  %v1939 = vmul.f32 %v1937, %v1937
  %v1940 = vsel %vm140, %v1938, 0.0
  %1941 = vadd.xlane.f32.xlu0 %v1940
  %v1942 = vpop.xlane.xlu0 %1941
  %v1943 = vsel %vm140, %v1939, 0.0
  %1944 = vadd.xlane.f32.xlu0 %v1943
  %v1945 = vpop.xlane.xlu0 %1944
  %v1946 = vmul.f32 %v1942, %v147
  %v1947 = vmul.f32 %v1945, %v147
  %v1948 = vadd.f32 %v1946, 1e-05
  %v1949 = vadd.f32 %v1947, 1e-05
  %v1950 = vrsqrt.pop %v1948
  %v1951 = vrsqrt.pop %v1949
  %v1952 = vmul.f32 %v1936, %v1950
  %v1953 = vmul.f32 %v1937, %v1951
  %v1954 = vlaneseq
  %v1955 = vshrl.u32 %v1954, 7
  %v1956 = vsub.s32 0, %v1955
  %v1957 = vrot.slane %v136, %v1956
  %v1958 = vmul.f32 %v1952, %v1957
  %v1959 = vmul.f32 %v1953, %v1957
  %v1960 = vlaneseq
  %v1961 = vshrl.u32 %v1960, 7
  %v1962 = vsub.s32 0, %v1961
  %v1963 = vrot.slane %v137, %v1962
  %v1964 = vadd.f32 %v1958, %v1963
  %v1965 = vadd.f32 %v1959, %v1963
  %v1966 = vld [vmem:[%s2 + $0x8] sm:$0xff]
  %v1967 = vld [vmem:[%s2 + $0x30] sm:$0xff]
  %v1968 = vld [vmem:[%s2 + $0x58] sm:$0xff]
  %v1969 = vld [vmem:[%s2 + $0x80] sm:$0xff]
  %v1970 = vlaneseq
  %v1971 = vshrl.u32 %v1970, 7
  %v1972 = vsub.s32 0, %v1971
  %v1973 = vrot.slane %v138, %v1972
  %v1975 = vsel %vm140, %v1964, 0
  %v1978 = vsel %vm140, %v1965, 0
  %1980 = vmatprep.subr.mxu0 0.0
  %1981 = vmatpush1.msra.mxu0 0.0
  %1982 = vmatprep.subr.mxu0 0.0
  %1983 = vmatpush1.msra.mxu0 0.0
  %1984 = vmatprep.subr.mxu0 0.0
  %1985 = vmatpush1.msra.mxu0 0.0
  %1986 = vmatprep.subr.mxu0 0.0
  %1987 = vmatpush1.msra.mxu0 0.0
  %1988 = vmatprep.subr.mxu0 0.0
  %1989 = vmatpush1.msra.mxu0 0.0
  %1990 = vmatprep.subr.mxu0 0.0
  %1991 = vmatpush1.msra.mxu0 0.0
  %1992 = vmatprep.subr.mxu0 0.0
  %1993 = vmatpush1.msra.mxu0 0.0
  %1994 = vmatprep.subr.mxu0 0.0
  %1995 = vmatpush1.msra.mxu0 0.0
  %1996 = vmatprep.subr.mxu0 0.0
  %1997 = vmatpush1.msra.mxu0 0.0
  %1998 = vmatprep.subr.mxu0 0.0
  %1999 = vmatpush1.msra.mxu0 0.0
  %2000 = vmatprep.subr.mxu0 0.0
  %2001 = vmatpush1.msra.mxu0 0.0
  %2002 = vmatprep.subr.mxu0 0.0
  %2003 = vmatpush1.msra.mxu0 0.0
  %2004 = vmatprep.subr.mxu0 0.0
  %2005 = vmatpush1.msra.mxu0 %v1969
  %2006 = vmatprep.subr.mxu0 0.0
  %2007 = vmatpush1.msra.mxu0 %v1968
  %2008 = vmatprep.subr.mxu0 0.0
  %2009 = vmatpush1.msra.mxu0 %v1967
  %2010 = vmatprep.subr.mxu0 0.0
  %2011 = vmatpush1.msra.mxu0 %v1966
  %2012 = vmatprep.subr.mxu0 0.0
  %2013 = vmatpush2.msra.mxu0 0.0
  %2014 = vmatprep.subr.mxu0 0.0
  %2015 = vmatpush2.msra.mxu0 0.0
  %2016 = vmatprep.subr.mxu0 0.0
  %2017 = vmatpush2.msra.mxu0 0.0
  %2018 = vmatprep.subr.mxu0 0.0
  %2019 = vmatpush2.msra.mxu0 0.0
  %2020 = vmatprep.subr.mxu0 0.0
  %2021 = vmatpush2.msra.mxu0 0.0
  %2022 = vmatprep.subr.mxu0 0.0
  %2023 = vmatpush2.msra.mxu0 0.0
  %2024 = vmatprep.subr.mxu0 0.0
  %2025 = vmatpush2.msra.mxu0 0.0
  %2026 = vmatprep.subr.mxu0 0.0
  %2027 = vmatpush2.msra.mxu0 0.0
  %2028 = vmatprep.subr.mxu0 0.0
  %2029 = vmatpush2.msra.mxu0 0.0
  %2030 = vmatprep.subr.mxu0 0.0
  %2031 = vmatpush2.msra.mxu0 0.0
  %2032 = vmatprep.subr.mxu0 0.0
  %2033 = vmatpush2.msra.mxu0 0.0
  %2034 = vmatprep.subr.mxu0 0.0
  %2035 = vmatpush2.msra.mxu0 0.0
  %2036 = vmatprep.subr.mxu0 0.0
  %2037 = vmatpush2.msra.mxu0 0.0
  %2038 = vmatprep.subr.mxu0 0.0
  %2039 = vmatpush2.msra.mxu0 0.0
  %2040 = vmatprep.subr.mxu0 0.0
  %2041 = vmatpush2.msra.mxu0 0.0
  %2042 = vmatprep.subr.mxu0 0.0
  %2043 = vmatpush2.msra.mxu0 0.0
  %2044 = vmatprep.mubr.f32.mxu0 0.0
  %2045 = vmatmul.mubr.f32.gmra.mxu0 %v1975
  %v2046 = vpop.f32.mrf.mxu0
  %v2047 = vadd.f32 %v1973, %v2046
  %v2048 = vpop.f32.mrf.mxu0
  %2049 = vmatprep.mubr.f32.mxu0 0.0
  %2050 = vmatmul.mubr.f32.gmra.mxu0 %v1978
  %v2051 = vpop.f32.mrf.mxu0
  %v2052 = vadd.f32 %v1973, %v2051
  %v2053 = vpop.f32.mrf.mxu0
  %2054 = vdwg.mxu0
  %v2055 = vmax.f32 %v2047, 0.0
  %v2056 = vmax.f32 %v2052, 0.0
  %v2057 = vld [vmem:[%s3 + $0x40] sm:$0xff]
  %v2058 = vld [vmem:[%s3 + $0x48] sm:$0xff]
  %v2059 = vld [vmem:[%s3 + $0x50] sm:$0xff]
  %v2060 = vld [vmem:[%s3 + $0x58] sm:$0xff]
  %v2061 = vld [vmem:[%s3 + $0x60] sm:$0xff]
  %v2062 = vld [vmem:[%s3 + $0x68] sm:$0xff]
  %v2063 = vld [vmem:[%s3 + $0x70] sm:$0xff]
  %v2064 = vld [vmem:[%s3 + $0x78] sm:$0xff]
  %v2065 = vlaneseq
  %v2066 = vshrl.u32 %v2065, 7
  %v2067 = vsub.s32 0, %v2066
  %v2068 = vrot.slane %v139, %v2067
  %v2070 = vsel %vm46, %v2055, 0
  %v2073 = vsel %vm46, %v2056, 0
  %2075 = vmatprep.subr.mxu0 0.0
  %2076 = vmatpush1.msra.mxu0 0.0
  %2077 = vmatprep.subr.mxu0 0.0
  %2078 = vmatpush1.msra.mxu0 0.0
  %2079 = vmatprep.subr.mxu0 0.0
  %2080 = vmatpush1.msra.mxu0 0.0
  %2081 = vmatprep.subr.mxu0 0.0
  %2082 = vmatpush1.msra.mxu0 0.0
  %2083 = vmatprep.subr.mxu0 0.0
  %2084 = vmatpush1.msra.mxu0 0.0
  %2085 = vmatprep.subr.mxu0 0.0
  %2086 = vmatpush1.msra.mxu0 0.0
  %2087 = vmatprep.subr.mxu0 0.0
  %2088 = vmatpush1.msra.mxu0 0.0
  %2089 = vmatprep.subr.mxu0 0.0
  %2090 = vmatpush1.msra.mxu0 0.0
  %2091 = vmatprep.subr.mxu0 0.0
  %2092 = vmatpush1.msra.mxu0 %v2064
  %2093 = vmatprep.subr.mxu0 0.0
  %2094 = vmatpush1.msra.mxu0 %v2063
  %2095 = vmatprep.subr.mxu0 0.0
  %2096 = vmatpush1.msra.mxu0 %v2062
  %2097 = vmatprep.subr.mxu0 0.0
  %2098 = vmatpush1.msra.mxu0 %v2061
  %2099 = vmatprep.subr.mxu0 0.0
  %2100 = vmatpush1.msra.mxu0 %v2060
  %2101 = vmatprep.subr.mxu0 0.0
  %2102 = vmatpush1.msra.mxu0 %v2059
  %2103 = vmatprep.subr.mxu0 0.0
  %2104 = vmatpush1.msra.mxu0 %v2058
  %2105 = vmatprep.subr.mxu0 0.0
  %2106 = vmatpush1.msra.mxu0 %v2057
  %2107 = vmatprep.subr.mxu0 0.0
  %2108 = vmatpush2.msra.mxu0 0.0
  %2109 = vmatprep.subr.mxu0 0.0
  %2110 = vmatpush2.msra.mxu0 0.0
  %2111 = vmatprep.subr.mxu0 0.0
  %2112 = vmatpush2.msra.mxu0 0.0
  %2113 = vmatprep.subr.mxu0 0.0
  %2114 = vmatpush2.msra.mxu0 0.0
  %2115 = vmatprep.subr.mxu0 0.0
  %2116 = vmatpush2.msra.mxu0 0.0
  %2117 = vmatprep.subr.mxu0 0.0
  %2118 = vmatpush2.msra.mxu0 0.0
  %2119 = vmatprep.subr.mxu0 0.0
  %2120 = vmatpush2.msra.mxu0 0.0
  %2121 = vmatprep.subr.mxu0 0.0
  %2122 = vmatpush2.msra.mxu0 0.0
  %2123 = vmatprep.subr.mxu0 0.0
  %2124 = vmatpush2.msra.mxu0 0.0
  %2125 = vmatprep.subr.mxu0 0.0
  %2126 = vmatpush2.msra.mxu0 0.0
  %2127 = vmatprep.subr.mxu0 0.0
  %2128 = vmatpush2.msra.mxu0 0.0
  %2129 = vmatprep.subr.mxu0 0.0
  %2130 = vmatpush2.msra.mxu0 0.0
  %2131 = vmatprep.subr.mxu0 0.0
  %2132 = vmatpush2.msra.mxu0 0.0
  %2133 = vmatprep.subr.mxu0 0.0
  %2134 = vmatpush2.msra.mxu0 0.0
  %2135 = vmatprep.subr.mxu0 0.0
  %2136 = vmatpush2.msra.mxu0 0.0
  %2137 = vmatprep.subr.mxu0 0.0
  %2138 = vmatpush2.msra.mxu0 0.0
  %2139 = vmatprep.mubr.f32.mxu0 0.0
  %2140 = vmatmul.mubr.f32.gmra.mxu0 %v2070
  %v2141 = vpop.f32.mrf.mxu0
  %v2142 = vadd.f32 %v2068, %v2141
  %v2143 = vpop.f32.mrf.mxu0
  %2144 = vmatprep.mubr.f32.mxu0 0.0
  %2145 = vmatmul.mubr.f32.gmra.mxu0 %v2073
  %v2146 = vpop.f32.mrf.mxu0
  %v2147 = vadd.f32 %v2068, %v2146
  %v2148 = vpop.f32.mrf.mxu0
  %2149 = vdwg.mxu0
  %v2150 = vadd.f32 %v2142, %v1926
  %v2151 = vadd.f32 %v2147, %v1927
  %v2152 = vld [vmem:[%s4 + $0x8] sm:$0x1]
  %v2153 = vld [vmem:[%s4 + $0x9] sm:$0x1]
  %v2154 = vld [vmem:[%s4 + $0xa] sm:$0x1]
  %v2155 = vld [vmem:[%s4 + $0xb] sm:$0x1]
  %v2156 = vld [vmem:[%s4 + $0xc] sm:$0x1]
  %v2157 = vld [vmem:[%s4 + $0xd] sm:$0x1]
  %v2158 = vld [vmem:[%s4 + $0xe] sm:$0x1]
  %v2159 = vld [vmem:[%s4 + $0xf] sm:$0x1]
  %v2160 = vsel %vm140, %v2150, 0.0
  %2161 = vadd.xlane.f32.xlu0 %v2160
  %v2162 = vpop.xlane.xlu0 %2161
  %v2163 = vsel %vm140, %v2151, 0.0
  %2164 = vadd.xlane.f32.xlu0 %v2163
  %v2165 = vpop.xlane.xlu0 %2164
  %v2166 = vmul.f32 %v2162, %v147
  %v2167 = vmul.f32 %v2165, %v147
  %v2168 = vsub.f32 %v2150, %v2166
  %v2169 = vsub.f32 %v2151, %v2167
  %v2170 = vmul.f32 %v2168, %v2168
  %v2171 = vmul.f32 %v2169, %v2169
  %v2172 = vsel %vm140, %v2170, 0.0
  %2173 = vadd.xlane.f32.xlu0 %v2172
  %v2174 = vpop.xlane.xlu0 %2173
  %v2175 = vsel %vm140, %v2171, 0.0
  %2176 = vadd.xlane.f32.xlu0 %v2175
  %v2177 = vpop.xlane.xlu0 %2176
  %v2178 = vmul.f32 %v2174, %v147
  %v2179 = vmul.f32 %v2177, %v147
  %v2180 = vadd.f32 %v2178, 1e-05
  %v2181 = vadd.f32 %v2179, 1e-05
  %v2182 = vrsqrt.pop %v2180
  %v2183 = vrsqrt.pop %v2181
  %v2184 = vmul.f32 %v2168, %v2182
  %v2185 = vmul.f32 %v2169, %v2183
  %v2186 = vlaneseq
  %v2187 = vshrl.u32 %v2186, 7
  %v2188 = vsub.s32 0, %v2187
  %v2189 = vrot.slane %v2152, %v2188
  %v2190 = vmul.f32 %v2184, %v2189
  %v2191 = vmul.f32 %v2185, %v2189
  %v2192 = vlaneseq
  %v2193 = vshrl.u32 %v2192, 7
  %v2194 = vsub.s32 0, %v2193
  %v2195 = vrot.slane %v2153, %v2194
  %v2196 = vadd.f32 %v2190, %v2195
  %v2197 = vadd.f32 %v2191, %v2195
  %v2198 = vld [vmem:[%s2 + $0x10] sm:$0xff]
  %v2199 = vld [vmem:[%s2 + $0x38] sm:$0xff]
  %v2200 = vld [vmem:[%s2 + $0x60] sm:$0xff]
  %v2201 = vld [vmem:[%s2 + $0x88] sm:$0xff]
  %v2202 = vlaneseq
  %v2203 = vshrl.u32 %v2202, 7
  %v2204 = vsub.s32 0, %v2203
  %v2205 = vrot.slane %v2154, %v2204
  %v2207 = vsel %vm140, %v2196, 0
  %v2210 = vsel %vm140, %v2197, 0
  %2212 = vmatprep.subr.mxu0 0.0
  %2213 = vmatpush1.msra.mxu0 0.0
  %2214 = vmatprep.subr.mxu0 0.0
  %2215 = vmatpush1.msra.mxu0 0.0
  %2216 = vmatprep.subr.mxu0 0.0
  %2217 = vmatpush1.msra.mxu0 0.0
  %2218 = vmatprep.subr.mxu0 0.0
  %2219 = vmatpush1.msra.mxu0 0.0
  %2220 = vmatprep.subr.mxu0 0.0
  %2221 = vmatpush1.msra.mxu0 0.0
  %2222 = vmatprep.subr.mxu0 0.0
  %2223 = vmatpush1.msra.mxu0 0.0
  %2224 = vmatprep.subr.mxu0 0.0
  %2225 = vmatpush1.msra.mxu0 0.0
  %2226 = vmatprep.subr.mxu0 0.0
  %2227 = vmatpush1.msra.mxu0 0.0
  %2228 = vmatprep.subr.mxu0 0.0
  %2229 = vmatpush1.msra.mxu0 0.0
  %2230 = vmatprep.subr.mxu0 0.0
  %2231 = vmatpush1.msra.mxu0 0.0
  %2232 = vmatprep.subr.mxu0 0.0
  %2233 = vmatpush1.msra.mxu0 0.0
  %2234 = vmatprep.subr.mxu0 0.0
  %2235 = vmatpush1.msra.mxu0 0.0
  %2236 = vmatprep.subr.mxu0 0.0
  %2237 = vmatpush1.msra.mxu0 %v2201
  %2238 = vmatprep.subr.mxu0 0.0
  %2239 = vmatpush1.msra.mxu0 %v2200
  %2240 = vmatprep.subr.mxu0 0.0
  %2241 = vmatpush1.msra.mxu0 %v2199
  %2242 = vmatprep.subr.mxu0 0.0
  %2243 = vmatpush1.msra.mxu0 %v2198
  %2244 = vmatprep.subr.mxu0 0.0
  %2245 = vmatpush2.msra.mxu0 0.0
  %2246 = vmatprep.subr.mxu0 0.0
  %2247 = vmatpush2.msra.mxu0 0.0
  %2248 = vmatprep.subr.mxu0 0.0
  %2249 = vmatpush2.msra.mxu0 0.0
  %2250 = vmatprep.subr.mxu0 0.0
  %2251 = vmatpush2.msra.mxu0 0.0
  %2252 = vmatprep.subr.mxu0 0.0
  %2253 = vmatpush2.msra.mxu0 0.0
  %2254 = vmatprep.subr.mxu0 0.0
  %2255 = vmatpush2.msra.mxu0 0.0
  %2256 = vmatprep.subr.mxu0 0.0
  %2257 = vmatpush2.msra.mxu0 0.0
  %2258 = vmatprep.subr.mxu0 0.0
  %2259 = vmatpush2.msra.mxu0 0.0
  %2260 = vmatprep.subr.mxu0 0.0
  %2261 = vmatpush2.msra.mxu0 0.0
  %2262 = vmatprep.subr.mxu0 0.0
  %2263 = vmatpush2.msra.mxu0 0.0
  %2264 = vmatprep.subr.mxu0 0.0
  %2265 = vmatpush2.msra.mxu0 0.0
  %2266 = vmatprep.subr.mxu0 0.0
  %2267 = vmatpush2.msra.mxu0 0.0
  %2268 = vmatprep.subr.mxu0 0.0
  %2269 = vmatpush2.msra.mxu0 0.0
  %2270 = vmatprep.subr.mxu0 0.0
  %2271 = vmatpush2.msra.mxu0 0.0
  %2272 = vmatprep.subr.mxu0 0.0
  %2273 = vmatpush2.msra.mxu0 0.0
  %2274 = vmatprep.subr.mxu0 0.0
  %2275 = vmatpush2.msra.mxu0 0.0
  %2276 = vmatprep.mubr.f32.mxu0 0.0
  %2277 = vmatmul.mubr.f32.gmra.mxu0 %v2207
  %v2278 = vpop.f32.mrf.mxu0
  %v2279 = vadd.f32 %v2205, %v2278
  %v2280 = vpop.f32.mrf.mxu0
  %2281 = vmatprep.mubr.f32.mxu0 0.0
  %2282 = vmatmul.mubr.f32.gmra.mxu0 %v2210
  %v2283 = vpop.f32.mrf.mxu0
  %v2284 = vadd.f32 %v2205, %v2283
  %v2285 = vpop.f32.mrf.mxu0
  %2286 = vdwg.mxu0
  %2289 = vrot.lane.b32.xlu0 %v2279, 120
  %v2290 = vpop.permute.xlu0 %2289
  %2291 = vrot.lane.b32.xlu0 %v2284, 120
  %v2292 = vpop.permute.xlu0 %2291
  %2293 = vrot.lane.b32.xlu0 %v2279, 112
  %v2294 = vpop.permute.xlu0 %2293
  %2295 = vrot.lane.b32.xlu0 %v2284, 112
  %v2296 = vpop.permute.xlu0 %2295
  %2297 = vrot.lane.b32.xlu0 %v2279, 104
  %v2298 = vpop.permute.xlu0 %2297
  %2299 = vrot.lane.b32.xlu0 %v2284, 104
  %v2300 = vpop.permute.xlu0 %2299
  %2301 = vrot.lane.b32.xlu0 %v2279, 96
  %v2302 = vpop.permute.xlu0 %2301
  %v2303 = vsel %vm285, %v2279, 0
  %v2305 = vsel %vm285, %v2302, 0
  %2307 = vmatprep.subr.mxu0 0.0
  %2308 = vmatpush1.xpose.msra.mxu0 0.0
  %2309 = vmatprep.subr.mxu0 0.0
  %2310 = vmatpush1.xpose.msra.mxu0 0.0
  %2311 = vmatprep.subr.mxu0 0.0
  %2312 = vmatpush1.xpose.msra.mxu0 0.0
  %2313 = vmatprep.subr.mxu0 0.0
  %2314 = vmatpush1.xpose.msra.mxu0 0.0
  %2315 = vmatprep.subr.mxu0 0.0
  %2316 = vmatpush1.xpose.msra.mxu0 0.0
  %2317 = vmatprep.subr.mxu0 0.0
  %2318 = vmatpush1.xpose.msra.mxu0 0.0
  %2319 = vmatprep.subr.mxu0 0.0
  %2320 = vmatpush1.xpose.msra.mxu0 0.0
  %2321 = vmatprep.subr.mxu0 0.0
  %2322 = vmatpush1.xpose.msra.mxu0 0.0
  %2323 = vmatprep.subr.mxu0 0.0
  %2324 = vmatpush1.xpose.msra.mxu0 0.0
  %2325 = vmatprep.subr.mxu0 0.0
  %2326 = vmatpush1.xpose.msra.mxu0 0.0
  %2327 = vmatprep.subr.mxu0 0.0
  %2328 = vmatpush1.xpose.msra.mxu0 0.0
  %2329 = vmatprep.subr.mxu0 0.0
  %2330 = vmatpush1.xpose.msra.mxu0 0.0
  %2331 = vmatprep.subr.mxu0 0.0
  %2332 = vmatpush1.xpose.msra.mxu0 0.0
  %2333 = vmatprep.subr.mxu0 0.0
  %2334 = vmatpush1.xpose.msra.mxu0 0.0
  %2335 = vmatprep.subr.mxu0 0.0
  %2336 = vmatpush1.xpose.msra.mxu0 0.0
  %2337 = vmatprep.subr.mxu0 0.0
  %2338 = vmatpush1.xpose.msra.mxu0 %v2305
  %2339 = vmatprep.subr.mxu0 0.0
  %2340 = vmatpush2.xpose.msra.mxu0 0.0
  %2341 = vmatprep.subr.mxu0 0.0
  %2342 = vmatpush2.xpose.msra.mxu0 0.0
  %2343 = vmatprep.subr.mxu0 0.0
  %2344 = vmatpush2.xpose.msra.mxu0 0.0
  %2345 = vmatprep.subr.mxu0 0.0
  %2346 = vmatpush2.xpose.msra.mxu0 0.0
  %2347 = vmatprep.subr.mxu0 0.0
  %2348 = vmatpush2.xpose.msra.mxu0 0.0
  %2349 = vmatprep.subr.mxu0 0.0
  %2350 = vmatpush2.xpose.msra.mxu0 0.0
  %2351 = vmatprep.subr.mxu0 0.0
  %2352 = vmatpush2.xpose.msra.mxu0 0.0
  %2353 = vmatprep.subr.mxu0 0.0
  %2354 = vmatpush2.xpose.msra.mxu0 0.0
  %2355 = vmatprep.subr.mxu0 0.0
  %2356 = vmatpush2.xpose.msra.mxu0 0.0
  %2357 = vmatprep.subr.mxu0 0.0
  %2358 = vmatpush2.xpose.msra.mxu0 0.0
  %2359 = vmatprep.subr.mxu0 0.0
  %2360 = vmatpush2.xpose.msra.mxu0 0.0
  %2361 = vmatprep.subr.mxu0 0.0
  %2362 = vmatpush2.xpose.msra.mxu0 0.0
  %2363 = vmatprep.subr.mxu0 0.0
  %2364 = vmatpush2.xpose.msra.mxu0 0.0
  %2365 = vmatprep.subr.mxu0 0.0
  %2366 = vmatpush2.xpose.msra.mxu0 0.0
  %2367 = vmatprep.subr.mxu0 0.0
  %2368 = vmatpush2.xpose.msra.mxu0 0.0
  %2369 = vmatprep.subr.mxu0 0.0
  %2370 = vmatpush2.xpose.msra.mxu0 0.0
  %2371 = vmatprep.mubr.f32.mxu0 0.0
  %2372 = vmatmul.mubr.f32.gmra.mxu0 %v2303
  %v2373 = vpop.f32.mrf.mxu0
  %v2374 = vadd.f32 %v131, %v2373
  %v2375 = vpop.f32.mrf.mxu0
  %2376 = vdwg.mxu0
  %2377 = vrot.lane.b32.xlu0 %v2284, 96
  %v2378 = vpop.permute.xlu0 %2377
  %v2379 = vsel %vm285, %v2284, 0
  %v2381 = vsel %vm285, %v2378, 0
  %2383 = vmatprep.subr.mxu0 0.0
  %2384 = vmatpush1.xpose.msra.mxu0 0.0
  %2385 = vmatprep.subr.mxu0 0.0
  %2386 = vmatpush1.xpose.msra.mxu0 0.0
  %2387 = vmatprep.subr.mxu0 0.0
  %2388 = vmatpush1.xpose.msra.mxu0 0.0
  %2389 = vmatprep.subr.mxu0 0.0
  %2390 = vmatpush1.xpose.msra.mxu0 0.0
  %2391 = vmatprep.subr.mxu0 0.0
  %2392 = vmatpush1.xpose.msra.mxu0 0.0
  %2393 = vmatprep.subr.mxu0 0.0
  %2394 = vmatpush1.xpose.msra.mxu0 0.0
  %2395 = vmatprep.subr.mxu0 0.0
  %2396 = vmatpush1.xpose.msra.mxu0 0.0
  %2397 = vmatprep.subr.mxu0 0.0
  %2398 = vmatpush1.xpose.msra.mxu0 0.0
  %2399 = vmatprep.subr.mxu0 0.0
  %2400 = vmatpush1.xpose.msra.mxu0 0.0
  %2401 = vmatprep.subr.mxu0 0.0
  %2402 = vmatpush1.xpose.msra.mxu0 0.0
  %2403 = vmatprep.subr.mxu0 0.0
  %2404 = vmatpush1.xpose.msra.mxu0 0.0
  %2405 = vmatprep.subr.mxu0 0.0
  %2406 = vmatpush1.xpose.msra.mxu0 0.0
  %2407 = vmatprep.subr.mxu0 0.0
  %2408 = vmatpush1.xpose.msra.mxu0 0.0
  %2409 = vmatprep.subr.mxu0 0.0
  %2410 = vmatpush1.xpose.msra.mxu0 0.0
  %2411 = vmatprep.subr.mxu0 0.0
  %2412 = vmatpush1.xpose.msra.mxu0 0.0
  %2413 = vmatprep.subr.mxu0 0.0
  %2414 = vmatpush1.xpose.msra.mxu0 %v2381
  %2415 = vmatprep.subr.mxu0 0.0
  %2416 = vmatpush2.xpose.msra.mxu0 0.0
  %2417 = vmatprep.subr.mxu0 0.0
  %2418 = vmatpush2.xpose.msra.mxu0 0.0
  %2419 = vmatprep.subr.mxu0 0.0
  %2420 = vmatpush2.xpose.msra.mxu0 0.0
  %2421 = vmatprep.subr.mxu0 0.0
  %2422 = vmatpush2.xpose.msra.mxu0 0.0
  %2423 = vmatprep.subr.mxu0 0.0
  %2424 = vmatpush2.xpose.msra.mxu0 0.0
  %2425 = vmatprep.subr.mxu0 0.0
  %2426 = vmatpush2.xpose.msra.mxu0 0.0
  %2427 = vmatprep.subr.mxu0 0.0
  %2428 = vmatpush2.xpose.msra.mxu0 0.0
  %2429 = vmatprep.subr.mxu0 0.0
  %2430 = vmatpush2.xpose.msra.mxu0 0.0
  %2431 = vmatprep.subr.mxu0 0.0
  %2432 = vmatpush2.xpose.msra.mxu0 0.0
  %2433 = vmatprep.subr.mxu0 0.0
  %2434 = vmatpush2.xpose.msra.mxu0 0.0
  %2435 = vmatprep.subr.mxu0 0.0
  %2436 = vmatpush2.xpose.msra.mxu0 0.0
  %2437 = vmatprep.subr.mxu0 0.0
  %2438 = vmatpush2.xpose.msra.mxu0 0.0
  %2439 = vmatprep.subr.mxu0 0.0
  %2440 = vmatpush2.xpose.msra.mxu0 0.0
  %2441 = vmatprep.subr.mxu0 0.0
  %2442 = vmatpush2.xpose.msra.mxu0 0.0
  %2443 = vmatprep.subr.mxu0 0.0
  %2444 = vmatpush2.xpose.msra.mxu0 0.0
  %2445 = vmatprep.subr.mxu0 0.0
  %2446 = vmatpush2.xpose.msra.mxu0 0.0
  %2447 = vmatprep.mubr.f32.mxu0 0.0
  %2448 = vmatmul.mubr.f32.gmra.mxu0 %v2379
  %v2449 = vpop.f32.mrf.mxu0
  %v2450 = vadd.f32 %v131, %v2449
  %v2451 = vpop.f32.mrf.mxu0
  %2452 = vdwg.mxu0
  %2453 = vrot.lane.b32.xlu0 %v2290, 96
  %v2454 = vpop.permute.xlu0 %2453
  %v2455 = vsel %vm285, %v2290, 0
  %v2457 = vsel %vm285, %v2454, 0
  %2459 = vmatprep.subr.mxu0 0.0
  %2460 = vmatpush1.xpose.msra.mxu0 0.0
  %2461 = vmatprep.subr.mxu0 0.0
  %2462 = vmatpush1.xpose.msra.mxu0 0.0
  %2463 = vmatprep.subr.mxu0 0.0
  %2464 = vmatpush1.xpose.msra.mxu0 0.0
  %2465 = vmatprep.subr.mxu0 0.0
  %2466 = vmatpush1.xpose.msra.mxu0 0.0
  %2467 = vmatprep.subr.mxu0 0.0
  %2468 = vmatpush1.xpose.msra.mxu0 0.0
  %2469 = vmatprep.subr.mxu0 0.0
  %2470 = vmatpush1.xpose.msra.mxu0 0.0
  %2471 = vmatprep.subr.mxu0 0.0
  %2472 = vmatpush1.xpose.msra.mxu0 0.0
  %2473 = vmatprep.subr.mxu0 0.0
  %2474 = vmatpush1.xpose.msra.mxu0 0.0
  %2475 = vmatprep.subr.mxu0 0.0
  %2476 = vmatpush1.xpose.msra.mxu0 0.0
  %2477 = vmatprep.subr.mxu0 0.0
  %2478 = vmatpush1.xpose.msra.mxu0 0.0
  %2479 = vmatprep.subr.mxu0 0.0
  %2480 = vmatpush1.xpose.msra.mxu0 0.0
  %2481 = vmatprep.subr.mxu0 0.0
  %2482 = vmatpush1.xpose.msra.mxu0 0.0
  %2483 = vmatprep.subr.mxu0 0.0
  %2484 = vmatpush1.xpose.msra.mxu0 0.0
  %2485 = vmatprep.subr.mxu0 0.0
  %2486 = vmatpush1.xpose.msra.mxu0 0.0
  %2487 = vmatprep.subr.mxu0 0.0
  %2488 = vmatpush1.xpose.msra.mxu0 0.0
  %2489 = vmatprep.subr.mxu0 0.0
  %2490 = vmatpush1.xpose.msra.mxu0 %v2457
  %2491 = vmatprep.subr.mxu0 0.0
  %2492 = vmatpush2.xpose.msra.mxu0 0.0
  %2493 = vmatprep.subr.mxu0 0.0
  %2494 = vmatpush2.xpose.msra.mxu0 0.0
  %2495 = vmatprep.subr.mxu0 0.0
  %2496 = vmatpush2.xpose.msra.mxu0 0.0
  %2497 = vmatprep.subr.mxu0 0.0
  %2498 = vmatpush2.xpose.msra.mxu0 0.0
  %2499 = vmatprep.subr.mxu0 0.0
  %2500 = vmatpush2.xpose.msra.mxu0 0.0
  %2501 = vmatprep.subr.mxu0 0.0
  %2502 = vmatpush2.xpose.msra.mxu0 0.0
  %2503 = vmatprep.subr.mxu0 0.0
  %2504 = vmatpush2.xpose.msra.mxu0 0.0
  %2505 = vmatprep.subr.mxu0 0.0
  %2506 = vmatpush2.xpose.msra.mxu0 0.0
  %2507 = vmatprep.subr.mxu0 0.0
  %2508 = vmatpush2.xpose.msra.mxu0 0.0
  %2509 = vmatprep.subr.mxu0 0.0
  %2510 = vmatpush2.xpose.msra.mxu0 0.0
  %2511 = vmatprep.subr.mxu0 0.0
  %2512 = vmatpush2.xpose.msra.mxu0 0.0
  %2513 = vmatprep.subr.mxu0 0.0
  %2514 = vmatpush2.xpose.msra.mxu0 0.0
  %2515 = vmatprep.subr.mxu0 0.0
  %2516 = vmatpush2.xpose.msra.mxu0 0.0
  %2517 = vmatprep.subr.mxu0 0.0
  %2518 = vmatpush2.xpose.msra.mxu0 0.0
  %2519 = vmatprep.subr.mxu0 0.0
  %2520 = vmatpush2.xpose.msra.mxu0 0.0
  %2521 = vmatprep.subr.mxu0 0.0
  %2522 = vmatpush2.xpose.msra.mxu0 0.0
  %2523 = vmatprep.mubr.f32.mxu0 0.0
  %2524 = vmatmul.mubr.f32.gmra.mxu0 %v2455
  %v2525 = vpop.f32.mrf.mxu0
  %v2526 = vadd.f32 %v131, %v2525
  %v2527 = vpop.f32.mrf.mxu0
  %2528 = vdwg.mxu0
  %2529 = vrot.lane.b32.xlu0 %v2292, 96
  %v2530 = vpop.permute.xlu0 %2529
  %v2531 = vsel %vm285, %v2292, 0
  %v2533 = vsel %vm285, %v2530, 0
  %2535 = vmatprep.subr.mxu0 0.0
  %2536 = vmatpush1.xpose.msra.mxu0 0.0
  %2537 = vmatprep.subr.mxu0 0.0
  %2538 = vmatpush1.xpose.msra.mxu0 0.0
  %2539 = vmatprep.subr.mxu0 0.0
  %2540 = vmatpush1.xpose.msra.mxu0 0.0
  %2541 = vmatprep.subr.mxu0 0.0
  %2542 = vmatpush1.xpose.msra.mxu0 0.0
  %2543 = vmatprep.subr.mxu0 0.0
  %2544 = vmatpush1.xpose.msra.mxu0 0.0
  %2545 = vmatprep.subr.mxu0 0.0
  %2546 = vmatpush1.xpose.msra.mxu0 0.0
  %2547 = vmatprep.subr.mxu0 0.0
  %2548 = vmatpush1.xpose.msra.mxu0 0.0
  %2549 = vmatprep.subr.mxu0 0.0
  %2550 = vmatpush1.xpose.msra.mxu0 0.0
  %2551 = vmatprep.subr.mxu0 0.0
  %2552 = vmatpush1.xpose.msra.mxu0 0.0
  %2553 = vmatprep.subr.mxu0 0.0
  %2554 = vmatpush1.xpose.msra.mxu0 0.0
  %2555 = vmatprep.subr.mxu0 0.0
  %2556 = vmatpush1.xpose.msra.mxu0 0.0
  %2557 = vmatprep.subr.mxu0 0.0
  %2558 = vmatpush1.xpose.msra.mxu0 0.0
  %2559 = vmatprep.subr.mxu0 0.0
  %2560 = vmatpush1.xpose.msra.mxu0 0.0
  %2561 = vmatprep.subr.mxu0 0.0
  %2562 = vmatpush1.xpose.msra.mxu0 0.0
  %2563 = vmatprep.subr.mxu0 0.0
  %2564 = vmatpush1.xpose.msra.mxu0 0.0
  %2565 = vmatprep.subr.mxu0 0.0
  %2566 = vmatpush1.xpose.msra.mxu0 %v2533
  %2567 = vmatprep.subr.mxu0 0.0
  %2568 = vmatpush2.xpose.msra.mxu0 0.0
  %2569 = vmatprep.subr.mxu0 0.0
  %2570 = vmatpush2.xpose.msra.mxu0 0.0
  %2571 = vmatprep.subr.mxu0 0.0
  %2572 = vmatpush2.xpose.msra.mxu0 0.0
  %2573 = vmatprep.subr.mxu0 0.0
  %2574 = vmatpush2.xpose.msra.mxu0 0.0
  %2575 = vmatprep.subr.mxu0 0.0
  %2576 = vmatpush2.xpose.msra.mxu0 0.0
  %2577 = vmatprep.subr.mxu0 0.0
  %2578 = vmatpush2.xpose.msra.mxu0 0.0
  %2579 = vmatprep.subr.mxu0 0.0
  %2580 = vmatpush2.xpose.msra.mxu0 0.0
  %2581 = vmatprep.subr.mxu0 0.0
  %2582 = vmatpush2.xpose.msra.mxu0 0.0
  %2583 = vmatprep.subr.mxu0 0.0
  %2584 = vmatpush2.xpose.msra.mxu0 0.0
  %2585 = vmatprep.subr.mxu0 0.0
  %2586 = vmatpush2.xpose.msra.mxu0 0.0
  %2587 = vmatprep.subr.mxu0 0.0
  %2588 = vmatpush2.xpose.msra.mxu0 0.0
  %2589 = vmatprep.subr.mxu0 0.0
  %2590 = vmatpush2.xpose.msra.mxu0 0.0
  %2591 = vmatprep.subr.mxu0 0.0
  %2592 = vmatpush2.xpose.msra.mxu0 0.0
  %2593 = vmatprep.subr.mxu0 0.0
  %2594 = vmatpush2.xpose.msra.mxu0 0.0
  %2595 = vmatprep.subr.mxu0 0.0
  %2596 = vmatpush2.xpose.msra.mxu0 0.0
  %2597 = vmatprep.subr.mxu0 0.0
  %2598 = vmatpush2.xpose.msra.mxu0 0.0
  %2599 = vmatprep.mubr.f32.mxu0 0.0
  %2600 = vmatmul.mubr.f32.gmra.mxu0 %v2531
  %v2601 = vpop.f32.mrf.mxu0
  %v2602 = vadd.f32 %v131, %v2601
  %v2603 = vpop.f32.mrf.mxu0
  %2604 = vdwg.mxu0
  %2605 = vrot.lane.b32.xlu0 %v2294, 96
  %v2606 = vpop.permute.xlu0 %2605
  %v2607 = vsel %vm285, %v2294, 0
  %v2609 = vsel %vm285, %v2606, 0
  %2611 = vmatprep.subr.mxu0 0.0
  %2612 = vmatpush1.xpose.msra.mxu0 0.0
  %2613 = vmatprep.subr.mxu0 0.0
  %2614 = vmatpush1.xpose.msra.mxu0 0.0
  %2615 = vmatprep.subr.mxu0 0.0
  %2616 = vmatpush1.xpose.msra.mxu0 0.0
  %2617 = vmatprep.subr.mxu0 0.0
  %2618 = vmatpush1.xpose.msra.mxu0 0.0
  %2619 = vmatprep.subr.mxu0 0.0
  %2620 = vmatpush1.xpose.msra.mxu0 0.0
  %2621 = vmatprep.subr.mxu0 0.0
  %2622 = vmatpush1.xpose.msra.mxu0 0.0
  %2623 = vmatprep.subr.mxu0 0.0
  %2624 = vmatpush1.xpose.msra.mxu0 0.0
  %2625 = vmatprep.subr.mxu0 0.0
  %2626 = vmatpush1.xpose.msra.mxu0 0.0
  %2627 = vmatprep.subr.mxu0 0.0
  %2628 = vmatpush1.xpose.msra.mxu0 0.0
  %2629 = vmatprep.subr.mxu0 0.0
  %2630 = vmatpush1.xpose.msra.mxu0 0.0
  %2631 = vmatprep.subr.mxu0 0.0
  %2632 = vmatpush1.xpose.msra.mxu0 0.0
  %2633 = vmatprep.subr.mxu0 0.0
  %2634 = vmatpush1.xpose.msra.mxu0 0.0
  %2635 = vmatprep.subr.mxu0 0.0
  %2636 = vmatpush1.xpose.msra.mxu0 0.0
  %2637 = vmatprep.subr.mxu0 0.0
  %2638 = vmatpush1.xpose.msra.mxu0 0.0
  %2639 = vmatprep.subr.mxu0 0.0
  %2640 = vmatpush1.xpose.msra.mxu0 0.0
  %2641 = vmatprep.subr.mxu0 0.0
  %2642 = vmatpush1.xpose.msra.mxu0 %v2609
  %2643 = vmatprep.subr.mxu0 0.0
  %2644 = vmatpush2.xpose.msra.mxu0 0.0
  %2645 = vmatprep.subr.mxu0 0.0
  %2646 = vmatpush2.xpose.msra.mxu0 0.0
  %2647 = vmatprep.subr.mxu0 0.0
  %2648 = vmatpush2.xpose.msra.mxu0 0.0
  %2649 = vmatprep.subr.mxu0 0.0
  %2650 = vmatpush2.xpose.msra.mxu0 0.0
  %2651 = vmatprep.subr.mxu0 0.0
  %2652 = vmatpush2.xpose.msra.mxu0 0.0
  %2653 = vmatprep.subr.mxu0 0.0
  %2654 = vmatpush2.xpose.msra.mxu0 0.0
  %2655 = vmatprep.subr.mxu0 0.0
  %2656 = vmatpush2.xpose.msra.mxu0 0.0
  %2657 = vmatprep.subr.mxu0 0.0
  %2658 = vmatpush2.xpose.msra.mxu0 0.0
  %2659 = vmatprep.subr.mxu0 0.0
  %2660 = vmatpush2.xpose.msra.mxu0 0.0
  %2661 = vmatprep.subr.mxu0 0.0
  %2662 = vmatpush2.xpose.msra.mxu0 0.0
  %2663 = vmatprep.subr.mxu0 0.0
  %2664 = vmatpush2.xpose.msra.mxu0 0.0
  %2665 = vmatprep.subr.mxu0 0.0
  %2666 = vmatpush2.xpose.msra.mxu0 0.0
  %2667 = vmatprep.subr.mxu0 0.0
  %2668 = vmatpush2.xpose.msra.mxu0 0.0
  %2669 = vmatprep.subr.mxu0 0.0
  %2670 = vmatpush2.xpose.msra.mxu0 0.0
  %2671 = vmatprep.subr.mxu0 0.0
  %2672 = vmatpush2.xpose.msra.mxu0 0.0
  %2673 = vmatprep.subr.mxu0 0.0
  %2674 = vmatpush2.xpose.msra.mxu0 0.0
  %2675 = vmatprep.mubr.f32.mxu0 0.0
  %2676 = vmatmul.mubr.f32.gmra.mxu0 %v2607
  %v2677 = vpop.f32.mrf.mxu0
  %v2678 = vadd.f32 %v131, %v2677
  %v2679 = vpop.f32.mrf.mxu0
  %2680 = vdwg.mxu0
  %2681 = vrot.lane.b32.xlu0 %v2296, 96
  %v2682 = vpop.permute.xlu0 %2681
  %v2683 = vsel %vm285, %v2296, 0
  %v2685 = vsel %vm285, %v2682, 0
  %2687 = vmatprep.subr.mxu0 0.0
  %2688 = vmatpush1.xpose.msra.mxu0 0.0
  %2689 = vmatprep.subr.mxu0 0.0
  %2690 = vmatpush1.xpose.msra.mxu0 0.0
  %2691 = vmatprep.subr.mxu0 0.0
  %2692 = vmatpush1.xpose.msra.mxu0 0.0
  %2693 = vmatprep.subr.mxu0 0.0
  %2694 = vmatpush1.xpose.msra.mxu0 0.0
  %2695 = vmatprep.subr.mxu0 0.0
  %2696 = vmatpush1.xpose.msra.mxu0 0.0
  %2697 = vmatprep.subr.mxu0 0.0
  %2698 = vmatpush1.xpose.msra.mxu0 0.0
  %2699 = vmatprep.subr.mxu0 0.0
  %2700 = vmatpush1.xpose.msra.mxu0 0.0
  %2701 = vmatprep.subr.mxu0 0.0
  %2702 = vmatpush1.xpose.msra.mxu0 0.0
  %2703 = vmatprep.subr.mxu0 0.0
  %2704 = vmatpush1.xpose.msra.mxu0 0.0
  %2705 = vmatprep.subr.mxu0 0.0
  %2706 = vmatpush1.xpose.msra.mxu0 0.0
  %2707 = vmatprep.subr.mxu0 0.0
  %2708 = vmatpush1.xpose.msra.mxu0 0.0
  %2709 = vmatprep.subr.mxu0 0.0
  %2710 = vmatpush1.xpose.msra.mxu0 0.0
  %2711 = vmatprep.subr.mxu0 0.0
  %2712 = vmatpush1.xpose.msra.mxu0 0.0
  %2713 = vmatprep.subr.mxu0 0.0
  %2714 = vmatpush1.xpose.msra.mxu0 0.0
  %2715 = vmatprep.subr.mxu0 0.0
  %2716 = vmatpush1.xpose.msra.mxu0 0.0
  %2717 = vmatprep.subr.mxu0 0.0
  %2718 = vmatpush1.xpose.msra.mxu0 %v2685
  %2719 = vmatprep.subr.mxu0 0.0
  %2720 = vmatpush2.xpose.msra.mxu0 0.0
  %2721 = vmatprep.subr.mxu0 0.0
  %2722 = vmatpush2.xpose.msra.mxu0 0.0
  %2723 = vmatprep.subr.mxu0 0.0
  %2724 = vmatpush2.xpose.msra.mxu0 0.0
  %2725 = vmatprep.subr.mxu0 0.0
  %2726 = vmatpush2.xpose.msra.mxu0 0.0
  %2727 = vmatprep.subr.mxu0 0.0
  %2728 = vmatpush2.xpose.msra.mxu0 0.0
  %2729 = vmatprep.subr.mxu0 0.0
  %2730 = vmatpush2.xpose.msra.mxu0 0.0
  %2731 = vmatprep.subr.mxu0 0.0
  %2732 = vmatpush2.xpose.msra.mxu0 0.0
  %2733 = vmatprep.subr.mxu0 0.0
  %2734 = vmatpush2.xpose.msra.mxu0 0.0
  %2735 = vmatprep.subr.mxu0 0.0
  %2736 = vmatpush2.xpose.msra.mxu0 0.0
  %2737 = vmatprep.subr.mxu0 0.0
  %2738 = vmatpush2.xpose.msra.mxu0 0.0
  %2739 = vmatprep.subr.mxu0 0.0
  %2740 = vmatpush2.xpose.msra.mxu0 0.0
  %2741 = vmatprep.subr.mxu0 0.0
  %2742 = vmatpush2.xpose.msra.mxu0 0.0
  %2743 = vmatprep.subr.mxu0 0.0
  %2744 = vmatpush2.xpose.msra.mxu0 0.0
  %2745 = vmatprep.subr.mxu0 0.0
  %2746 = vmatpush2.xpose.msra.mxu0 0.0
  %2747 = vmatprep.subr.mxu0 0.0
  %2748 = vmatpush2.xpose.msra.mxu0 0.0
  %2749 = vmatprep.subr.mxu0 0.0
  %2750 = vmatpush2.xpose.msra.mxu0 0.0
  %2751 = vmatprep.mubr.f32.mxu0 0.0
  %2752 = vmatmul.mubr.f32.gmra.mxu0 %v2683
  %v2753 = vpop.f32.mrf.mxu0
  %v2754 = vadd.f32 %v131, %v2753
  %v2755 = vpop.f32.mrf.mxu0
  %2756 = vdwg.mxu0
  %2757 = vrot.lane.b32.xlu0 %v2298, 96
  %v2758 = vpop.permute.xlu0 %2757
  %v2759 = vsel %vm285, %v2298, 0
  %v2761 = vsel %vm285, %v2758, 0
  %2763 = vmatprep.subr.mxu0 0.0
  %2764 = vmatpush1.xpose.msra.mxu0 0.0
  %2765 = vmatprep.subr.mxu0 0.0
  %2766 = vmatpush1.xpose.msra.mxu0 0.0
  %2767 = vmatprep.subr.mxu0 0.0
  %2768 = vmatpush1.xpose.msra.mxu0 0.0
  %2769 = vmatprep.subr.mxu0 0.0
  %2770 = vmatpush1.xpose.msra.mxu0 0.0
  %2771 = vmatprep.subr.mxu0 0.0
  %2772 = vmatpush1.xpose.msra.mxu0 0.0
  %2773 = vmatprep.subr.mxu0 0.0
  %2774 = vmatpush1.xpose.msra.mxu0 0.0
  %2775 = vmatprep.subr.mxu0 0.0
  %2776 = vmatpush1.xpose.msra.mxu0 0.0
  %2777 = vmatprep.subr.mxu0 0.0
  %2778 = vmatpush1.xpose.msra.mxu0 0.0
  %2779 = vmatprep.subr.mxu0 0.0
  %2780 = vmatpush1.xpose.msra.mxu0 0.0
  %2781 = vmatprep.subr.mxu0 0.0
  %2782 = vmatpush1.xpose.msra.mxu0 0.0
  %2783 = vmatprep.subr.mxu0 0.0
  %2784 = vmatpush1.xpose.msra.mxu0 0.0
  %2785 = vmatprep.subr.mxu0 0.0
  %2786 = vmatpush1.xpose.msra.mxu0 0.0
  %2787 = vmatprep.subr.mxu0 0.0
  %2788 = vmatpush1.xpose.msra.mxu0 0.0
  %2789 = vmatprep.subr.mxu0 0.0
  %2790 = vmatpush1.xpose.msra.mxu0 0.0
  %2791 = vmatprep.subr.mxu0 0.0
  %2792 = vmatpush1.xpose.msra.mxu0 0.0
  %2793 = vmatprep.subr.mxu0 0.0
  %2794 = vmatpush1.xpose.msra.mxu0 %v2761
  %2795 = vmatprep.subr.mxu0 0.0
  %2796 = vmatpush2.xpose.msra.mxu0 0.0
  %2797 = vmatprep.subr.mxu0 0.0
  %2798 = vmatpush2.xpose.msra.mxu0 0.0
  %2799 = vmatprep.subr.mxu0 0.0
  %2800 = vmatpush2.xpose.msra.mxu0 0.0
  %2801 = vmatprep.subr.mxu0 0.0
  %2802 = vmatpush2.xpose.msra.mxu0 0.0
  %2803 = vmatprep.subr.mxu0 0.0
  %2804 = vmatpush2.xpose.msra.mxu0 0.0
  %2805 = vmatprep.subr.mxu0 0.0
  %2806 = vmatpush2.xpose.msra.mxu0 0.0
  %2807 = vmatprep.subr.mxu0 0.0
  %2808 = vmatpush2.xpose.msra.mxu0 0.0
  %2809 = vmatprep.subr.mxu0 0.0
  %2810 = vmatpush2.xpose.msra.mxu0 0.0
  %2811 = vmatprep.subr.mxu0 0.0
  %2812 = vmatpush2.xpose.msra.mxu0 0.0
  %2813 = vmatprep.subr.mxu0 0.0
  %2814 = vmatpush2.xpose.msra.mxu0 0.0
  %2815 = vmatprep.subr.mxu0 0.0
  %2816 = vmatpush2.xpose.msra.mxu0 0.0
  %2817 = vmatprep.subr.mxu0 0.0
  %2818 = vmatpush2.xpose.msra.mxu0 0.0
  %2819 = vmatprep.subr.mxu0 0.0
  %2820 = vmatpush2.xpose.msra.mxu0 0.0
  %2821 = vmatprep.subr.mxu0 0.0
  %2822 = vmatpush2.xpose.msra.mxu0 0.0
  %2823 = vmatprep.subr.mxu0 0.0
  %2824 = vmatpush2.xpose.msra.mxu0 0.0
  %2825 = vmatprep.subr.mxu0 0.0
  %2826 = vmatpush2.xpose.msra.mxu0 0.0
  %2827 = vmatprep.mubr.f32.mxu0 0.0
  %2828 = vmatmul.mubr.f32.gmra.mxu0 %v2759
  %v2829 = vpop.f32.mrf.mxu0
  %v2830 = vadd.f32 %v131, %v2829
  %v2831 = vpop.f32.mrf.mxu0
  %2832 = vdwg.mxu0
  %2833 = vrot.lane.b32.xlu0 %v2300, 96
  %v2834 = vpop.permute.xlu0 %2833
  %v2835 = vsel %vm285, %v2300, 0
  %v2837 = vsel %vm285, %v2834, 0
  %2839 = vmatprep.subr.mxu0 0.0
  %2840 = vmatpush1.xpose.msra.mxu0 0.0
  %2841 = vmatprep.subr.mxu0 0.0
  %2842 = vmatpush1.xpose.msra.mxu0 0.0
  %2843 = vmatprep.subr.mxu0 0.0
  %2844 = vmatpush1.xpose.msra.mxu0 0.0
  %2845 = vmatprep.subr.mxu0 0.0
  %2846 = vmatpush1.xpose.msra.mxu0 0.0
  %2847 = vmatprep.subr.mxu0 0.0
  %2848 = vmatpush1.xpose.msra.mxu0 0.0
  %2849 = vmatprep.subr.mxu0 0.0
  %2850 = vmatpush1.xpose.msra.mxu0 0.0
  %2851 = vmatprep.subr.mxu0 0.0
  %2852 = vmatpush1.xpose.msra.mxu0 0.0
  %2853 = vmatprep.subr.mxu0 0.0
  %2854 = vmatpush1.xpose.msra.mxu0 0.0
  %2855 = vmatprep.subr.mxu0 0.0
  %2856 = vmatpush1.xpose.msra.mxu0 0.0
  %2857 = vmatprep.subr.mxu0 0.0
  %2858 = vmatpush1.xpose.msra.mxu0 0.0
  %2859 = vmatprep.subr.mxu0 0.0
  %2860 = vmatpush1.xpose.msra.mxu0 0.0
  %2861 = vmatprep.subr.mxu0 0.0
  %2862 = vmatpush1.xpose.msra.mxu0 0.0
  %2863 = vmatprep.subr.mxu0 0.0
  %2864 = vmatpush1.xpose.msra.mxu0 0.0
  %2865 = vmatprep.subr.mxu0 0.0
  %2866 = vmatpush1.xpose.msra.mxu0 0.0
  %2867 = vmatprep.subr.mxu0 0.0
  %2868 = vmatpush1.xpose.msra.mxu0 0.0
  %2869 = vmatprep.subr.mxu0 0.0
  %2870 = vmatpush1.xpose.msra.mxu0 %v2837
  %2871 = vmatprep.subr.mxu0 0.0
  %2872 = vmatpush2.xpose.msra.mxu0 0.0
  %2873 = vmatprep.subr.mxu0 0.0
  %2874 = vmatpush2.xpose.msra.mxu0 0.0
  %2875 = vmatprep.subr.mxu0 0.0
  %2876 = vmatpush2.xpose.msra.mxu0 0.0
  %2877 = vmatprep.subr.mxu0 0.0
  %2878 = vmatpush2.xpose.msra.mxu0 0.0
  %2879 = vmatprep.subr.mxu0 0.0
  %2880 = vmatpush2.xpose.msra.mxu0 0.0
  %2881 = vmatprep.subr.mxu0 0.0
  %2882 = vmatpush2.xpose.msra.mxu0 0.0
  %2883 = vmatprep.subr.mxu0 0.0
  %2884 = vmatpush2.xpose.msra.mxu0 0.0
  %2885 = vmatprep.subr.mxu0 0.0
  %2886 = vmatpush2.xpose.msra.mxu0 0.0
  %2887 = vmatprep.subr.mxu0 0.0
  %2888 = vmatpush2.xpose.msra.mxu0 0.0
  %2889 = vmatprep.subr.mxu0 0.0
  %2890 = vmatpush2.xpose.msra.mxu0 0.0
  %2891 = vmatprep.subr.mxu0 0.0
  %2892 = vmatpush2.xpose.msra.mxu0 0.0
  %2893 = vmatprep.subr.mxu0 0.0
  %2894 = vmatpush2.xpose.msra.mxu0 0.0
  %2895 = vmatprep.subr.mxu0 0.0
  %2896 = vmatpush2.xpose.msra.mxu0 0.0
  %2897 = vmatprep.subr.mxu0 0.0
  %2898 = vmatpush2.xpose.msra.mxu0 0.0
  %2899 = vmatprep.subr.mxu0 0.0
  %2900 = vmatpush2.xpose.msra.mxu0 0.0
  %2901 = vmatprep.subr.mxu0 0.0
  %2902 = vmatpush2.xpose.msra.mxu0 0.0
  %2903 = vmatprep.mubr.f32.mxu0 0.0
  %2904 = vmatmul.mubr.f32.gmra.mxu0 %v2835
  %v2905 = vpop.f32.mrf.mxu0
  %v2906 = vadd.f32 %v131, %v2905
  %v2907 = vpop.f32.mrf.mxu0
  %2908 = vdwg.mxu0
  %v2909 = vsel %vm285, %v2374, -inf
  %2910 = vmax.xlane.f32.xlu0 %v2909
  %v2911 = vpop.xlane.xlu0 %2910
  %v2912 = vsel %vm285, %v2450, -inf
  %2913 = vmax.xlane.f32.xlu0 %v2912
  %v2914 = vpop.xlane.xlu0 %2913
  %v2915 = vsel %vm285, %v2526, -inf
  %2916 = vmax.xlane.f32.xlu0 %v2915
  %v2917 = vpop.xlane.xlu0 %2916
  %v2918 = vsel %vm285, %v2602, -inf
  %2919 = vmax.xlane.f32.xlu0 %v2918
  %v2920 = vpop.xlane.xlu0 %2919
  %v2921 = vsel %vm285, %v2678, -inf
  %2922 = vmax.xlane.f32.xlu0 %v2921
  %v2923 = vpop.xlane.xlu0 %2922
  %v2924 = vsel %vm285, %v2754, -inf
  %2925 = vmax.xlane.f32.xlu0 %v2924
  %v2926 = vpop.xlane.xlu0 %2925
  %v2927 = vsel %vm285, %v2830, -inf
  %2928 = vmax.xlane.f32.xlu0 %v2927
  %v2929 = vpop.xlane.xlu0 %2928
  %v2930 = vsel %vm285, %v2906, -inf
  %2931 = vmax.xlane.f32.xlu0 %v2930
  %v2932 = vpop.xlane.xlu0 %2931
  %v2933 = vsub.f32 %v2374, %v2911
  %v2934 = vsub.f32 %v2450, %v2914
  %v2935 = vsub.f32 %v2526, %v2917
  %v2936 = vsub.f32 %v2602, %v2920
  %v2937 = vsub.f32 %v2678, %v2923
  %v2938 = vsub.f32 %v2754, %v2926
  %v2939 = vsub.f32 %v2830, %v2929
  %v2940 = vsub.f32 %v2906, %v2932
  %v2941 = vmul.f32 %v2933, 1.442695
  %v2942 = vpow.pop %v2941
  %v2943 = vmul.f32 %v2934, 1.442695
  %v2944 = vpow.pop %v2943
  %v2945 = vmul.f32 %v2935, 1.442695
  %v2946 = vpow.pop %v2945
  %v2947 = vmul.f32 %v2936, 1.442695
  %v2948 = vpow.pop %v2947
  %v2949 = vmul.f32 %v2937, 1.442695
  %v2950 = vpow.pop %v2949
  %v2951 = vmul.f32 %v2938, 1.442695
  %v2952 = vpow.pop %v2951
  %v2953 = vmul.f32 %v2939, 1.442695
  %v2954 = vpow.pop %v2953
  %v2955 = vmul.f32 %v2940, 1.442695
  %v2956 = vpow.pop %v2955
  %v2957 = vsel %vm285, %v2942, 0.0
  %2958 = vadd.xlane.f32.xlu0 %v2957
  %v2959 = vpop.xlane.xlu0 %2958
  %v2960 = vsel %vm285, %v2944, 0.0
  %2961 = vadd.xlane.f32.xlu0 %v2960
  %v2962 = vpop.xlane.xlu0 %2961
  %v2963 = vsel %vm285, %v2946, 0.0
  %2964 = vadd.xlane.f32.xlu0 %v2963
  %v2965 = vpop.xlane.xlu0 %2964
  %v2966 = vsel %vm285, %v2948, 0.0
  %2967 = vadd.xlane.f32.xlu0 %v2966
  %v2968 = vpop.xlane.xlu0 %2967
  %v2969 = vsel %vm285, %v2950, 0.0
  %2970 = vadd.xlane.f32.xlu0 %v2969
  %v2971 = vpop.xlane.xlu0 %2970
  %v2972 = vsel %vm285, %v2952, 0.0
  %2973 = vadd.xlane.f32.xlu0 %v2972
  %v2974 = vpop.xlane.xlu0 %2973
  %v2975 = vsel %vm285, %v2954, 0.0
  %2976 = vadd.xlane.f32.xlu0 %v2975
  %v2977 = vpop.xlane.xlu0 %2976
  %v2978 = vsel %vm285, %v2956, 0.0
  %2979 = vadd.xlane.f32.xlu0 %v2978
  %v2980 = vpop.xlane.xlu0 %2979
  %v2981 = vrcp.pop %v2959
  %v2982 = vmul.f32 %v2942, %v2981
  %v2983 = vrcp.pop %v2962
  %v2984 = vmul.f32 %v2944, %v2983
  %v2985 = vrcp.pop %v2965
  %v2986 = vmul.f32 %v2946, %v2985
  %v2987 = vrcp.pop %v2968
  %v2988 = vmul.f32 %v2948, %v2987
  %v2989 = vrcp.pop %v2971
  %v2990 = vmul.f32 %v2950, %v2989
  %v2991 = vrcp.pop %v2974
  %v2992 = vmul.f32 %v2952, %v2991
  %v2993 = vrcp.pop %v2977
  %v2994 = vmul.f32 %v2954, %v2993
  %v2995 = vrcp.pop %v2980
  %v2996 = vmul.f32 %v2956, %v2995
  %2997 = vrot.lane.b32.xlu0 %v2279, 64
  %v2998 = vpop.permute.xlu0 %2997
  %v3001 = vsel %vm285, %v2982, 0
  %3003 = vmatprep.subr.mxu0 0.0
  %3004 = vmatpush1.msra.mxu0 0.0
  %3005 = vmatprep.subr.mxu0 0.0
  %3006 = vmatpush1.msra.mxu0 0.0
  %3007 = vmatprep.subr.mxu0 0.0
  %3008 = vmatpush1.msra.mxu0 0.0
  %3009 = vmatprep.subr.mxu0 0.0
  %3010 = vmatpush1.msra.mxu0 0.0
  %3011 = vmatprep.subr.mxu0 0.0
  %3012 = vmatpush1.msra.mxu0 0.0
  %3013 = vmatprep.subr.mxu0 0.0
  %3014 = vmatpush1.msra.mxu0 0.0
  %3015 = vmatprep.subr.mxu0 0.0
  %3016 = vmatpush1.msra.mxu0 0.0
  %3017 = vmatprep.subr.mxu0 0.0
  %3018 = vmatpush1.msra.mxu0 0.0
  %3019 = vmatprep.subr.mxu0 0.0
  %3020 = vmatpush1.msra.mxu0 0.0
  %3021 = vmatprep.subr.mxu0 0.0
  %3022 = vmatpush1.msra.mxu0 0.0
  %3023 = vmatprep.subr.mxu0 0.0
  %3024 = vmatpush1.msra.mxu0 0.0
  %3025 = vmatprep.subr.mxu0 0.0
  %3026 = vmatpush1.msra.mxu0 0.0
  %3027 = vmatprep.subr.mxu0 0.0
  %3028 = vmatpush1.msra.mxu0 0.0
  %3029 = vmatprep.subr.mxu0 0.0
  %3030 = vmatpush1.msra.mxu0 0.0
  %3031 = vmatprep.subr.mxu0 0.0
  %3032 = vmatpush1.msra.mxu0 0.0
  %3033 = vmatprep.subr.mxu0 0.0
  %3034 = vmatpush1.msra.mxu0 %v2998
  %3035 = vmatprep.subr.mxu0 0.0
  %3036 = vmatpush2.msra.mxu0 0.0
  %3037 = vmatprep.subr.mxu0 0.0
  %3038 = vmatpush2.msra.mxu0 0.0
  %3039 = vmatprep.subr.mxu0 0.0
  %3040 = vmatpush2.msra.mxu0 0.0
  %3041 = vmatprep.subr.mxu0 0.0
  %3042 = vmatpush2.msra.mxu0 0.0
  %3043 = vmatprep.subr.mxu0 0.0
  %3044 = vmatpush2.msra.mxu0 0.0
  %3045 = vmatprep.subr.mxu0 0.0
  %3046 = vmatpush2.msra.mxu0 0.0
  %3047 = vmatprep.subr.mxu0 0.0
  %3048 = vmatpush2.msra.mxu0 0.0
  %3049 = vmatprep.subr.mxu0 0.0
  %3050 = vmatpush2.msra.mxu0 0.0
  %3051 = vmatprep.subr.mxu0 0.0
  %3052 = vmatpush2.msra.mxu0 0.0
  %3053 = vmatprep.subr.mxu0 0.0
  %3054 = vmatpush2.msra.mxu0 0.0
  %3055 = vmatprep.subr.mxu0 0.0
  %3056 = vmatpush2.msra.mxu0 0.0
  %3057 = vmatprep.subr.mxu0 0.0
  %3058 = vmatpush2.msra.mxu0 0.0
  %3059 = vmatprep.subr.mxu0 0.0
  %3060 = vmatpush2.msra.mxu0 0.0
  %3061 = vmatprep.subr.mxu0 0.0
  %3062 = vmatpush2.msra.mxu0 0.0
  %3063 = vmatprep.subr.mxu0 0.0
  %3064 = vmatpush2.msra.mxu0 0.0
  %3065 = vmatprep.subr.mxu0 0.0
  %3066 = vmatpush2.msra.mxu0 0.0
  %3067 = vmatprep.mubr.f32.mxu0 0.0
  %3068 = vmatmul.mubr.f32.gmra.mxu0 %v3001
  %v3069 = vpop.f32.mrf.mxu0
  %v3070 = vadd.f32 0.0, %v3069
  %v3071 = vpop.f32.mrf.mxu0
  %3072 = vdwg.mxu0
  %3073 = vrot.lane.b32.xlu0 %v2284, 64
  %v3074 = vpop.permute.xlu0 %3073
  %v3077 = vsel %vm285, %v2984, 0
  %3079 = vmatprep.subr.mxu0 0.0
  %3080 = vmatpush1.msra.mxu0 0.0
  %3081 = vmatprep.subr.mxu0 0.0
  %3082 = vmatpush1.msra.mxu0 0.0
  %3083 = vmatprep.subr.mxu0 0.0
  %3084 = vmatpush1.msra.mxu0 0.0
  %3085 = vmatprep.subr.mxu0 0.0
  %3086 = vmatpush1.msra.mxu0 0.0
  %3087 = vmatprep.subr.mxu0 0.0
  %3088 = vmatpush1.msra.mxu0 0.0
  %3089 = vmatprep.subr.mxu0 0.0
  %3090 = vmatpush1.msra.mxu0 0.0
  %3091 = vmatprep.subr.mxu0 0.0
  %3092 = vmatpush1.msra.mxu0 0.0
  %3093 = vmatprep.subr.mxu0 0.0
  %3094 = vmatpush1.msra.mxu0 0.0
  %3095 = vmatprep.subr.mxu0 0.0
  %3096 = vmatpush1.msra.mxu0 0.0
  %3097 = vmatprep.subr.mxu0 0.0
  %3098 = vmatpush1.msra.mxu0 0.0
  %3099 = vmatprep.subr.mxu0 0.0
  %3100 = vmatpush1.msra.mxu0 0.0
  %3101 = vmatprep.subr.mxu0 0.0
  %3102 = vmatpush1.msra.mxu0 0.0
  %3103 = vmatprep.subr.mxu0 0.0
  %3104 = vmatpush1.msra.mxu0 0.0
  %3105 = vmatprep.subr.mxu0 0.0
  %3106 = vmatpush1.msra.mxu0 0.0
  %3107 = vmatprep.subr.mxu0 0.0
  %3108 = vmatpush1.msra.mxu0 0.0
  %3109 = vmatprep.subr.mxu0 0.0
  %3110 = vmatpush1.msra.mxu0 %v3074
  %3111 = vmatprep.subr.mxu0 0.0
  %3112 = vmatpush2.msra.mxu0 0.0
  %3113 = vmatprep.subr.mxu0 0.0
  %3114 = vmatpush2.msra.mxu0 0.0
  %3115 = vmatprep.subr.mxu0 0.0
  %3116 = vmatpush2.msra.mxu0 0.0
  %3117 = vmatprep.subr.mxu0 0.0
  %3118 = vmatpush2.msra.mxu0 0.0
  %3119 = vmatprep.subr.mxu0 0.0
  %3120 = vmatpush2.msra.mxu0 0.0
  %3121 = vmatprep.subr.mxu0 0.0
  %3122 = vmatpush2.msra.mxu0 0.0
  %3123 = vmatprep.subr.mxu0 0.0
  %3124 = vmatpush2.msra.mxu0 0.0
  %3125 = vmatprep.subr.mxu0 0.0
  %3126 = vmatpush2.msra.mxu0 0.0
  %3127 = vmatprep.subr.mxu0 0.0
  %3128 = vmatpush2.msra.mxu0 0.0
  %3129 = vmatprep.subr.mxu0 0.0
  %3130 = vmatpush2.msra.mxu0 0.0
  %3131 = vmatprep.subr.mxu0 0.0
  %3132 = vmatpush2.msra.mxu0 0.0
  %3133 = vmatprep.subr.mxu0 0.0
  %3134 = vmatpush2.msra.mxu0 0.0
  %3135 = vmatprep.subr.mxu0 0.0
  %3136 = vmatpush2.msra.mxu0 0.0
  %3137 = vmatprep.subr.mxu0 0.0
  %3138 = vmatpush2.msra.mxu0 0.0
  %3139 = vmatprep.subr.mxu0 0.0
  %3140 = vmatpush2.msra.mxu0 0.0
  %3141 = vmatprep.subr.mxu0 0.0
  %3142 = vmatpush2.msra.mxu0 0.0
  %3143 = vmatprep.mubr.f32.mxu0 0.0
  %3144 = vmatmul.mubr.f32.gmra.mxu0 %v3077
  %v3145 = vpop.f32.mrf.mxu0
  %v3146 = vadd.f32 0.0, %v3145
  %v3147 = vpop.f32.mrf.mxu0
  %3148 = vdwg.mxu0
  %3149 = vrot.lane.b32.xlu0 %v2290, 64
  %v3150 = vpop.permute.xlu0 %3149
  %v3153 = vsel %vm285, %v2986, 0
  %3155 = vmatprep.subr.mxu0 0.0
  %3156 = vmatpush1.msra.mxu0 0.0
  %3157 = vmatprep.subr.mxu0 0.0
  %3158 = vmatpush1.msra.mxu0 0.0
  %3159 = vmatprep.subr.mxu0 0.0
  %3160 = vmatpush1.msra.mxu0 0.0
  %3161 = vmatprep.subr.mxu0 0.0
  %3162 = vmatpush1.msra.mxu0 0.0
  %3163 = vmatprep.subr.mxu0 0.0
  %3164 = vmatpush1.msra.mxu0 0.0
  %3165 = vmatprep.subr.mxu0 0.0
  %3166 = vmatpush1.msra.mxu0 0.0
  %3167 = vmatprep.subr.mxu0 0.0
  %3168 = vmatpush1.msra.mxu0 0.0
  %3169 = vmatprep.subr.mxu0 0.0
  %3170 = vmatpush1.msra.mxu0 0.0
  %3171 = vmatprep.subr.mxu0 0.0
  %3172 = vmatpush1.msra.mxu0 0.0
  %3173 = vmatprep.subr.mxu0 0.0
  %3174 = vmatpush1.msra.mxu0 0.0
  %3175 = vmatprep.subr.mxu0 0.0
  %3176 = vmatpush1.msra.mxu0 0.0
  %3177 = vmatprep.subr.mxu0 0.0
  %3178 = vmatpush1.msra.mxu0 0.0
  %3179 = vmatprep.subr.mxu0 0.0
  %3180 = vmatpush1.msra.mxu0 0.0
  %3181 = vmatprep.subr.mxu0 0.0
  %3182 = vmatpush1.msra.mxu0 0.0
  %3183 = vmatprep.subr.mxu0 0.0
  %3184 = vmatpush1.msra.mxu0 0.0
  %3185 = vmatprep.subr.mxu0 0.0
  %3186 = vmatpush1.msra.mxu0 %v3150
  %3187 = vmatprep.subr.mxu0 0.0
  %3188 = vmatpush2.msra.mxu0 0.0
  %3189 = vmatprep.subr.mxu0 0.0
  %3190 = vmatpush2.msra.mxu0 0.0
  %3191 = vmatprep.subr.mxu0 0.0
  %3192 = vmatpush2.msra.mxu0 0.0
  %3193 = vmatprep.subr.mxu0 0.0
  %3194 = vmatpush2.msra.mxu0 0.0
  %3195 = vmatprep.subr.mxu0 0.0
  %3196 = vmatpush2.msra.mxu0 0.0
  %3197 = vmatprep.subr.mxu0 0.0
  %3198 = vmatpush2.msra.mxu0 0.0
  %3199 = vmatprep.subr.mxu0 0.0
  %3200 = vmatpush2.msra.mxu0 0.0
  %3201 = vmatprep.subr.mxu0 0.0
  %3202 = vmatpush2.msra.mxu0 0.0
  %3203 = vmatprep.subr.mxu0 0.0
  %3204 = vmatpush2.msra.mxu0 0.0
  %3205 = vmatprep.subr.mxu0 0.0
  %3206 = vmatpush2.msra.mxu0 0.0
  %3207 = vmatprep.subr.mxu0 0.0
  %3208 = vmatpush2.msra.mxu0 0.0
  %3209 = vmatprep.subr.mxu0 0.0
  %3210 = vmatpush2.msra.mxu0 0.0
  %3211 = vmatprep.subr.mxu0 0.0
  %3212 = vmatpush2.msra.mxu0 0.0
  %3213 = vmatprep.subr.mxu0 0.0
  %3214 = vmatpush2.msra.mxu0 0.0
  %3215 = vmatprep.subr.mxu0 0.0
  %3216 = vmatpush2.msra.mxu0 0.0
  %3217 = vmatprep.subr.mxu0 0.0
  %3218 = vmatpush2.msra.mxu0 0.0
  %3219 = vmatprep.mubr.f32.mxu0 0.0
  %3220 = vmatmul.mubr.f32.gmra.mxu0 %v3153
  %v3221 = vpop.f32.mrf.mxu0
  %v3222 = vadd.f32 0.0, %v3221
  %v3223 = vpop.f32.mrf.mxu0
  %3224 = vdwg.mxu0
  %3225 = vrot.lane.b32.xlu0 %v2292, 64
  %v3226 = vpop.permute.xlu0 %3225
  %v3229 = vsel %vm285, %v2988, 0
  %3231 = vmatprep.subr.mxu0 0.0
  %3232 = vmatpush1.msra.mxu0 0.0
  %3233 = vmatprep.subr.mxu0 0.0
  %3234 = vmatpush1.msra.mxu0 0.0
  %3235 = vmatprep.subr.mxu0 0.0
  %3236 = vmatpush1.msra.mxu0 0.0
  %3237 = vmatprep.subr.mxu0 0.0
  %3238 = vmatpush1.msra.mxu0 0.0
  %3239 = vmatprep.subr.mxu0 0.0
  %3240 = vmatpush1.msra.mxu0 0.0
  %3241 = vmatprep.subr.mxu0 0.0
  %3242 = vmatpush1.msra.mxu0 0.0
  %3243 = vmatprep.subr.mxu0 0.0
  %3244 = vmatpush1.msra.mxu0 0.0
  %3245 = vmatprep.subr.mxu0 0.0
  %3246 = vmatpush1.msra.mxu0 0.0
  %3247 = vmatprep.subr.mxu0 0.0
  %3248 = vmatpush1.msra.mxu0 0.0
  %3249 = vmatprep.subr.mxu0 0.0
  %3250 = vmatpush1.msra.mxu0 0.0
  %3251 = vmatprep.subr.mxu0 0.0
  %3252 = vmatpush1.msra.mxu0 0.0
  %3253 = vmatprep.subr.mxu0 0.0
  %3254 = vmatpush1.msra.mxu0 0.0
  %3255 = vmatprep.subr.mxu0 0.0
  %3256 = vmatpush1.msra.mxu0 0.0
  %3257 = vmatprep.subr.mxu0 0.0
  %3258 = vmatpush1.msra.mxu0 0.0
  %3259 = vmatprep.subr.mxu0 0.0
  %3260 = vmatpush1.msra.mxu0 0.0
  %3261 = vmatprep.subr.mxu0 0.0
  %3262 = vmatpush1.msra.mxu0 %v3226
  %3263 = vmatprep.subr.mxu0 0.0
  %3264 = vmatpush2.msra.mxu0 0.0
  %3265 = vmatprep.subr.mxu0 0.0
  %3266 = vmatpush2.msra.mxu0 0.0
  %3267 = vmatprep.subr.mxu0 0.0
  %3268 = vmatpush2.msra.mxu0 0.0
  %3269 = vmatprep.subr.mxu0 0.0
  %3270 = vmatpush2.msra.mxu0 0.0
  %3271 = vmatprep.subr.mxu0 0.0
  %3272 = vmatpush2.msra.mxu0 0.0
  %3273 = vmatprep.subr.mxu0 0.0
  %3274 = vmatpush2.msra.mxu0 0.0
  %3275 = vmatprep.subr.mxu0 0.0
  %3276 = vmatpush2.msra.mxu0 0.0
  %3277 = vmatprep.subr.mxu0 0.0
  %3278 = vmatpush2.msra.mxu0 0.0
  %3279 = vmatprep.subr.mxu0 0.0
  %3280 = vmatpush2.msra.mxu0 0.0
  %3281 = vmatprep.subr.mxu0 0.0
  %3282 = vmatpush2.msra.mxu0 0.0
  %3283 = vmatprep.subr.mxu0 0.0
  %3284 = vmatpush2.msra.mxu0 0.0
  %3285 = vmatprep.subr.mxu0 0.0
  %3286 = vmatpush2.msra.mxu0 0.0
  %3287 = vmatprep.subr.mxu0 0.0
  %3288 = vmatpush2.msra.mxu0 0.0
  %3289 = vmatprep.subr.mxu0 0.0
  %3290 = vmatpush2.msra.mxu0 0.0
  %3291 = vmatprep.subr.mxu0 0.0
  %3292 = vmatpush2.msra.mxu0 0.0
  %3293 = vmatprep.subr.mxu0 0.0
  %3294 = vmatpush2.msra.mxu0 0.0
  %3295 = vmatprep.mubr.f32.mxu0 0.0
  %3296 = vmatmul.mubr.f32.gmra.mxu0 %v3229
  %v3297 = vpop.f32.mrf.mxu0
  %v3298 = vadd.f32 0.0, %v3297
  %v3299 = vpop.f32.mrf.mxu0
  %3300 = vdwg.mxu0
  %3301 = vrot.lane.b32.xlu0 %v2294, 64
  %v3302 = vpop.permute.xlu0 %3301
  %v3305 = vsel %vm285, %v2990, 0
  %3307 = vmatprep.subr.mxu0 0.0
  %3308 = vmatpush1.msra.mxu0 0.0
  %3309 = vmatprep.subr.mxu0 0.0
  %3310 = vmatpush1.msra.mxu0 0.0
  %3311 = vmatprep.subr.mxu0 0.0
  %3312 = vmatpush1.msra.mxu0 0.0
  %3313 = vmatprep.subr.mxu0 0.0
  %3314 = vmatpush1.msra.mxu0 0.0
  %3315 = vmatprep.subr.mxu0 0.0
  %3316 = vmatpush1.msra.mxu0 0.0
  %3317 = vmatprep.subr.mxu0 0.0
  %3318 = vmatpush1.msra.mxu0 0.0
  %3319 = vmatprep.subr.mxu0 0.0
  %3320 = vmatpush1.msra.mxu0 0.0
  %3321 = vmatprep.subr.mxu0 0.0
  %3322 = vmatpush1.msra.mxu0 0.0
  %3323 = vmatprep.subr.mxu0 0.0
  %3324 = vmatpush1.msra.mxu0 0.0
  %3325 = vmatprep.subr.mxu0 0.0
  %3326 = vmatpush1.msra.mxu0 0.0
  %3327 = vmatprep.subr.mxu0 0.0
  %3328 = vmatpush1.msra.mxu0 0.0
  %3329 = vmatprep.subr.mxu0 0.0
  %3330 = vmatpush1.msra.mxu0 0.0
  %3331 = vmatprep.subr.mxu0 0.0
  %3332 = vmatpush1.msra.mxu0 0.0
  %3333 = vmatprep.subr.mxu0 0.0
  %3334 = vmatpush1.msra.mxu0 0.0
  %3335 = vmatprep.subr.mxu0 0.0
  %3336 = vmatpush1.msra.mxu0 0.0
  %3337 = vmatprep.subr.mxu0 0.0
  %3338 = vmatpush1.msra.mxu0 %v3302
  %3339 = vmatprep.subr.mxu0 0.0
  %3340 = vmatpush2.msra.mxu0 0.0
  %3341 = vmatprep.subr.mxu0 0.0
  %3342 = vmatpush2.msra.mxu0 0.0
  %3343 = vmatprep.subr.mxu0 0.0
  %3344 = vmatpush2.msra.mxu0 0.0
  %3345 = vmatprep.subr.mxu0 0.0
  %3346 = vmatpush2.msra.mxu0 0.0
  %3347 = vmatprep.subr.mxu0 0.0
  %3348 = vmatpush2.msra.mxu0 0.0
  %3349 = vmatprep.subr.mxu0 0.0
  %3350 = vmatpush2.msra.mxu0 0.0
  %3351 = vmatprep.subr.mxu0 0.0
  %3352 = vmatpush2.msra.mxu0 0.0
  %3353 = vmatprep.subr.mxu0 0.0
  %3354 = vmatpush2.msra.mxu0 0.0
  %3355 = vmatprep.subr.mxu0 0.0
  %3356 = vmatpush2.msra.mxu0 0.0
  %3357 = vmatprep.subr.mxu0 0.0
  %3358 = vmatpush2.msra.mxu0 0.0
  %3359 = vmatprep.subr.mxu0 0.0
  %3360 = vmatpush2.msra.mxu0 0.0
  %3361 = vmatprep.subr.mxu0 0.0
  %3362 = vmatpush2.msra.mxu0 0.0
  %3363 = vmatprep.subr.mxu0 0.0
  %3364 = vmatpush2.msra.mxu0 0.0
  %3365 = vmatprep.subr.mxu0 0.0
  %3366 = vmatpush2.msra.mxu0 0.0
  %3367 = vmatprep.subr.mxu0 0.0
  %3368 = vmatpush2.msra.mxu0 0.0
  %3369 = vmatprep.subr.mxu0 0.0
  %3370 = vmatpush2.msra.mxu0 0.0
  %3371 = vmatprep.mubr.f32.mxu0 0.0
  %3372 = vmatmul.mubr.f32.gmra.mxu0 %v3305
  %v3373 = vpop.f32.mrf.mxu0
  %v3374 = vadd.f32 0.0, %v3373
  %v3375 = vpop.f32.mrf.mxu0
  %3376 = vdwg.mxu0
  %3377 = vrot.lane.b32.xlu0 %v2296, 64
  %v3378 = vpop.permute.xlu0 %3377
  %v3381 = vsel %vm285, %v2992, 0
  %3383 = vmatprep.subr.mxu0 0.0
  %3384 = vmatpush1.msra.mxu0 0.0
  %3385 = vmatprep.subr.mxu0 0.0
  %3386 = vmatpush1.msra.mxu0 0.0
  %3387 = vmatprep.subr.mxu0 0.0
  %3388 = vmatpush1.msra.mxu0 0.0
  %3389 = vmatprep.subr.mxu0 0.0
  %3390 = vmatpush1.msra.mxu0 0.0
  %3391 = vmatprep.subr.mxu0 0.0
  %3392 = vmatpush1.msra.mxu0 0.0
  %3393 = vmatprep.subr.mxu0 0.0
  %3394 = vmatpush1.msra.mxu0 0.0
  %3395 = vmatprep.subr.mxu0 0.0
  %3396 = vmatpush1.msra.mxu0 0.0
  %3397 = vmatprep.subr.mxu0 0.0
  %3398 = vmatpush1.msra.mxu0 0.0
  %3399 = vmatprep.subr.mxu0 0.0
  %3400 = vmatpush1.msra.mxu0 0.0
  %3401 = vmatprep.subr.mxu0 0.0
  %3402 = vmatpush1.msra.mxu0 0.0
  %3403 = vmatprep.subr.mxu0 0.0
  %3404 = vmatpush1.msra.mxu0 0.0
  %3405 = vmatprep.subr.mxu0 0.0
  %3406 = vmatpush1.msra.mxu0 0.0
  %3407 = vmatprep.subr.mxu0 0.0
  %3408 = vmatpush1.msra.mxu0 0.0
  %3409 = vmatprep.subr.mxu0 0.0
  %3410 = vmatpush1.msra.mxu0 0.0
  %3411 = vmatprep.subr.mxu0 0.0
  %3412 = vmatpush1.msra.mxu0 0.0
  %3413 = vmatprep.subr.mxu0 0.0
  %3414 = vmatpush1.msra.mxu0 %v3378
  %3415 = vmatprep.subr.mxu0 0.0
  %3416 = vmatpush2.msra.mxu0 0.0
  %3417 = vmatprep.subr.mxu0 0.0
  %3418 = vmatpush2.msra.mxu0 0.0
  %3419 = vmatprep.subr.mxu0 0.0
  %3420 = vmatpush2.msra.mxu0 0.0
  %3421 = vmatprep.subr.mxu0 0.0
  %3422 = vmatpush2.msra.mxu0 0.0
  %3423 = vmatprep.subr.mxu0 0.0
  %3424 = vmatpush2.msra.mxu0 0.0
  %3425 = vmatprep.subr.mxu0 0.0
  %3426 = vmatpush2.msra.mxu0 0.0
  %3427 = vmatprep.subr.mxu0 0.0
  %3428 = vmatpush2.msra.mxu0 0.0
  %3429 = vmatprep.subr.mxu0 0.0
  %3430 = vmatpush2.msra.mxu0 0.0
  %3431 = vmatprep.subr.mxu0 0.0
  %3432 = vmatpush2.msra.mxu0 0.0
  %3433 = vmatprep.subr.mxu0 0.0
  %3434 = vmatpush2.msra.mxu0 0.0
  %3435 = vmatprep.subr.mxu0 0.0
  %3436 = vmatpush2.msra.mxu0 0.0
  %3437 = vmatprep.subr.mxu0 0.0
  %3438 = vmatpush2.msra.mxu0 0.0
  %3439 = vmatprep.subr.mxu0 0.0
  %3440 = vmatpush2.msra.mxu0 0.0
  %3441 = vmatprep.subr.mxu0 0.0
  %3442 = vmatpush2.msra.mxu0 0.0
  %3443 = vmatprep.subr.mxu0 0.0
  %3444 = vmatpush2.msra.mxu0 0.0
  %3445 = vmatprep.subr.mxu0 0.0
  %3446 = vmatpush2.msra.mxu0 0.0
  %3447 = vmatprep.mubr.f32.mxu0 0.0
  %3448 = vmatmul.mubr.f32.gmra.mxu0 %v3381
  %v3449 = vpop.f32.mrf.mxu0
  %v3450 = vadd.f32 0.0, %v3449
  %v3451 = vpop.f32.mrf.mxu0
  %3452 = vdwg.mxu0
  %3453 = vrot.lane.b32.xlu0 %v2298, 64
  %v3454 = vpop.permute.xlu0 %3453
  %v3457 = vsel %vm285, %v2994, 0
  %3459 = vmatprep.subr.mxu0 0.0
  %3460 = vmatpush1.msra.mxu0 0.0
  %3461 = vmatprep.subr.mxu0 0.0
  %3462 = vmatpush1.msra.mxu0 0.0
  %3463 = vmatprep.subr.mxu0 0.0
  %3464 = vmatpush1.msra.mxu0 0.0
  %3465 = vmatprep.subr.mxu0 0.0
  %3466 = vmatpush1.msra.mxu0 0.0
  %3467 = vmatprep.subr.mxu0 0.0
  %3468 = vmatpush1.msra.mxu0 0.0
  %3469 = vmatprep.subr.mxu0 0.0
  %3470 = vmatpush1.msra.mxu0 0.0
  %3471 = vmatprep.subr.mxu0 0.0
  %3472 = vmatpush1.msra.mxu0 0.0
  %3473 = vmatprep.subr.mxu0 0.0
  %3474 = vmatpush1.msra.mxu0 0.0
  %3475 = vmatprep.subr.mxu0 0.0
  %3476 = vmatpush1.msra.mxu0 0.0
  %3477 = vmatprep.subr.mxu0 0.0
  %3478 = vmatpush1.msra.mxu0 0.0
  %3479 = vmatprep.subr.mxu0 0.0
  %3480 = vmatpush1.msra.mxu0 0.0
  %3481 = vmatprep.subr.mxu0 0.0
  %3482 = vmatpush1.msra.mxu0 0.0
  %3483 = vmatprep.subr.mxu0 0.0
  %3484 = vmatpush1.msra.mxu0 0.0
  %3485 = vmatprep.subr.mxu0 0.0
  %3486 = vmatpush1.msra.mxu0 0.0
  %3487 = vmatprep.subr.mxu0 0.0
  %3488 = vmatpush1.msra.mxu0 0.0
  %3489 = vmatprep.subr.mxu0 0.0
  %3490 = vmatpush1.msra.mxu0 %v3454
  %3491 = vmatprep.subr.mxu0 0.0
  %3492 = vmatpush2.msra.mxu0 0.0
  %3493 = vmatprep.subr.mxu0 0.0
  %3494 = vmatpush2.msra.mxu0 0.0
  %3495 = vmatprep.subr.mxu0 0.0
  %3496 = vmatpush2.msra.mxu0 0.0
  %3497 = vmatprep.subr.mxu0 0.0
  %3498 = vmatpush2.msra.mxu0 0.0
  %3499 = vmatprep.subr.mxu0 0.0
  %3500 = vmatpush2.msra.mxu0 0.0
  %3501 = vmatprep.subr.mxu0 0.0
  %3502 = vmatpush2.msra.mxu0 0.0
  %3503 = vmatprep.subr.mxu0 0.0
  %3504 = vmatpush2.msra.mxu0 0.0
  %3505 = vmatprep.subr.mxu0 0.0
  %3506 = vmatpush2.msra.mxu0 0.0
  %3507 = vmatprep.subr.mxu0 0.0
  %3508 = vmatpush2.msra.mxu0 0.0
  %3509 = vmatprep.subr.mxu0 0.0
  %3510 = vmatpush2.msra.mxu0 0.0
  %3511 = vmatprep.subr.mxu0 0.0
  %3512 = vmatpush2.msra.mxu0 0.0
  %3513 = vmatprep.subr.mxu0 0.0
  %3514 = vmatpush2.msra.mxu0 0.0
  %3515 = vmatprep.subr.mxu0 0.0
  %3516 = vmatpush2.msra.mxu0 0.0
  %3517 = vmatprep.subr.mxu0 0.0
  %3518 = vmatpush2.msra.mxu0 0.0
  %3519 = vmatprep.subr.mxu0 0.0
  %3520 = vmatpush2.msra.mxu0 0.0
  %3521 = vmatprep.subr.mxu0 0.0
  %3522 = vmatpush2.msra.mxu0 0.0
  %3523 = vmatprep.mubr.f32.mxu0 0.0
  %3524 = vmatmul.mubr.f32.gmra.mxu0 %v3457
  %v3525 = vpop.f32.mrf.mxu0
  %v3526 = vadd.f32 0.0, %v3525
  %v3527 = vpop.f32.mrf.mxu0
  %3528 = vdwg.mxu0
  %3529 = vrot.lane.b32.xlu0 %v2300, 64
  %v3530 = vpop.permute.xlu0 %3529
  %v3533 = vsel %vm285, %v2996, 0
  %3535 = vmatprep.subr.mxu0 0.0
  %3536 = vmatpush1.msra.mxu0 0.0
  %3537 = vmatprep.subr.mxu0 0.0
  %3538 = vmatpush1.msra.mxu0 0.0
  %3539 = vmatprep.subr.mxu0 0.0
  %3540 = vmatpush1.msra.mxu0 0.0
  %3541 = vmatprep.subr.mxu0 0.0
  %3542 = vmatpush1.msra.mxu0 0.0
  %3543 = vmatprep.subr.mxu0 0.0
  %3544 = vmatpush1.msra.mxu0 0.0
  %3545 = vmatprep.subr.mxu0 0.0
  %3546 = vmatpush1.msra.mxu0 0.0
  %3547 = vmatprep.subr.mxu0 0.0
  %3548 = vmatpush1.msra.mxu0 0.0
  %3549 = vmatprep.subr.mxu0 0.0
  %3550 = vmatpush1.msra.mxu0 0.0
  %3551 = vmatprep.subr.mxu0 0.0
  %3552 = vmatpush1.msra.mxu0 0.0
  %3553 = vmatprep.subr.mxu0 0.0
  %3554 = vmatpush1.msra.mxu0 0.0
  %3555 = vmatprep.subr.mxu0 0.0
  %3556 = vmatpush1.msra.mxu0 0.0
  %3557 = vmatprep.subr.mxu0 0.0
  %3558 = vmatpush1.msra.mxu0 0.0
  %3559 = vmatprep.subr.mxu0 0.0
  %3560 = vmatpush1.msra.mxu0 0.0
  %3561 = vmatprep.subr.mxu0 0.0
  %3562 = vmatpush1.msra.mxu0 0.0
  %3563 = vmatprep.subr.mxu0 0.0
  %3564 = vmatpush1.msra.mxu0 0.0
  %3565 = vmatprep.subr.mxu0 0.0
  %3566 = vmatpush1.msra.mxu0 %v3530
  %3567 = vmatprep.subr.mxu0 0.0
  %3568 = vmatpush2.msra.mxu0 0.0
  %3569 = vmatprep.subr.mxu0 0.0
  %3570 = vmatpush2.msra.mxu0 0.0
  %3571 = vmatprep.subr.mxu0 0.0
  %3572 = vmatpush2.msra.mxu0 0.0
  %3573 = vmatprep.subr.mxu0 0.0
  %3574 = vmatpush2.msra.mxu0 0.0
  %3575 = vmatprep.subr.mxu0 0.0
  %3576 = vmatpush2.msra.mxu0 0.0
  %3577 = vmatprep.subr.mxu0 0.0
  %3578 = vmatpush2.msra.mxu0 0.0
  %3579 = vmatprep.subr.mxu0 0.0
  %3580 = vmatpush2.msra.mxu0 0.0
  %3581 = vmatprep.subr.mxu0 0.0
  %3582 = vmatpush2.msra.mxu0 0.0
  %3583 = vmatprep.subr.mxu0 0.0
  %3584 = vmatpush2.msra.mxu0 0.0
  %3585 = vmatprep.subr.mxu0 0.0
  %3586 = vmatpush2.msra.mxu0 0.0
  %3587 = vmatprep.subr.mxu0 0.0
  %3588 = vmatpush2.msra.mxu0 0.0
  %3589 = vmatprep.subr.mxu0 0.0
  %3590 = vmatpush2.msra.mxu0 0.0
  %3591 = vmatprep.subr.mxu0 0.0
  %3592 = vmatpush2.msra.mxu0 0.0
  %3593 = vmatprep.subr.mxu0 0.0
  %3594 = vmatpush2.msra.mxu0 0.0
  %3595 = vmatprep.subr.mxu0 0.0
  %3596 = vmatpush2.msra.mxu0 0.0
  %3597 = vmatprep.subr.mxu0 0.0
  %3598 = vmatpush2.msra.mxu0 0.0
  %3599 = vmatprep.mubr.f32.mxu0 0.0
  %3600 = vmatmul.mubr.f32.gmra.mxu0 %v3533
  %v3601 = vpop.f32.mrf.mxu0
  %v3602 = vadd.f32 0.0, %v3601
  %v3603 = vpop.f32.mrf.mxu0
  %3604 = vdwg.mxu0
  %v3605 = vld [vmem:[%s3 + $0x20] sm:$0xff]
  %v3606 = vld [vmem:[%s3 + $0x28] sm:$0xff]
  %v3608 = vsel %vm285, %v3222, 0
  %v3611 = vsel %vm285, %v3298, 0
  %3613 = vmatprep.subr.mxu0 0.0
  %3614 = vmatpush1.msra.mxu0 0.0
  %3615 = vmatprep.subr.mxu0 0.0
  %3616 = vmatpush1.msra.mxu0 0.0
  %3617 = vmatprep.subr.mxu0 0.0
  %3618 = vmatpush1.msra.mxu0 0.0
  %3619 = vmatprep.subr.mxu0 0.0
  %3620 = vmatpush1.msra.mxu0 0.0
  %3621 = vmatprep.subr.mxu0 0.0
  %3622 = vmatpush1.msra.mxu0 0.0
  %3623 = vmatprep.subr.mxu0 0.0
  %3624 = vmatpush1.msra.mxu0 0.0
  %3625 = vmatprep.subr.mxu0 0.0
  %3626 = vmatpush1.msra.mxu0 0.0
  %3627 = vmatprep.subr.mxu0 0.0
  %3628 = vmatpush1.msra.mxu0 0.0
  %3629 = vmatprep.subr.mxu0 0.0
  %3630 = vmatpush1.msra.mxu0 0.0
  %3631 = vmatprep.subr.mxu0 0.0
  %3632 = vmatpush1.msra.mxu0 0.0
  %3633 = vmatprep.subr.mxu0 0.0
  %3634 = vmatpush1.msra.mxu0 0.0
  %3635 = vmatprep.subr.mxu0 0.0
  %3636 = vmatpush1.msra.mxu0 0.0
  %3637 = vmatprep.subr.mxu0 0.0
  %3638 = vmatpush1.msra.mxu0 0.0
  %3639 = vmatprep.subr.mxu0 0.0
  %3640 = vmatpush1.msra.mxu0 0.0
  %3641 = vmatprep.subr.mxu0 0.0
  %3642 = vmatpush1.msra.mxu0 0.0
  %3643 = vmatprep.subr.mxu0 0.0
  %3644 = vmatpush1.msra.mxu0 %v3606
  %3645 = vmatprep.subr.mxu0 0.0
  %3646 = vmatpush2.msra.mxu0 0.0
  %3647 = vmatprep.subr.mxu0 0.0
  %3648 = vmatpush2.msra.mxu0 0.0
  %3649 = vmatprep.subr.mxu0 0.0
  %3650 = vmatpush2.msra.mxu0 0.0
  %3651 = vmatprep.subr.mxu0 0.0
  %3652 = vmatpush2.msra.mxu0 0.0
  %3653 = vmatprep.subr.mxu0 0.0
  %3654 = vmatpush2.msra.mxu0 0.0
  %3655 = vmatprep.subr.mxu0 0.0
  %3656 = vmatpush2.msra.mxu0 0.0
  %3657 = vmatprep.subr.mxu0 0.0
  %3658 = vmatpush2.msra.mxu0 0.0
  %3659 = vmatprep.subr.mxu0 0.0
  %3660 = vmatpush2.msra.mxu0 0.0
  %3661 = vmatprep.subr.mxu0 0.0
  %3662 = vmatpush2.msra.mxu0 0.0
  %3663 = vmatprep.subr.mxu0 0.0
  %3664 = vmatpush2.msra.mxu0 0.0
  %3665 = vmatprep.subr.mxu0 0.0
  %3666 = vmatpush2.msra.mxu0 0.0
  %3667 = vmatprep.subr.mxu0 0.0
  %3668 = vmatpush2.msra.mxu0 0.0
  %3669 = vmatprep.subr.mxu0 0.0
  %3670 = vmatpush2.msra.mxu0 0.0
  %3671 = vmatprep.subr.mxu0 0.0
  %3672 = vmatpush2.msra.mxu0 0.0
  %3673 = vmatprep.subr.mxu0 0.0
  %3674 = vmatpush2.msra.mxu0 0.0
  %3675 = vmatprep.subr.mxu0 0.0
  %3676 = vmatpush2.msra.mxu0 0.0
  %3677 = vmatprep.mubr.f32.mxu0 0.0
  %3678 = vmatmul.mubr.f32.gmra.mxu0 %v3608
  %v3679 = vpop.f32.mrf.mxu0
  %v3680 = vadd.f32 0.0, %v3679
  %v3681 = vpop.f32.mrf.mxu0
  %3682 = vmatprep.mubr.f32.mxu0 0.0
  %3683 = vmatmul.mubr.f32.gmra.mxu0 %v3611
  %v3684 = vpop.f32.mrf.mxu0
  %v3685 = vadd.f32 0.0, %v3684
  %v3686 = vpop.f32.mrf.mxu0
  %3687 = vdwg.mxu0
  %v3689 = vsel %vm285, %v3070, 0
  %v3692 = vsel %vm285, %v3146, 0
  %3694 = vmatprep.subr.mxu0 0.0
  %3695 = vmatpush1.msra.mxu0 0.0
  %3696 = vmatprep.subr.mxu0 0.0
  %3697 = vmatpush1.msra.mxu0 0.0
  %3698 = vmatprep.subr.mxu0 0.0
  %3699 = vmatpush1.msra.mxu0 0.0
  %3700 = vmatprep.subr.mxu0 0.0
  %3701 = vmatpush1.msra.mxu0 0.0
  %3702 = vmatprep.subr.mxu0 0.0
  %3703 = vmatpush1.msra.mxu0 0.0
  %3704 = vmatprep.subr.mxu0 0.0
  %3705 = vmatpush1.msra.mxu0 0.0
  %3706 = vmatprep.subr.mxu0 0.0
  %3707 = vmatpush1.msra.mxu0 0.0
  %3708 = vmatprep.subr.mxu0 0.0
  %3709 = vmatpush1.msra.mxu0 0.0
  %3710 = vmatprep.subr.mxu0 0.0
  %3711 = vmatpush1.msra.mxu0 0.0
  %3712 = vmatprep.subr.mxu0 0.0
  %3713 = vmatpush1.msra.mxu0 0.0
  %3714 = vmatprep.subr.mxu0 0.0
  %3715 = vmatpush1.msra.mxu0 0.0
  %3716 = vmatprep.subr.mxu0 0.0
  %3717 = vmatpush1.msra.mxu0 0.0
  %3718 = vmatprep.subr.mxu0 0.0
  %3719 = vmatpush1.msra.mxu0 0.0
  %3720 = vmatprep.subr.mxu0 0.0
  %3721 = vmatpush1.msra.mxu0 0.0
  %3722 = vmatprep.subr.mxu0 0.0
  %3723 = vmatpush1.msra.mxu0 0.0
  %3724 = vmatprep.subr.mxu0 0.0
  %3725 = vmatpush1.msra.mxu0 %v3605
  %3726 = vmatprep.subr.mxu0 0.0
  %3727 = vmatpush2.msra.mxu0 0.0
  %3728 = vmatprep.subr.mxu0 0.0
  %3729 = vmatpush2.msra.mxu0 0.0
  %3730 = vmatprep.subr.mxu0 0.0
  %3731 = vmatpush2.msra.mxu0 0.0
  %3732 = vmatprep.subr.mxu0 0.0
  %3733 = vmatpush2.msra.mxu0 0.0
  %3734 = vmatprep.subr.mxu0 0.0
  %3735 = vmatpush2.msra.mxu0 0.0
  %3736 = vmatprep.subr.mxu0 0.0
  %3737 = vmatpush2.msra.mxu0 0.0
  %3738 = vmatprep.subr.mxu0 0.0
  %3739 = vmatpush2.msra.mxu0 0.0
  %3740 = vmatprep.subr.mxu0 0.0
  %3741 = vmatpush2.msra.mxu0 0.0
  %3742 = vmatprep.subr.mxu0 0.0
  %3743 = vmatpush2.msra.mxu0 0.0
  %3744 = vmatprep.subr.mxu0 0.0
  %3745 = vmatpush2.msra.mxu0 0.0
  %3746 = vmatprep.subr.mxu0 0.0
  %3747 = vmatpush2.msra.mxu0 0.0
  %3748 = vmatprep.subr.mxu0 0.0
  %3749 = vmatpush2.msra.mxu0 0.0
  %3750 = vmatprep.subr.mxu0 0.0
  %3751 = vmatpush2.msra.mxu0 0.0
  %3752 = vmatprep.subr.mxu0 0.0
  %3753 = vmatpush2.msra.mxu0 0.0
  %3754 = vmatprep.subr.mxu0 0.0
  %3755 = vmatpush2.msra.mxu0 0.0
  %3756 = vmatprep.subr.mxu0 0.0
  %3757 = vmatpush2.msra.mxu0 0.0
  %3758 = vmatprep.mubr.f32.mxu0 0.0
  %3759 = vmatmul.mubr.f32.gmra.mxu0 %v3689
  %v3760 = vpop.f32.mrf.mxu0
  %v3761 = vadd.f32 %v3680, %v3760
  %v3762 = vpop.f32.mrf.mxu0
  %3763 = vmatprep.mubr.f32.mxu0 0.0
  %3764 = vmatmul.mubr.f32.gmra.mxu0 %v3692
  %v3765 = vpop.f32.mrf.mxu0
  %v3766 = vadd.f32 %v3685, %v3765
  %v3767 = vpop.f32.mrf.mxu0
  %3768 = vdwg.mxu0
  %v3769 = vld [vmem:[%s3 + $0x30] sm:$0xff]
  %v3771 = vsel %vm285, %v3374, 0
  %v3774 = vsel %vm285, %v3450, 0
  %3776 = vmatprep.subr.mxu0 0.0
  %3777 = vmatpush1.msra.mxu0 0.0
  %3778 = vmatprep.subr.mxu0 0.0
  %3779 = vmatpush1.msra.mxu0 0.0
  %3780 = vmatprep.subr.mxu0 0.0
  %3781 = vmatpush1.msra.mxu0 0.0
  %3782 = vmatprep.subr.mxu0 0.0
  %3783 = vmatpush1.msra.mxu0 0.0
  %3784 = vmatprep.subr.mxu0 0.0
  %3785 = vmatpush1.msra.mxu0 0.0
  %3786 = vmatprep.subr.mxu0 0.0
  %3787 = vmatpush1.msra.mxu0 0.0
  %3788 = vmatprep.subr.mxu0 0.0
  %3789 = vmatpush1.msra.mxu0 0.0
  %3790 = vmatprep.subr.mxu0 0.0
  %3791 = vmatpush1.msra.mxu0 0.0
  %3792 = vmatprep.subr.mxu0 0.0
  %3793 = vmatpush1.msra.mxu0 0.0
  %3794 = vmatprep.subr.mxu0 0.0
  %3795 = vmatpush1.msra.mxu0 0.0
  %3796 = vmatprep.subr.mxu0 0.0
  %3797 = vmatpush1.msra.mxu0 0.0
  %3798 = vmatprep.subr.mxu0 0.0
  %3799 = vmatpush1.msra.mxu0 0.0
  %3800 = vmatprep.subr.mxu0 0.0
  %3801 = vmatpush1.msra.mxu0 0.0
  %3802 = vmatprep.subr.mxu0 0.0
  %3803 = vmatpush1.msra.mxu0 0.0
  %3804 = vmatprep.subr.mxu0 0.0
  %3805 = vmatpush1.msra.mxu0 0.0
  %3806 = vmatprep.subr.mxu0 0.0
  %3807 = vmatpush1.msra.mxu0 %v3769
  %3808 = vmatprep.subr.mxu0 0.0
  %3809 = vmatpush2.msra.mxu0 0.0
  %3810 = vmatprep.subr.mxu0 0.0
  %3811 = vmatpush2.msra.mxu0 0.0
  %3812 = vmatprep.subr.mxu0 0.0
  %3813 = vmatpush2.msra.mxu0 0.0
  %3814 = vmatprep.subr.mxu0 0.0
  %3815 = vmatpush2.msra.mxu0 0.0
  %3816 = vmatprep.subr.mxu0 0.0
  %3817 = vmatpush2.msra.mxu0 0.0
  %3818 = vmatprep.subr.mxu0 0.0
  %3819 = vmatpush2.msra.mxu0 0.0
  %3820 = vmatprep.subr.mxu0 0.0
  %3821 = vmatpush2.msra.mxu0 0.0
  %3822 = vmatprep.subr.mxu0 0.0
  %3823 = vmatpush2.msra.mxu0 0.0
  %3824 = vmatprep.subr.mxu0 0.0
  %3825 = vmatpush2.msra.mxu0 0.0
  %3826 = vmatprep.subr.mxu0 0.0
  %3827 = vmatpush2.msra.mxu0 0.0
  %3828 = vmatprep.subr.mxu0 0.0
  %3829 = vmatpush2.msra.mxu0 0.0
  %3830 = vmatprep.subr.mxu0 0.0
  %3831 = vmatpush2.msra.mxu0 0.0
  %3832 = vmatprep.subr.mxu0 0.0
  %3833 = vmatpush2.msra.mxu0 0.0
  %3834 = vmatprep.subr.mxu0 0.0
  %3835 = vmatpush2.msra.mxu0 0.0
  %3836 = vmatprep.subr.mxu0 0.0
  %3837 = vmatpush2.msra.mxu0 0.0
  %3838 = vmatprep.subr.mxu0 0.0
  %3839 = vmatpush2.msra.mxu0 0.0
  %3840 = vmatprep.mubr.f32.mxu0 0.0
  %3841 = vmatmul.mubr.f32.gmra.mxu0 %v3771
  %v3842 = vpop.f32.mrf.mxu0
  %v3843 = vadd.f32 0.0, %v3842
  %v3844 = vpop.f32.mrf.mxu0
  %3845 = vmatprep.mubr.f32.mxu0 0.0
  %3846 = vmatmul.mubr.f32.gmra.mxu0 %v3774
  %v3847 = vpop.f32.mrf.mxu0
  %v3848 = vadd.f32 0.0, %v3847
  %v3849 = vpop.f32.mrf.mxu0
  %3850 = vdwg.mxu0
  %v3851 = vadd.f32 %v3761, %v3843
  %v3852 = vadd.f32 %v3766, %v3848
  %v3853 = vld [vmem:[%s3 + $0x38] sm:$0xff]
  %v3855 = vsel %vm285, %v3526, 0
  %v3858 = vsel %vm285, %v3602, 0
  %3860 = vmatprep.subr.mxu0 0.0
  %3861 = vmatpush1.msra.mxu0 0.0
  %3862 = vmatprep.subr.mxu0 0.0
  %3863 = vmatpush1.msra.mxu0 0.0
  %3864 = vmatprep.subr.mxu0 0.0
  %3865 = vmatpush1.msra.mxu0 0.0
  %3866 = vmatprep.subr.mxu0 0.0
  %3867 = vmatpush1.msra.mxu0 0.0
  %3868 = vmatprep.subr.mxu0 0.0
  %3869 = vmatpush1.msra.mxu0 0.0
  %3870 = vmatprep.subr.mxu0 0.0
  %3871 = vmatpush1.msra.mxu0 0.0
  %3872 = vmatprep.subr.mxu0 0.0
  %3873 = vmatpush1.msra.mxu0 0.0
  %3874 = vmatprep.subr.mxu0 0.0
  %3875 = vmatpush1.msra.mxu0 0.0
  %3876 = vmatprep.subr.mxu0 0.0
  %3877 = vmatpush1.msra.mxu0 0.0
  %3878 = vmatprep.subr.mxu0 0.0
  %3879 = vmatpush1.msra.mxu0 0.0
  %3880 = vmatprep.subr.mxu0 0.0
  %3881 = vmatpush1.msra.mxu0 0.0
  %3882 = vmatprep.subr.mxu0 0.0
  %3883 = vmatpush1.msra.mxu0 0.0
  %3884 = vmatprep.subr.mxu0 0.0
  %3885 = vmatpush1.msra.mxu0 0.0
  %3886 = vmatprep.subr.mxu0 0.0
  %3887 = vmatpush1.msra.mxu0 0.0
  %3888 = vmatprep.subr.mxu0 0.0
  %3889 = vmatpush1.msra.mxu0 0.0
  %3890 = vmatprep.subr.mxu0 0.0
  %3891 = vmatpush1.msra.mxu0 %v3853
  %3892 = vmatprep.subr.mxu0 0.0
  %3893 = vmatpush2.msra.mxu0 0.0
  %3894 = vmatprep.subr.mxu0 0.0
  %3895 = vmatpush2.msra.mxu0 0.0
  %3896 = vmatprep.subr.mxu0 0.0
  %3897 = vmatpush2.msra.mxu0 0.0
  %3898 = vmatprep.subr.mxu0 0.0
  %3899 = vmatpush2.msra.mxu0 0.0
  %3900 = vmatprep.subr.mxu0 0.0
  %3901 = vmatpush2.msra.mxu0 0.0
  %3902 = vmatprep.subr.mxu0 0.0
  %3903 = vmatpush2.msra.mxu0 0.0
  %3904 = vmatprep.subr.mxu0 0.0
  %3905 = vmatpush2.msra.mxu0 0.0
  %3906 = vmatprep.subr.mxu0 0.0
  %3907 = vmatpush2.msra.mxu0 0.0
  %3908 = vmatprep.subr.mxu0 0.0
  %3909 = vmatpush2.msra.mxu0 0.0
  %3910 = vmatprep.subr.mxu0 0.0
  %3911 = vmatpush2.msra.mxu0 0.0
  %3912 = vmatprep.subr.mxu0 0.0
  %3913 = vmatpush2.msra.mxu0 0.0
  %3914 = vmatprep.subr.mxu0 0.0
  %3915 = vmatpush2.msra.mxu0 0.0
  %3916 = vmatprep.subr.mxu0 0.0
  %3917 = vmatpush2.msra.mxu0 0.0
  %3918 = vmatprep.subr.mxu0 0.0
  %3919 = vmatpush2.msra.mxu0 0.0
  %3920 = vmatprep.subr.mxu0 0.0
  %3921 = vmatpush2.msra.mxu0 0.0
  %3922 = vmatprep.subr.mxu0 0.0
  %3923 = vmatpush2.msra.mxu0 0.0
  %3924 = vmatprep.mubr.f32.mxu0 0.0
  %3925 = vmatmul.mubr.f32.gmra.mxu0 %v3855
  %v3926 = vpop.f32.mrf.mxu0
  %v3927 = vadd.f32 0.0, %v3926
  %v3928 = vpop.f32.mrf.mxu0
  %3929 = vmatprep.mubr.f32.mxu0 0.0
  %3930 = vmatmul.mubr.f32.gmra.mxu0 %v3858
  %v3931 = vpop.f32.mrf.mxu0
  %v3932 = vadd.f32 0.0, %v3931
  %v3933 = vpop.f32.mrf.mxu0
  %3934 = vdwg.mxu0
  %v3935 = vadd.f32 %v3851, %v3927
  %v3936 = vadd.f32 %v3852, %v3932
  %v3937 = vlaneseq
  %v3938 = vshrl.u32 %v3937, 7
  %v3939 = vsub.s32 0, %v3938
  %v3940 = vrot.slane %v2155, %v3939
  %v3941 = vadd.f32 %v3935, %v3940
  %v3942 = vadd.f32 %v3936, %v3940
  %v3943 = vadd.f32 %v3941, %v2150
  %v3944 = vadd.f32 %v3942, %v2151
  %v3945 = vsel %vm140, %v3943, 0.0
  %3946 = vadd.xlane.f32.xlu0 %v3945
  %v3947 = vpop.xlane.xlu0 %3946
  %v3948 = vsel %vm140, %v3944, 0.0
  %3949 = vadd.xlane.f32.xlu0 %v3948
  %v3950 = vpop.xlane.xlu0 %3949
  %v3951 = vmul.f32 %v3947, %v147
  %v3952 = vmul.f32 %v3950, %v147
  %v3953 = vsub.f32 %v3943, %v3951
  %v3954 = vsub.f32 %v3944, %v3952
  %v3955 = vmul.f32 %v3953, %v3953
  %v3956 = vmul.f32 %v3954, %v3954
  %v3957 = vsel %vm140, %v3955, 0.0
  %3958 = vadd.xlane.f32.xlu0 %v3957
  %v3959 = vpop.xlane.xlu0 %3958
  %v3960 = vsel %vm140, %v3956, 0.0
  %3961 = vadd.xlane.f32.xlu0 %v3960
  %v3962 = vpop.xlane.xlu0 %3961
  %v3963 = vmul.f32 %v3959, %v147
  %v3964 = vmul.f32 %v3962, %v147
  %v3965 = vadd.f32 %v3963, 1e-05
  %v3966 = vadd.f32 %v3964, 1e-05
  %v3967 = vrsqrt.pop %v3965
  %v3968 = vrsqrt.pop %v3966
  %v3969 = vmul.f32 %v3953, %v3967
  %v3970 = vmul.f32 %v3954, %v3968
  %v3971 = vlaneseq
  %v3972 = vshrl.u32 %v3971, 7
  %v3973 = vsub.s32 0, %v3972
  %v3974 = vrot.slane %v2156, %v3973
  %v3975 = vmul.f32 %v3969, %v3974
  %v3976 = vmul.f32 %v3970, %v3974
  %v3977 = vlaneseq
  %v3978 = vshrl.u32 %v3977, 7
  %v3979 = vsub.s32 0, %v3978
  %v3980 = vrot.slane %v2157, %v3979
  %v3981 = vadd.f32 %v3975, %v3980
  %v3982 = vadd.f32 %v3976, %v3980
  %v3983 = vld [vmem:[%s2 + $0x18] sm:$0xff]
  %v3984 = vld [vmem:[%s2 + $0x40] sm:$0xff]
  %v3985 = vld [vmem:[%s2 + $0x68] sm:$0xff]
  %v3986 = vld [vmem:[%s2 + $0x90] sm:$0xff]
  %v3987 = vlaneseq
  %v3988 = vshrl.u32 %v3987, 7
  %v3989 = vsub.s32 0, %v3988
  %v3990 = vrot.slane %v2158, %v3989
  %v3992 = vsel %vm140, %v3981, 0
  %v3995 = vsel %vm140, %v3982, 0
  %3997 = vmatprep.subr.mxu0 0.0
  %3998 = vmatpush1.msra.mxu0 0.0
  %3999 = vmatprep.subr.mxu0 0.0
  %4000 = vmatpush1.msra.mxu0 0.0
  %4001 = vmatprep.subr.mxu0 0.0
  %4002 = vmatpush1.msra.mxu0 0.0
  %4003 = vmatprep.subr.mxu0 0.0
  %4004 = vmatpush1.msra.mxu0 0.0
  %4005 = vmatprep.subr.mxu0 0.0
  %4006 = vmatpush1.msra.mxu0 0.0
  %4007 = vmatprep.subr.mxu0 0.0
  %4008 = vmatpush1.msra.mxu0 0.0
  %4009 = vmatprep.subr.mxu0 0.0
  %4010 = vmatpush1.msra.mxu0 0.0
  %4011 = vmatprep.subr.mxu0 0.0
  %4012 = vmatpush1.msra.mxu0 0.0
  %4013 = vmatprep.subr.mxu0 0.0
  %4014 = vmatpush1.msra.mxu0 0.0
  %4015 = vmatprep.subr.mxu0 0.0
  %4016 = vmatpush1.msra.mxu0 0.0
  %4017 = vmatprep.subr.mxu0 0.0
  %4018 = vmatpush1.msra.mxu0 0.0
  %4019 = vmatprep.subr.mxu0 0.0
  %4020 = vmatpush1.msra.mxu0 0.0
  %4021 = vmatprep.subr.mxu0 0.0
  %4022 = vmatpush1.msra.mxu0 %v3986
  %4023 = vmatprep.subr.mxu0 0.0
  %4024 = vmatpush1.msra.mxu0 %v3985
  %4025 = vmatprep.subr.mxu0 0.0
  %4026 = vmatpush1.msra.mxu0 %v3984
  %4027 = vmatprep.subr.mxu0 0.0
  %4028 = vmatpush1.msra.mxu0 %v3983
  %4029 = vmatprep.subr.mxu0 0.0
  %4030 = vmatpush2.msra.mxu0 0.0
  %4031 = vmatprep.subr.mxu0 0.0
  %4032 = vmatpush2.msra.mxu0 0.0
  %4033 = vmatprep.subr.mxu0 0.0
  %4034 = vmatpush2.msra.mxu0 0.0
  %4035 = vmatprep.subr.mxu0 0.0
  %4036 = vmatpush2.msra.mxu0 0.0
  %4037 = vmatprep.subr.mxu0 0.0
  %4038 = vmatpush2.msra.mxu0 0.0
  %4039 = vmatprep.subr.mxu0 0.0
  %4040 = vmatpush2.msra.mxu0 0.0
  %4041 = vmatprep.subr.mxu0 0.0
  %4042 = vmatpush2.msra.mxu0 0.0
  %4043 = vmatprep.subr.mxu0 0.0
  %4044 = vmatpush2.msra.mxu0 0.0
  %4045 = vmatprep.subr.mxu0 0.0
  %4046 = vmatpush2.msra.mxu0 0.0
  %4047 = vmatprep.subr.mxu0 0.0
  %4048 = vmatpush2.msra.mxu0 0.0
  %4049 = vmatprep.subr.mxu0 0.0
  %4050 = vmatpush2.msra.mxu0 0.0
  %4051 = vmatprep.subr.mxu0 0.0
  %4052 = vmatpush2.msra.mxu0 0.0
  %4053 = vmatprep.subr.mxu0 0.0
  %4054 = vmatpush2.msra.mxu0 0.0
  %4055 = vmatprep.subr.mxu0 0.0
  %4056 = vmatpush2.msra.mxu0 0.0
  %4057 = vmatprep.subr.mxu0 0.0
  %4058 = vmatpush2.msra.mxu0 0.0
  %4059 = vmatprep.subr.mxu0 0.0
  %4060 = vmatpush2.msra.mxu0 0.0
  %4061 = vmatprep.mubr.f32.mxu0 0.0
  %4062 = vmatmul.mubr.f32.gmra.mxu0 %v3992
  %v4063 = vpop.f32.mrf.mxu0
  %v4064 = vadd.f32 %v3990, %v4063
  %v4065 = vpop.f32.mrf.mxu0
  %4066 = vmatprep.mubr.f32.mxu0 0.0
  %4067 = vmatmul.mubr.f32.gmra.mxu0 %v3995
  %v4068 = vpop.f32.mrf.mxu0
  %v4069 = vadd.f32 %v3990, %v4068
  %v4070 = vpop.f32.mrf.mxu0
  %4071 = vdwg.mxu0
  %v4072 = vmax.f32 %v4064, 0.0
  %v4073 = vmax.f32 %v4069, 0.0
  %v4074 = vld [vmem:[%s3 + $0x80] sm:$0xff]
  %v4075 = vld [vmem:[%s3 + $0x88] sm:$0xff]
  %v4076 = vld [vmem:[%s3 + $0x90] sm:$0xff]
  %v4077 = vld [vmem:[%s3 + $0x98] sm:$0xff]
  %v4078 = vld [vmem:[%s3 + $0xa0] sm:$0xff]
  %v4079 = vld [vmem:[%s3 + $0xa8] sm:$0xff]
  %v4080 = vld [vmem:[%s3 + $0xb0] sm:$0xff]
  %v4081 = vld [vmem:[%s3 + $0xb8] sm:$0xff]
  %v4082 = vlaneseq
  %v4083 = vshrl.u32 %v4082, 7
  %v4084 = vsub.s32 0, %v4083
  %v4085 = vrot.slane %v2159, %v4084
  %v4087 = vsel %vm46, %v4072, 0
  %v4090 = vsel %vm46, %v4073, 0
  %4092 = vmatprep.subr.mxu0 0.0
  %4093 = vmatpush1.msra.mxu0 0.0
  %4094 = vmatprep.subr.mxu0 0.0
  %4095 = vmatpush1.msra.mxu0 0.0
  %4096 = vmatprep.subr.mxu0 0.0
  %4097 = vmatpush1.msra.mxu0 0.0
  %4098 = vmatprep.subr.mxu0 0.0
  %4099 = vmatpush1.msra.mxu0 0.0
  %4100 = vmatprep.subr.mxu0 0.0
  %4101 = vmatpush1.msra.mxu0 0.0
  %4102 = vmatprep.subr.mxu0 0.0
  %4103 = vmatpush1.msra.mxu0 0.0
  %4104 = vmatprep.subr.mxu0 0.0
  %4105 = vmatpush1.msra.mxu0 0.0
  %4106 = vmatprep.subr.mxu0 0.0
  %4107 = vmatpush1.msra.mxu0 0.0
  %4108 = vmatprep.subr.mxu0 0.0
  %4109 = vmatpush1.msra.mxu0 %v4081
  %4110 = vmatprep.subr.mxu0 0.0
  %4111 = vmatpush1.msra.mxu0 %v4080
  %4112 = vmatprep.subr.mxu0 0.0
  %4113 = vmatpush1.msra.mxu0 %v4079
  %4114 = vmatprep.subr.mxu0 0.0
  %4115 = vmatpush1.msra.mxu0 %v4078
  %4116 = vmatprep.subr.mxu0 0.0
  %4117 = vmatpush1.msra.mxu0 %v4077
  %4118 = vmatprep.subr.mxu0 0.0
  %4119 = vmatpush1.msra.mxu0 %v4076
  %4120 = vmatprep.subr.mxu0 0.0
  %4121 = vmatpush1.msra.mxu0 %v4075
  %4122 = vmatprep.subr.mxu0 0.0
  %4123 = vmatpush1.msra.mxu0 %v4074
  %4124 = vmatprep.subr.mxu0 0.0
  %4125 = vmatpush2.msra.mxu0 0.0
  %4126 = vmatprep.subr.mxu0 0.0
  %4127 = vmatpush2.msra.mxu0 0.0
  %4128 = vmatprep.subr.mxu0 0.0
  %4129 = vmatpush2.msra.mxu0 0.0
  %4130 = vmatprep.subr.mxu0 0.0
  %4131 = vmatpush2.msra.mxu0 0.0
  %4132 = vmatprep.subr.mxu0 0.0
  %4133 = vmatpush2.msra.mxu0 0.0
  %4134 = vmatprep.subr.mxu0 0.0
  %4135 = vmatpush2.msra.mxu0 0.0
  %4136 = vmatprep.subr.mxu0 0.0
  %4137 = vmatpush2.msra.mxu0 0.0
  %4138 = vmatprep.subr.mxu0 0.0
  %4139 = vmatpush2.msra.mxu0 0.0
  %4140 = vmatprep.subr.mxu0 0.0
  %4141 = vmatpush2.msra.mxu0 0.0
  %4142 = vmatprep.subr.mxu0 0.0
  %4143 = vmatpush2.msra.mxu0 0.0
  %4144 = vmatprep.subr.mxu0 0.0
  %4145 = vmatpush2.msra.mxu0 0.0
  %4146 = vmatprep.subr.mxu0 0.0
  %4147 = vmatpush2.msra.mxu0 0.0
  %4148 = vmatprep.subr.mxu0 0.0
  %4149 = vmatpush2.msra.mxu0 0.0
  %4150 = vmatprep.subr.mxu0 0.0
  %4151 = vmatpush2.msra.mxu0 0.0
  %4152 = vmatprep.subr.mxu0 0.0
  %4153 = vmatpush2.msra.mxu0 0.0
  %4154 = vmatprep.subr.mxu0 0.0
  %4155 = vmatpush2.msra.mxu0 0.0
  %4156 = vmatprep.mubr.f32.mxu0 0.0
  %4157 = vmatmul.mubr.f32.gmra.mxu0 %v4087
  %v4158 = vpop.f32.mrf.mxu0
  %v4159 = vadd.f32 %v4085, %v4158
  %v4160 = vpop.f32.mrf.mxu0
  %4161 = vmatprep.mubr.f32.mxu0 0.0
  %4162 = vmatmul.mubr.f32.gmra.mxu0 %v4090
  %v4163 = vpop.f32.mrf.mxu0
  %v4164 = vadd.f32 %v4085, %v4163
  %v4165 = vpop.f32.mrf.mxu0
  %4166 = vdwg.mxu0
  %v4167 = vadd.f32 %v4159, %v3943
  %v4168 = vadd.f32 %v4164, %v3944
  %v4169 = vld [vmem:[%s4 + $0x10] sm:$0x1]
  %v4170 = vld [vmem:[%s4 + $0x11] sm:$0x1]
  %v4171 = vsel %vm140, %v4167, 0.0
  %4172 = vadd.xlane.f32.xlu0 %v4171
  %v4173 = vpop.xlane.xlu0 %4172
  %v4174 = vsel %vm140, %v4168, 0.0
  %4175 = vadd.xlane.f32.xlu0 %v4174
  %v4176 = vpop.xlane.xlu0 %4175
  %v4177 = vmul.f32 %v4173, %v147
  %v4178 = vmul.f32 %v4176, %v147
  %v4179 = vsub.f32 %v4167, %v4177
  %v4180 = vsub.f32 %v4168, %v4178
  %v4181 = vmul.f32 %v4179, %v4179
  %v4182 = vmul.f32 %v4180, %v4180
  %v4183 = vsel %vm140, %v4181, 0.0
  %4184 = vadd.xlane.f32.xlu0 %v4183
  %v4185 = vpop.xlane.xlu0 %4184
  %v4186 = vsel %vm140, %v4182, 0.0
  %4187 = vadd.xlane.f32.xlu0 %v4186
  %v4188 = vpop.xlane.xlu0 %4187
  %v4189 = vmul.f32 %v4185, %v147
  %v4190 = vmul.f32 %v4188, %v147
  %v4191 = vadd.f32 %v4189, 1e-05
  %v4192 = vadd.f32 %v4190, 1e-05
  %v4193 = vrsqrt.pop %v4191
  %v4194 = vrsqrt.pop %v4192
  %v4195 = vmul.f32 %v4179, %v4193
  %v4196 = vmul.f32 %v4180, %v4194
  %v4197 = vlaneseq
  %v4198 = vshrl.u32 %v4197, 7
  %v4199 = vsub.s32 0, %v4198
  %v4200 = vrot.slane %v4169, %v4199
  %v4201 = vmul.f32 %v4195, %v4200
  %v4202 = vmul.f32 %v4196, %v4200
  %v4203 = vlaneseq
  %v4204 = vshrl.u32 %v4203, 7
  %v4205 = vsub.s32 0, %v4204
  %v4206 = vrot.slane %v4170, %v4205
  %v4207 = vadd.f32 %v4201, %v4206
  %v4208 = vadd.f32 %v4202, %v4206
  %v4209 = vld [vmem:[%s2 + $0x20] sm:$0xff]
  %v4210 = vld [vmem:[%s2 + $0x48] sm:$0xff]
  %v4211 = vld [vmem:[%s2 + $0x70] sm:$0xff]
  %v4212 = vld [vmem:[%s2 + $0x98] sm:$0xff]
  %v4214 = vsel %vm140, %v4207, 0
  %v4217 = vsel %vm140, %v4208, 0
  %4219 = vmatprep.subr.mxu0 0.0
  %4220 = vmatpush1.msra.mxu0 0.0
  %4221 = vmatprep.subr.mxu0 0.0
  %4222 = vmatpush1.msra.mxu0 0.0
  %4223 = vmatprep.subr.mxu0 0.0
  %4224 = vmatpush1.msra.mxu0 0.0
  %4225 = vmatprep.subr.mxu0 0.0
  %4226 = vmatpush1.msra.mxu0 0.0
  %4227 = vmatprep.subr.mxu0 0.0
  %4228 = vmatpush1.msra.mxu0 0.0
  %4229 = vmatprep.subr.mxu0 0.0
  %4230 = vmatpush1.msra.mxu0 0.0
  %4231 = vmatprep.subr.mxu0 0.0
  %4232 = vmatpush1.msra.mxu0 0.0
  %4233 = vmatprep.subr.mxu0 0.0
  %4234 = vmatpush1.msra.mxu0 0.0
  %4235 = vmatprep.subr.mxu0 0.0
  %4236 = vmatpush1.msra.mxu0 0.0
  %4237 = vmatprep.subr.mxu0 0.0
  %4238 = vmatpush1.msra.mxu0 0.0
  %4239 = vmatprep.subr.mxu0 0.0
  %4240 = vmatpush1.msra.mxu0 0.0
  %4241 = vmatprep.subr.mxu0 0.0
  %4242 = vmatpush1.msra.mxu0 0.0
  %4243 = vmatprep.subr.mxu0 0.0
  %4244 = vmatpush1.msra.mxu0 %v4212
  %4245 = vmatprep.subr.mxu0 0.0
  %4246 = vmatpush1.msra.mxu0 %v4211
  %4247 = vmatprep.subr.mxu0 0.0
  %4248 = vmatpush1.msra.mxu0 %v4210
  %4249 = vmatprep.subr.mxu0 0.0
  %4250 = vmatpush1.msra.mxu0 %v4209
  %4251 = vmatprep.subr.mxu0 0.0
  %4252 = vmatpush2.msra.mxu0 0.0
  %4253 = vmatprep.subr.mxu0 0.0
  %4254 = vmatpush2.msra.mxu0 0.0
  %4255 = vmatprep.subr.mxu0 0.0
  %4256 = vmatpush2.msra.mxu0 0.0
  %4257 = vmatprep.subr.mxu0 0.0
  %4258 = vmatpush2.msra.mxu0 0.0
  %4259 = vmatprep.subr.mxu0 0.0
  %4260 = vmatpush2.msra.mxu0 0.0
  %4261 = vmatprep.subr.mxu0 0.0
  %4262 = vmatpush2.msra.mxu0 0.0
  %4263 = vmatprep.subr.mxu0 0.0
  %4264 = vmatpush2.msra.mxu0 0.0
  %4265 = vmatprep.subr.mxu0 0.0
  %4266 = vmatpush2.msra.mxu0 0.0
  %4267 = vmatprep.subr.mxu0 0.0
  %4268 = vmatpush2.msra.mxu0 0.0
  %4269 = vmatprep.subr.mxu0 0.0
  %4270 = vmatpush2.msra.mxu0 0.0
  %4271 = vmatprep.subr.mxu0 0.0
  %4272 = vmatpush2.msra.mxu0 0.0
  %4273 = vmatprep.subr.mxu0 0.0
  %4274 = vmatpush2.msra.mxu0 0.0
  %4275 = vmatprep.subr.mxu0 0.0
  %4276 = vmatpush2.msra.mxu0 0.0
  %4277 = vmatprep.subr.mxu0 0.0
  %4278 = vmatpush2.msra.mxu0 0.0
  %4279 = vmatprep.subr.mxu0 0.0
  %4280 = vmatpush2.msra.mxu0 0.0
  %4281 = vmatprep.subr.mxu0 0.0
  %4282 = vmatpush2.msra.mxu0 0.0
  %4283 = vmatprep.mubr.f32.mxu0 0.0
  %4284 = vmatmul.mubr.f32.gmra.mxu0 %v4214
  %v4285 = vpop.f32.mrf.mxu0
  %v4286 = vadd.f32 0.0, %v4285
  %v4287 = vpop.f32.mrf.mxu0
  %4288 = vmatprep.mubr.f32.mxu0 0.0
  %4289 = vmatmul.mubr.f32.gmra.mxu0 %v4217
  %v4290 = vpop.f32.mrf.mxu0
  %v4291 = vadd.f32 0.0, %v4290
  %v4292 = vpop.f32.mrf.mxu0
  %4293 = vdwg.mxu0
  %4294 = vst [vmem:[%s5] sm:$0xff] %v4286
  %4295 = vst [vmem:[%s5 + $0x8] sm:$0xff] %v4291
  // Predicated region
  $region22: #{gpt_forward.1} parent=0 // pred_check
    _
  $region23: #{gpt_forward.1} parent=0 // pred_check_branch
    %4297 = sbr.rel (0) target = $region25
  $region24: #{gpt_forward.1} parent=0 // pred_region
    _
  $region25: #{gpt_forward.1} parent=0 // pred_fallthru
    _
  // Predicated region
  $region26: #{gpt_forward.1} parent=0 // pred_check
    _
  $region27: #{gpt_forward.1} parent=0 // pred_check_branch
    %4299 = sbr.rel (0) target = $region29
  $region28: #{gpt_forward.1} parent=0 // pred_region
    _
  $region29: #{gpt_forward.1} parent=0 // pred_fallthru
    _

</llo_original>
